<compile_context>
chip_gen: v5e
topology: v5e:2x2
jax: 0.10.0
libtpu: 0.0.40
codegen_flags: <defaults>
</compile_context>

<pallas_src>
import functools

import jax
import jax.numpy as jnp
from jax.experimental import pallas as pl
from jax.experimental.pallas import tpu as pltpu

LANES = 128  # TPU lane width; minor dim of the padded classifier / output slab.


def model_kernel(ids_ref, labels_ref, emb_ref, w_ref, b_ref, out_ref, *, num_labels):
    """Fused gather -> masked mean-pool -> linear -> sigmoid -> per-example BCE term.

    ids_ref:    (tb, S)      int32  token ids (attention mask derived in-kernel: id != 1)
    labels_ref: (tb, 1)      f32    binary labels
    emb_ref:    (V, H)       bf16   embedding table, VMEM resident
    w_ref:      (H, LANES)   f32    classifier weight, zero-padded to 128 lanes
    b_ref:      (1, LANES)   f32    classifier bias, zero-padded
    out_ref:    (tb, LANES)  f32    lanes [0, C): prob ; lane C: per-example loss term
    """
    tb, S = ids_ref.shape
    V, _ = emb_ref.shape

    ids = ids_ref[...]                              # (tb, S) int32
    keep = ids != 1                                 # attention_mask = input_ids.ne(1)
    # Fold the mask into the ids: padded positions become -1, matching no vocab row.
    masked_ids = jnp.where(keep, ids, -1)           # (tb, S) int32

    # --- Fused embedding gather + masked sum over S (no (tb, S, H) intermediate) ---
    # Masked vocab histogram: hist[b, v] = #{ s : ids[b, s] == v and ids[b, s] != 1 }
    vocab_iota = jax.lax.broadcasted_iota(jnp.int32, (tb, S, V), 2)
    hist = jnp.sum((masked_ids[:, :, None] == vocab_iota).astype(jnp.float32),
                   axis=1)                          # (tb, V) f32: VPU compare + sublane sum
    denom = jnp.maximum(jnp.sum(hist, axis=1, keepdims=True), 1.0)   # (tb, 1) valid tokens

    # sum_s mask * emb[ids]  ==  hist @ emb  (counts <= S are exact in bf16; f32 accumulate)
    pooled_sum = jnp.dot(hist.astype(jnp.bfloat16), emb_ref[...],
                         preferred_element_type=jnp.float32)          # (tb, H) f32
    pooled = pooled_sum / denom                                       # masked mean-pool

    # Classifier head in full f32 precision (multi-pass MXU).
    logits = jnp.dot(pooled, w_ref[...],
                     precision=jax.lax.Precision.HIGHEST,
                     preferred_element_type=jnp.float32) + b_ref[...]  # (tb, LANES)
    prob = jax.nn.sigmoid(logits)

    # Per-example log-likelihood term (uses lane 0 == prob[:, 0], as in the PyTorch module).
    eps = 1e-10
    y = labels_ref[...]                                                # (tb, 1)
    p0 = prob[:, 0:1]                                                  # (tb, 1)
    per_ex = jnp.log(p0 + eps) * y + jnp.log((1.0 - p0) + eps) * (1.0 - y)

    # Lane-dense output slab: prob in lanes [0, C), per-example term in lane C, zeros after.
    lane = jax.lax.broadcasted_iota(jnp.int32, prob.shape, 1)
    slab = jnp.where(lane < num_labels, prob, 0.0)
    slab = jnp.where(lane == num_labels, per_ex, slab)
    out_ref[...] = slab


def model_forward(input_ids, labels, embed_table, w, b, *, tb=8):
    """JAX wrapper reproducing Model.forward(input_ids, labels) -> (loss, prob)."""
    B, S = input_ids.shape
    V, H = embed_table.shape
    C = w.shape[1]
    assert B % tb == 0 and tb % 8 == 0, "batch tile must be a multiple of 8 sublanes"
    assert C + 1 <= LANES

    labels_f = labels.astype(jnp.float32).reshape(B, 1)
    emb_bf = embed_table.astype(jnp.bfloat16)                    # (V, H), VMEM resident
    w_pad = jnp.zeros((H, LANES), jnp.float32).at[:, :C].set(w.astype(jnp.float32))
    b_pad = jnp.zeros((1, LANES), jnp.float32).at[:, :C].set(
        b.astype(jnp.float32).reshape(1, C))

    # TODO(synk): for realistic vocabularies (table >> VMEM) replace the in-kernel one-hot
    # histogram with SMEM scalar-prefetched ids + manual per-row DMA gather (pl.ANY + make_async_copy).
    kernel = functools.partial(model_kernel, num_labels=C)

    out = pl.pallas_call(
        kernel,
        out_shape=jax.ShapeDtypeStruct((B, LANES), jnp.float32),
        grid_spec=pltpu.PrefetchScalarGridSpec(
            num_scalar_prefetch=0,
            grid=(B // tb,),                                      # 1-D, parallel over batch
            in_specs=[
                pl.BlockSpec((tb, S), lambda bi: (bi, 0)),        # token ids
                pl.BlockSpec((tb, 1), lambda bi: (bi, 0)),        # labels
                pl.BlockSpec((V, H), lambda bi: (0, 0)),          # embedding table (bf16)
                pl.BlockSpec((H, LANES), lambda bi: (0, 0)),      # padded classifier weight
                pl.BlockSpec((1, LANES), lambda bi: (0, 0)),      # padded classifier bias
            ],
            out_specs=pl.BlockSpec((tb, LANES), lambda bi: (bi, 0)),
        ),
        compiler_params=pltpu.CompilerParams(
            dimension_semantics=("parallel",),
            vmem_limit_bytes=48 * 1024 * 1024,   # fits v7x's 64 MiB/TC; ample on v5e/v6e
        ),
    )(input_ids.astype(jnp.int32), labels_f, emb_bf, w_pad, b_pad)

    prob = out[:, :C]
    per_ex = out[:, C]
    # loss = -mean(log(p0+eps)*y + log(1-p0+eps)*(1-y)) -- tiny reduction, done in XLA.
    loss = -jnp.mean(per_ex)
    return loss, prob


if __name__ == "__main__":
    # Small deterministic shapes; grid = (2,) over batch, whole sequence per grid step.
    B, S, H, C, VOCAB = 16, 128, 128, 2, 512

    key = jax.random.PRNGKey(0)
    k_ids, k_lab, k_emb, k_w, k_b = jax.random.split(key, 5)

    # input_ids in [0, VOCAB); force a padded tail (pad id == 1, RoBERTa convention).
    input_ids = jax.random.randint(k_ids, (B, S), 0, VOCAB, dtype=jnp.int32)
    input_ids = input_ids.at[:, -32:].set(1)
    labels = jax.random.randint(k_lab, (B,), 0, 2, dtype=jnp.int32)

    # Deterministic synthetic encoder parameters.
    embed_table = jax.random.normal(k_emb, (VOCAB, H), dtype=jnp.float32) * 0.02
    w = jax.random.normal(k_w, (H, C), dtype=jnp.float32) * 0.1
    b = jax.random.normal(k_b, (C,), dtype=jnp.float32) * 0.1

    loss, prob = model_forward(input_ids, labels, embed_table, w, b)
    jax.block_until_ready((loss, prob))

    # Pure-JAX reference (same bf16 embedding table as the kernel, f32 math).
    mask = (input_ids != 1).astype(jnp.float32)
    x = jnp.take(embed_table.astype(jnp.bfloat16), input_ids, axis=0).astype(jnp.float32)
    pooled = (x * mask[:, :, None]).sum(1) / jnp.maximum(mask.sum(1, keepdims=True), 1.0)
    logits_ref = jnp.dot(pooled, w, precision=jax.lax.Precision.HIGHEST) + b
    prob_ref = jax.nn.sigmoid(logits_ref)
    y = labels.astype(jnp.float32)
    loss_ref = -(jnp.log(prob_ref[:, 0] + 1e-10) * y
                 + jnp.log((1.0 - prob_ref)[:, 0] + 1e-10) * (1.0 - y)).mean()

    assert jnp.allclose(prob, prob_ref, atol=1e-4), (prob, prob_ref)
    assert jnp.allclose(loss, loss_ref, atol=1e-4), (loss, loss_ref)

    print("KERNEL_OK")
</pallas_src>

<mosaic_0001>
module attributes {stable_mosaic.version = 11 : i64} {
  func.func @model_kernel(%arg0: i32, %arg1: memref<8x128xi32, #tpu.memory_space<vmem>>, %arg2: memref<8x1xf32, #tpu.memory_space<vmem>>, %arg3: memref<512x128xbf16, #tpu.memory_space<vmem>>, %arg4: memref<128x128xf32, #tpu.memory_space<vmem>>, %arg5: memref<1x128xf32, #tpu.memory_space<vmem>>, %arg6: memref<8x128xf32, #tpu.memory_space<vmem>>) attributes {dimension_semantics = [#tpu.dimension_semantics<parallel>], iteration_bounds = array<i64: 2>, scalar_prefetch = 0 : i64, scratch_operands = 0 : i64, tpu.core_type = #tpu.core_type<tc>, window_params = [{transform_indices = @transform_0, window_bounds = array<i64: 8, 128>}, {transform_indices = @transform_1, window_bounds = array<i64: 8, 1>}, {pipeline_mode = #tpu.pipeline_mode<synchronous>, transform_indices = @transform_2, window_bounds = array<i64: 512, 128>}, {pipeline_mode = #tpu.pipeline_mode<synchronous>, transform_indices = @transform_3, window_bounds = array<i64: 128, 128>}, {pipeline_mode = #tpu.pipeline_mode<synchronous>, transform_indices = @transform_4, window_bounds = array<i64: 1, 128>}, {transform_indices = @transform_5, window_bounds = array<i64: 8, 128>}]} {
    %c0 = arith.constant 0 : index
    %c0_0 = arith.constant 0 : index
    %0 = vector.load %arg1[%c0, %c0_0] : memref<8x128xi32, #tpu.memory_space<vmem>>, vector<8x128xi32>
    %c1_i32 = arith.constant 1 : i32
    %1 = vector.broadcast %c1_i32 : i32 to vector<8x128xi32>
    %2 = arith.cmpi ne, %0, %1 : vector<8x128xi32>
    %c-1_i32 = arith.constant -1 : i32
    %3 = vector.broadcast %c-1_i32 : i32 to vector<8x128xi32>
    %4 = arith.select %2, %0, %3 : vector<8x128xi1>, vector<8x128xi32>
    %5 = tpu.iota {dimensions = array<i32: 2>} : vector<8x128x512xi32>
    %6 = vector.shape_cast %4 : vector<8x128xi32> to vector<8x128x1xi32>
    %7 = vector.broadcast %6 : vector<8x128x1xi32> to vector<8x128x512xi32>
    %8 = arith.cmpi eq, %7, %5 : vector<8x128x512xi32>
    %9 = arith.extui %8 : vector<8x128x512xi1> to vector<8x128x512xi32>
    %10 = arith.sitofp %9 : vector<8x128x512xi32> to vector<8x128x512xf32>
    %cst = arith.constant dense<0.000000e+00> : vector<8x512xf32>
    %11 = vector.multi_reduction <add>, %10, %cst [1] : vector<8x128x512xf32> to vector<8x512xf32>
    %cst_1 = arith.constant dense<0.000000e+00> : vector<8xf32>
    %12 = vector.multi_reduction <add>, %11, %cst_1 [1] : vector<8x512xf32> to vector<8xf32>
    %13 = vector.shape_cast %12 : vector<8xf32> to vector<8x1xf32>
    %cst_2 = arith.constant 1.000000e+00 : f32
    %14 = vector.broadcast %cst_2 : f32 to vector<8x1xf32>
    %15 = arith.maximumf %13, %14 : vector<8x1xf32>
    %16 = arith.truncf %11 : vector<8x512xf32> to vector<8x512xbf16>
    %c0_3 = arith.constant 0 : index
    %c0_4 = arith.constant 0 : index
    %17 = vector.load %arg3[%c0_3, %c0_4] : memref<512x128xbf16, #tpu.memory_space<vmem>>, vector<512x128xbf16>
    %cst_5 = arith.constant dense<0.000000e+00> : vector<8x128xf32>
    %18 = tpu.matmul %16, %17, %cst_5 {dimension_numbers = #tpu.dot_dimension_numbers<[1], [0], [0], [1], [0, 0, 1, 1], [], []>} : vector<8x512xbf16>, vector<512x128xbf16>, vector<8x128xf32> -> vector<8x128xf32>
    %19 = vector.broadcast %15 : vector<8x1xf32> to vector<8x128xf32>
    %20 = arith.divf %18, %19 : vector<8x128xf32>
    %c0_6 = arith.constant 0 : index
    %c0_7 = arith.constant 0 : index
    %21 = vector.load %arg4[%c0_6, %c0_7] : memref<128x128xf32, #tpu.memory_space<vmem>>, vector<128x128xf32>
    %cst_8 = arith.constant dense<0.000000e+00> : vector<8x128xf32>
    %22 = tpu.matmul %20, %21, %cst_8 {dimension_numbers = #tpu.dot_dimension_numbers<[1], [0], [0], [1], [0, 0, 1, 1], [], []>, precision = #tpu.contract_precision<fp32>} : vector<8x128xf32>, vector<128x128xf32>, vector<8x128xf32> -> vector<8x128xf32>
    %c0_9 = arith.constant 0 : index
    %c0_10 = arith.constant 0 : index
    %23 = vector.load %arg5[%c0_9, %c0_10] : memref<1x128xf32, #tpu.memory_space<vmem>>, vector<1x128xf32>
    %24 = vector.broadcast %23 : vector<1x128xf32> to vector<8x128xf32>
    %25 = arith.addf %22, %24 : vector<8x128xf32>
    %26 = arith.negf %25 : vector<8x128xf32>
    %27 = math.exp %26 : vector<8x128xf32>
    %cst_11 = arith.constant 1.000000e+00 : f32
    %28 = vector.broadcast %cst_11 : f32 to vector<8x128xf32>
    %29 = arith.addf %28, %27 : vector<8x128xf32>
    %30 = arith.divf %28, %29 : vector<8x128xf32>
    %c0_12 = arith.constant 0 : index
    %c0_13 = arith.constant 0 : index
    %31 = vector.load %arg2[%c0_12, %c0_13] : memref<8x1xf32, #tpu.memory_space<vmem>>, vector<8x1xf32>
    %32 = vector.extract_strided_slice %30 {offsets = [0, 0], sizes = [8, 1], strides = [1, 1]} : vector<8x128xf32> to vector<8x1xf32>
    %cst_14 = arith.constant 1.000000e-10 : f32
    %33 = vector.broadcast %cst_14 : f32 to vector<8x1xf32>
    %34 = arith.addf %32, %33 : vector<8x1xf32>
    %35 = math.log %34 : vector<8x1xf32>
    %36 = arith.mulf %35, %31 : vector<8x1xf32>
    %cst_15 = arith.constant 1.000000e+00 : f32
    %37 = vector.broadcast %cst_15 : f32 to vector<8x1xf32>
    %38 = arith.subf %37, %32 : vector<8x1xf32>
    %cst_16 = arith.constant 1.000000e-10 : f32
    %39 = vector.broadcast %cst_16 : f32 to vector<8x1xf32>
    %40 = arith.addf %38, %39 : vector<8x1xf32>
    %41 = math.log %40 : vector<8x1xf32>
    %cst_17 = arith.constant 1.000000e+00 : f32
    %42 = vector.broadcast %cst_17 : f32 to vector<8x1xf32>
    %43 = arith.subf %42, %31 : vector<8x1xf32>
    %44 = arith.mulf %41, %43 : vector<8x1xf32>
    %45 = arith.addf %36, %44 : vector<8x1xf32>
    %46 = tpu.iota {dimensions = array<i32: 1>} : vector<8x128xi32>
    %c2_i32 = arith.constant 2 : i32
    %47 = vector.broadcast %c2_i32 : i32 to vector<8x128xi32>
    %48 = arith.cmpi slt, %46, %47 : vector<8x128xi32>
    %cst_18 = arith.constant 0.000000e+00 : f32
    %49 = vector.broadcast %cst_18 : f32 to vector<8x128xf32>
    %50 = arith.select %48, %30, %49 : vector<8x128xi1>, vector<8x128xf32>
    %c2_i32_19 = arith.constant 2 : i32
    %51 = vector.broadcast %c2_i32_19 : i32 to vector<8x128xi32>
    %52 = arith.cmpi eq, %46, %51 : vector<8x128xi32>
    %53 = vector.shape_cast %45 : vector<8x1xf32> to vector<8x1xf32>
    %54 = vector.broadcast %53 : vector<8x1xf32> to vector<8x128xf32>
    %55 = arith.select %52, %54, %50 : vector<8x128xi1>, vector<8x128xf32>
    %c0_20 = arith.constant 0 : index
    %c0_21 = arith.constant 0 : index
    %56 = vector.load %arg6[%c0_20, %c0_21] : memref<8x128xf32, #tpu.memory_space<vmem>>, vector<8x128xf32>
    tpu.vector_store %arg6[%c0_20, %c0_21], %55 {strides = array<i32>} : memref<8x128xf32, #tpu.memory_space<vmem>>, vector<8x128xf32>,
    return
  }
  func.func @transform_0(%arg0: i32) -> (i32, i32) {
    %c0_i32 = arith.constant 0 : i32
    %c0_i32_0 = arith.constant 0 : i32
    return %arg0, %c0_i32 : i32, i32
  }
  func.func @transform_1(%arg0: i32) -> (i32, i32) {
    %c0_i32 = arith.constant 0 : i32
    %c0_i32_0 = arith.constant 0 : i32
    return %arg0, %c0_i32 : i32, i32
  }
  func.func @transform_2(%arg0: i32) -> (i32, i32) {
    %c0_i32 = arith.constant 0 : i32
    %c0_i32_0 = arith.constant 0 : i32
    %c0_i32_1 = arith.constant 0 : i32
    return %c0_i32, %c0_i32_0 : i32, i32
  }
  func.func @transform_3(%arg0: i32) -> (i32, i32) {
    %c0_i32 = arith.constant 0 : i32
    %c0_i32_0 = arith.constant 0 : i32
    %c0_i32_1 = arith.constant 0 : i32
    return %c0_i32, %c0_i32_0 : i32, i32
  }
  func.func @transform_4(%arg0: i32) -> (i32, i32) {
    %c0_i32 = arith.constant 0 : i32
    %c0_i32_0 = arith.constant 0 : i32
    %c0_i32_1 = arith.constant 0 : i32
    return %c0_i32, %c0_i32_0 : i32, i32
  }
  func.func @transform_5(%arg0: i32) -> (i32, i32) {
    %c0_i32 = arith.constant 0 : i32
    %c0_i32_0 = arith.constant 0 : i32
    return %arg0, %c0_i32 : i32, i32
  }
}

</mosaic_0001>

<llo_original>
// kernel: tpu_custom_call.1
$region0: #{tpu_custom_call.1}
  #allocation0 [shape = 'u32[]', space=smem, size = 0x4, offset = 0x4, fixed_abs, tag = 'smem constant byte address 0x4 - core index']
  #allocation1 [shape = 'u32[72,128]{1,0:T(1,128)}', space=vmem, size = 0x9000, scoped, tag = 'internal scratch']
  %s0 = inlined_call_operand.vmem [shape: s32[16,128], index: 0, kind: input, shape index: {}]
  %s1 = inlined_call_operand.vmem [shape: f32[16,1], index: 1, kind: input, shape index: {}]
  %s2 = inlined_call_operand.hbm [shape: bf16[512,128], index: 2, kind: input, shape index: {}]
  %s3 = inlined_call_operand.hbm [shape: f32[128,128], index: 3, kind: input, shape index: {}]
  %s4 = inlined_call_operand.vmem [shape: f32[1,128], index: 4, kind: input, shape index: {}]
  %s5 = inlined_call_operand.hbm [shape: f32[16,128], index: 5, kind: output, shape index: {}]
  %s6 = sld [smem:[#allocation0]]
  $region61: #{tpu_custom_call.1} parent=0
    _
  %s8 = ssub.s32 1, %s6
  %s9 = scalar_select 0, %s8, %s6
  $region1: #{tpu_custom_call.1} parent=0
    #allocation2 [shape = 'u8[131072]{0}', space=vmem, size = 0x20000, scoped, tag = 'input window, operand 2, single buffered']
    #allocation3 [shape = 's32[2]{0}', space=sflag, size = 0x8, scoped, tag = 'scoped memory for tpu_custom_call.1']
    #allocation4 [shape = 's32[2]{0}', space=sflag, size = 0x8, scoped, tag = 'scoped memory for tpu_custom_call.1']
    #allocation5 [shape = 'u8[65536]{0}', space=vmem, size = 0x10000, scoped, tag = 'input window, operand 3, single buffered']
    #allocation6 [shape = 's32[1]{0}', space=sflag, size = 0x4, scoped, tag = 'scoped memory for tpu_custom_call.1']
    #allocation7 [shape = 'u8[8192]{0}', space=vmem, size = 0x2000, scoped, tag = 'output window, operand 0']
    %10 = vsyncpa [#allocation3], 0
    %11 = vsyncpa [#allocation6], 0
    %12 = vsyncpa [#allocation4], 0
    %s13 = scalar_lea.sflag [#allocation4], 1
    %14 = vsyncpa %s13, 0
    loop: start=0, step=1, limit=4
    $region2: #{tpu_custom_call.1} parent=1 // loop_pre_header
      _
    $region3: #{tpu_custom_call.1} parent=1 // loop_header
      %s16 = sphi 0, %s20
      %p17 = scmp.ge.s32.totalorder %s16, 4
      %s26 = sphi 0, %s28
      %s29 = sphi 0, %s26
      %s30 = sphi 0, %s29
      %s46 = sphi 0, %s30
      %s52 = sphi 0, %s54
      %s55 = sphi 0, %s52
      %s56 = sphi 0, %s55
      %s72 = sphi 0, %s56
      %s76 = sphi 0, %s76
      %s78 = sphi 0, %s76
      %s79 = sphi 0, %s78
      %s93 = sphi 0, %s79
      %s97 = sphi 0, %s97
      %s99 = sphi 0, %s97
      %s100 = sphi 0, %s99
      %s114 = sphi 0, %s100
      %s118 = sphi 0, %s118
      %s120 = sphi 0, %s118
      %s121 = sphi 0, %s120
      %s135 = sphi 0, %s121
      %s141 = sphi 0, %s143
      %s144 = sphi 0, %s141
      %s145 = sphi 0, %s144
      %s161 = sphi 0, %s145
    $region4: #{tpu_custom_call.1} parent=1 // loop_header_branch
      %19 = sbr.rel (%p17) target = $region8
    $region5: #{tpu_custom_call.1} parent=1 // loop_body
      %s21 = ssub.s32 %s16, 1
      %s22 = ssub.s32 %s16, 2
      %s23 = sadd.s32 %s16, 1
      %s24 = ssub.s32 %s16, %s23
      %p25 = scmp.eq.s32.totalorder %s24, 0
      %s27 = sadd.s32 %s26, 1
      %s28 = scalar_select %p25, %s26, %s27
      %p31 = pneg %p25
      %p32 = scmp.eq.s32.totalorder %s16, 1
      %p33 = por %p31, %p32
      %p34 = scmp.ne.s32.totalorder %s26, %s29
      %p35 = scmp.eq.s32.totalorder %s16, 0
      %p36 = por %p34, %p35
      %p37 = scmp.ne.s32.totalorder %s26, %s29
      %p38 = scmp.eq.s32.totalorder %s21, 1
      %p39 = por %p37, %p38
      %p40 = scmp.ne.s32.totalorder %s29, %s30
      %p41 = scmp.eq.s32.totalorder %s21, 0
      %p42 = por %p40, %p41
      %p43 = scmp.ne.s32.totalorder %s29, %s30
      %p44 = scmp.eq.s32.totalorder %s22, 1
      %p45 = por %p43, %p44
      %p47 = scmp.ne.s32.totalorder %s30, %s46
      %p48 = scmp.eq.s32.totalorder %s22, 0
      %p49 = por %p47, %p48
      %s50 = ssub.s32 %s16, %s23
      %p51 = scmp.eq.s32.totalorder %s50, 0
      %s53 = sadd.s32 %s52, 1
      %s54 = scalar_select %p51, %s52, %s53
      %p57 = pneg %p51
      %p58 = scmp.eq.s32.totalorder %s16, 1
      %p59 = por %p57, %p58
      %p60 = scmp.ne.s32.totalorder %s52, %s55
      %p61 = scmp.eq.s32.totalorder %s16, 0
      %p62 = por %p60, %p61
      %p63 = scmp.ne.s32.totalorder %s52, %s55
      %p64 = scmp.eq.s32.totalorder %s21, 1
      %p65 = por %p63, %p64
      %p66 = scmp.ne.s32.totalorder %s55, %s56
      %p67 = scmp.eq.s32.totalorder %s21, 0
      %p68 = por %p66, %p67
      %p69 = scmp.ne.s32.totalorder %s55, %s56
      %p70 = scmp.eq.s32.totalorder %s22, 1
      %p71 = por %p69, %p70
      %p73 = scmp.ne.s32.totalorder %s56, %s72
      %p74 = scmp.eq.s32.totalorder %s22, 0
      %p75 = por %p73, %p74
      %s77 = sadd.s32 %s76, 1
      %p80 = scmp.eq.s32.totalorder %s16, 1
      %p81 = scmp.ne.s32.totalorder %s76, %s78
      %p82 = scmp.eq.s32.totalorder %s16, 0
      %p83 = por %p81, %p82
      %p84 = scmp.ne.s32.totalorder %s76, %s78
      %p85 = scmp.eq.s32.totalorder %s21, 1
      %p86 = por %p84, %p85
      %p87 = scmp.ne.s32.totalorder %s78, %s79
      %p88 = scmp.eq.s32.totalorder %s21, 0
      %p89 = por %p87, %p88
      %p90 = scmp.ne.s32.totalorder %s78, %s79
      %p91 = scmp.eq.s32.totalorder %s22, 1
      %p92 = por %p90, %p91
      %p94 = scmp.ne.s32.totalorder %s79, %s93
      %p95 = scmp.eq.s32.totalorder %s22, 0
      %p96 = por %p94, %p95
      %s98 = sadd.s32 %s97, 1
      %p101 = scmp.eq.s32.totalorder %s16, 1
      %p102 = scmp.ne.s32.totalorder %s97, %s99
      %p103 = scmp.eq.s32.totalorder %s16, 0
      %p104 = por %p102, %p103
      %p105 = scmp.ne.s32.totalorder %s97, %s99
      %p106 = scmp.eq.s32.totalorder %s21, 1
      %p107 = por %p105, %p106
      %p108 = scmp.ne.s32.totalorder %s99, %s100
      %p109 = scmp.eq.s32.totalorder %s21, 0
      %p110 = por %p108, %p109
      %p111 = scmp.ne.s32.totalorder %s99, %s100
      %p112 = scmp.eq.s32.totalorder %s22, 1
      %p113 = por %p111, %p112
      %p115 = scmp.ne.s32.totalorder %s100, %s114
      %p116 = scmp.eq.s32.totalorder %s22, 0
      %p117 = por %p115, %p116
      %s119 = sadd.s32 %s118, 1
      %p122 = scmp.eq.s32.totalorder %s16, 1
      %p123 = scmp.ne.s32.totalorder %s118, %s120
      %p124 = scmp.eq.s32.totalorder %s16, 0
      %p125 = por %p123, %p124
      %p126 = scmp.ne.s32.totalorder %s118, %s120
      %p127 = scmp.eq.s32.totalorder %s21, 1
      %p128 = por %p126, %p127
      %p129 = scmp.ne.s32.totalorder %s120, %s121
      %p130 = scmp.eq.s32.totalorder %s21, 0
      %p131 = por %p129, %p130
      %p132 = scmp.ne.s32.totalorder %s120, %s121
      %p133 = scmp.eq.s32.totalorder %s22, 1
      %p134 = por %p132, %p133
      %p136 = scmp.ne.s32.totalorder %s121, %s135
      %p137 = scmp.eq.s32.totalorder %s22, 0
      %p138 = por %p136, %p137
      %s139 = ssub.s32 %s16, %s23
      %p140 = scmp.eq.s32.totalorder %s139, 0
      %s142 = sadd.s32 %s141, 1
      %s143 = scalar_select %p140, %s141, %s142
      %p146 = pneg %p140
      %p147 = scmp.eq.s32.totalorder %s16, 1
      %p148 = por %p146, %p147
      %p149 = scmp.ne.s32.totalorder %s141, %s144
      %p150 = scmp.eq.s32.totalorder %s16, 0
      %p151 = por %p149, %p150
      %p152 = scmp.ne.s32.totalorder %s141, %s144
      %p153 = scmp.eq.s32.totalorder %s21, 1
      %p154 = por %p152, %p153
      %p155 = scmp.ne.s32.totalorder %s144, %s145
      %p156 = scmp.eq.s32.totalorder %s21, 0
      %p157 = por %p155, %p156
      %p158 = scmp.ne.s32.totalorder %s144, %s145
      %p159 = scmp.eq.s32.totalorder %s22, 1
      %p160 = por %p158, %p159
      %p162 = scmp.ne.s32.totalorder %s145, %s161
      %p163 = scmp.eq.s32.totalorder %s22, 0
      %p164 = por %p162, %p163
      %p165 = scmp.le.s32.totalorder 1, %s16
      %p166 = scmp.lt.s32.totalorder %s16, 3
      %p167 = pnand %p165, %p166
      %p168 = pneg %p167
      // Predicated region
      $region9: #{tpu_custom_call.1} parent=5 // pred_check
        _
      $region10: #{tpu_custom_call.1} parent=5 // pred_check_branch
        %170 = sbr.rel (%p167) target = $region12
      $region11: #{tpu_custom_call.1} parent=5 // pred_region
        %s171 = ssub.s32 %s16, 1
        // Predicated region
        $region13: #{tpu_custom_call.1} parent=11 // pred_check
          %p172 = pneg %p89
        $region14: #{tpu_custom_call.1} parent=11 // pred_check_branch
          %174 = sbr.rel (%p172) target = $region16
        $region15: #{tpu_custom_call.1} parent=11 // pred_region
          %176 = vsyncadd [#allocation3], 0
          %s177 = sshll.u32 %s2, 4
          %s178 = int_to_ptr.hbm [resolvable:$true] %s177
          %s179 = sshll.u32 [#allocation2], 4
          %s180 = int_to_ptr.vmem [resolvable:$true] %s179
          %185 = dma.hbm_to_vmem [thread:$0]  %s178, 4096, %s180, [#allocation3], 64, 64, 4
        $region16: #{tpu_custom_call.1} parent=11 // pred_fallthru
          _
        // Predicated region
        $region17: #{tpu_custom_call.1} parent=11 // pred_check
          %p186 = pneg %p110
        $region18: #{tpu_custom_call.1} parent=11 // pred_check_branch
          %188 = sbr.rel (%p186) target = $region20
        $region19: #{tpu_custom_call.1} parent=11 // pred_region
          %190 = vsyncadd [#allocation6], 0
          %s191 = sshll.u32 %s3, 4
          %s192 = int_to_ptr.hbm [resolvable:$true] %s191
          %s193 = sshll.u32 [#allocation5], 4
          %s194 = int_to_ptr.vmem [resolvable:$true] %s193
          %199 = dma.hbm_to_vmem [thread:$0]  %s192, 2048, %s194, [#allocation6], 128, 128, 8
        $region20: #{tpu_custom_call.1} parent=11 // pred_fallthru
          _
        // Predicated region
        $region21: #{tpu_custom_call.1} parent=11 // pred_check
          %p200 = pneg %p131
        $region22: #{tpu_custom_call.1} parent=11 // pred_check_branch
          %202 = sbr.rel (%p200) target = $region24
        $region23: #{tpu_custom_call.1} parent=11 // pred_region
          _
        $region24: #{tpu_custom_call.1} parent=11 // pred_fallthru
          _
      $region12: #{tpu_custom_call.1} parent=5 // pred_fallthru
        _
      %p203 = scmp.lt.s32.totalorder %s16, 2
      // Predicated region
      $region25: #{tpu_custom_call.1} parent=5 // pred_check
        %p204 = pneg %p203
      $region26: #{tpu_custom_call.1} parent=5 // pred_check_branch
        %206 = sbr.rel (%p204) target = $region28
      $region27: #{tpu_custom_call.1} parent=5 // pred_region
        // Predicated region
        $region29: #{tpu_custom_call.1} parent=27 // pred_check
          %p207 = pneg %p36
        $region30: #{tpu_custom_call.1} parent=27 // pred_check_branch
          %209 = sbr.rel (%p207) target = $region32
        $region31: #{tpu_custom_call.1} parent=27 // pred_region
          %p210 = scmp.lt.s32.totalorder %s16, 1
          %s211 = scalar_select %p210, %s16, 1
          %s212 = smul.addr %s211, 8
          %s213 = scalar_lea.vmem %s0, %s212
        $region32: #{tpu_custom_call.1} parent=27 // pred_fallthru
          _
        // Predicated region
        $region33: #{tpu_custom_call.1} parent=27 // pred_check
          %p214 = pneg %p62
        $region34: #{tpu_custom_call.1} parent=27 // pred_check_branch
          %216 = sbr.rel (%p214) target = $region36
        $region35: #{tpu_custom_call.1} parent=27 // pred_region
          %p217 = scmp.lt.s32.totalorder %s16, 1
          %s218 = scalar_select %p217, %s16, 1
          %s219 = smul.addr %s218, 8
          %s220 = scalar_lea.vmem %s1, %s219
        $region36: #{tpu_custom_call.1} parent=27 // pred_fallthru
          _
      $region28: #{tpu_custom_call.1} parent=5 // pred_fallthru
        _
      %p221 = scmp.le.s32.totalorder 1, %s16
      %p222 = scmp.lt.s32.totalorder %s16, 3
      %p223 = pnand %p221, %p222
      %p224 = pneg %p223
      // Predicated region
      $region37: #{tpu_custom_call.1} parent=5 // pred_check
        _
      $region38: #{tpu_custom_call.1} parent=5 // pred_check_branch
        %226 = sbr.rel (%p223) target = $region40
      $region39: #{tpu_custom_call.1} parent=5 // pred_region
        %s227 = ssub.s32 %s16, 1
        // Predicated region
        $region41: #{tpu_custom_call.1} parent=39 // pred_check
          %p228 = pneg %p89
        $region42: #{tpu_custom_call.1} parent=39 // pred_check_branch
          %230 = sbr.rel (%p228) target = $region44
        $region43: #{tpu_custom_call.1} parent=39 // pred_region
          %232 = dma.done [#allocation3], 4096
        $region44: #{tpu_custom_call.1} parent=39 // pred_fallthru
          _
        // Predicated region
        $region45: #{tpu_custom_call.1} parent=39 // pred_check
          %p233 = pneg %p110
        $region46: #{tpu_custom_call.1} parent=39 // pred_check_branch
          %235 = sbr.rel (%p233) target = $region48
        $region47: #{tpu_custom_call.1} parent=39 // pred_region
          %237 = dma.done [#allocation6], 2048
        $region48: #{tpu_custom_call.1} parent=39 // pred_fallthru
          _
        %p238 = scmp.lt.s32.totalorder %s21, 1
        %s239 = scalar_select %p238, %s21, 1
        %s240 = smul.addr %s239, 8
        %s241 = scalar_lea.vmem %s0, %s240
        %p242 = pneg %p42
        %p243 = pneg %p39
        %p244 = scmp.lt.s32.totalorder %s21, 1
        %s245 = scalar_select %p244, %s21, 1
        %s246 = smul.addr %s245, 8
        %s247 = scalar_lea.vmem %s1, %s246
        %p248 = pneg %p68
        %p249 = pneg %p65
        %p250 = pneg %p89
        %p251 = pneg %p86
        %p252 = pneg %p110
        %p253 = pneg %p107
        %p254 = pneg %p131
        %p255 = pneg %p128
        %p256 = pneg %p157
        %p257 = pneg %p154
        %s258 = sand.u32 %s144, 1
        %s259 = scalar_lea.sflag [#allocation4], %s258
        %s260 = sand.u32 %s144, 1
        %s261 = smul.addr %s260, 8
        %s262 = scalar_lea.vmem [#allocation7], %s261
        %p263 = scmp.lt.s32.totalorder %s21, 1
        %s264 = scalar_select %p263, %s21, 1
        %s265 = smul.addr %s264, 8
        %s266 = scalar_lea.vmem %s0, %s265
        %p267 = scmp.lt.s32.totalorder %s21, 1
        %s268 = scalar_select %p267, %s21, 1
        %s269 = smul.addr %s268, 8
        %s270 = scalar_lea.vmem %s1, %s269
        %v271 = vld [vmem:[%s266] sm:$0xff]
        %vm272 = vcmp.ne.s32.totalorder %v271, 1
        %v273 = vsel %vm272, %v271, 4294967295
        %v274 = vlaneseq
        %v275 = vand.u32 %v274, 127
        %v276 = vadd.s32 %v275, 128
        %v277 = vadd.s32 %v275, 256
        %v278 = vadd.s32 %v275, 384
        %v279 = vperm.slane %v273, 0
        %v280 = vlaneseq
        %v281 = vshrl.u32 %v280, 7
        %283 = vset.pattern.permute.xlu0 %v281
        %284 = vperm.xlu0 %283, %v279
        %v285 = vpop.permute.xlu0 %284
        %v286 = vlaneseq
        %v287 = vshrl.u32 %v286, 7
        %v288 = vadd.s32 %v287, 8
        %289 = vset.pattern.permute.xlu0 %v288
        %290 = vperm.xlu0 %289, %v279
        %v291 = vpop.permute.xlu0 %290
        %v292 = vlaneseq
        %v293 = vshrl.u32 %v292, 7
        %v294 = vadd.s32 %v293, 16
        %295 = vset.pattern.permute.xlu0 %v294
        %296 = vperm.xlu0 %295, %v279
        %v297 = vpop.permute.xlu0 %296
        %v298 = vlaneseq
        %v299 = vshrl.u32 %v298, 7
        %v300 = vadd.s32 %v299, 24
        %301 = vset.pattern.permute.xlu0 %v300
        %302 = vperm.xlu0 %301, %v279
        %v303 = vpop.permute.xlu0 %302
        %v304 = vlaneseq
        %v305 = vshrl.u32 %v304, 7
        %v306 = vadd.s32 %v305, 32
        %307 = vset.pattern.permute.xlu0 %v306
        %308 = vperm.xlu0 %307, %v279
        %v309 = vpop.permute.xlu0 %308
        %v310 = vlaneseq
        %v311 = vshrl.u32 %v310, 7
        %v312 = vadd.s32 %v311, 40
        %313 = vset.pattern.permute.xlu0 %v312
        %314 = vperm.xlu0 %313, %v279
        %v315 = vpop.permute.xlu0 %314
        %v316 = vlaneseq
        %v317 = vshrl.u32 %v316, 7
        %v318 = vadd.s32 %v317, 48
        %319 = vset.pattern.permute.xlu0 %v318
        %320 = vperm.xlu0 %319, %v279
        %v321 = vpop.permute.xlu0 %320
        %v322 = vlaneseq
        %v323 = vshrl.u32 %v322, 7
        %v324 = vadd.s32 %v323, 56
        %325 = vset.pattern.permute.xlu0 %v324
        %326 = vperm.xlu0 %325, %v279
        %v327 = vpop.permute.xlu0 %326
        %v328 = vlaneseq
        %v329 = vshrl.u32 %v328, 7
        %v330 = vadd.s32 %v329, 64
        %331 = vset.pattern.permute.xlu0 %v330
        %332 = vperm.xlu0 %331, %v279
        %v333 = vpop.permute.xlu0 %332
        %v334 = vlaneseq
        %v335 = vshrl.u32 %v334, 7
        %v336 = vadd.s32 %v335, 72
        %337 = vset.pattern.permute.xlu0 %v336
        %338 = vperm.xlu0 %337, %v279
        %v339 = vpop.permute.xlu0 %338
        %v340 = vlaneseq
        %v341 = vshrl.u32 %v340, 7
        %v342 = vadd.s32 %v341, 80
        %343 = vset.pattern.permute.xlu0 %v342
        %344 = vperm.xlu0 %343, %v279
        %v345 = vpop.permute.xlu0 %344
        %v346 = vlaneseq
        %v347 = vshrl.u32 %v346, 7
        %v348 = vadd.s32 %v347, 88
        %349 = vset.pattern.permute.xlu0 %v348
        %350 = vperm.xlu0 %349, %v279
        %v351 = vpop.permute.xlu0 %350
        %v352 = vlaneseq
        %v353 = vshrl.u32 %v352, 7
        %v354 = vadd.s32 %v353, 96
        %355 = vset.pattern.permute.xlu0 %v354
        %356 = vperm.xlu0 %355, %v279
        %v357 = vpop.permute.xlu0 %356
        %v358 = vlaneseq
        %v359 = vshrl.u32 %v358, 7
        %v360 = vadd.s32 %v359, 104
        %361 = vset.pattern.permute.xlu0 %v360
        %362 = vperm.xlu0 %361, %v279
        %v363 = vpop.permute.xlu0 %362
        %v364 = vlaneseq
        %v365 = vshrl.u32 %v364, 7
        %v366 = vadd.s32 %v365, 112
        %367 = vset.pattern.permute.xlu0 %v366
        %368 = vperm.xlu0 %367, %v279
        %v369 = vpop.permute.xlu0 %368
        %v370 = vlaneseq
        %v371 = vshrl.u32 %v370, 7
        %v372 = vadd.s32 %v371, 120
        %373 = vset.pattern.permute.xlu0 %v372
        %374 = vperm.xlu0 %373, %v279
        %v375 = vpop.permute.xlu0 %374
        %v376 = vperm.slane %v273, 1
        %v377 = vlaneseq
        %v378 = vshrl.u32 %v377, 7
        %380 = vset.pattern.permute.xlu0 %v378
        %381 = vperm.xlu0 %380, %v376
        %v382 = vpop.permute.xlu0 %381
        %v383 = vlaneseq
        %v384 = vshrl.u32 %v383, 7
        %v385 = vadd.s32 %v384, 8
        %386 = vset.pattern.permute.xlu0 %v385
        %387 = vperm.xlu0 %386, %v376
        %v388 = vpop.permute.xlu0 %387
        %v389 = vlaneseq
        %v390 = vshrl.u32 %v389, 7
        %v391 = vadd.s32 %v390, 16
        %392 = vset.pattern.permute.xlu0 %v391
        %393 = vperm.xlu0 %392, %v376
        %v394 = vpop.permute.xlu0 %393
        %v395 = vlaneseq
        %v396 = vshrl.u32 %v395, 7
        %v397 = vadd.s32 %v396, 24
        %398 = vset.pattern.permute.xlu0 %v397
        %399 = vperm.xlu0 %398, %v376
        %v400 = vpop.permute.xlu0 %399
        %v401 = vlaneseq
        %v402 = vshrl.u32 %v401, 7
        %v403 = vadd.s32 %v402, 32
        %404 = vset.pattern.permute.xlu0 %v403
        %405 = vperm.xlu0 %404, %v376
        %v406 = vpop.permute.xlu0 %405
        %v407 = vlaneseq
        %v408 = vshrl.u32 %v407, 7
        %v409 = vadd.s32 %v408, 40
        %410 = vset.pattern.permute.xlu0 %v409
        %411 = vperm.xlu0 %410, %v376
        %v412 = vpop.permute.xlu0 %411
        %v413 = vlaneseq
        %v414 = vshrl.u32 %v413, 7
        %v415 = vadd.s32 %v414, 48
        %416 = vset.pattern.permute.xlu0 %v415
        %417 = vperm.xlu0 %416, %v376
        %v418 = vpop.permute.xlu0 %417
        %v419 = vlaneseq
        %v420 = vshrl.u32 %v419, 7
        %v421 = vadd.s32 %v420, 56
        %422 = vset.pattern.permute.xlu0 %v421
        %423 = vperm.xlu0 %422, %v376
        %v424 = vpop.permute.xlu0 %423
        %v425 = vlaneseq
        %v426 = vshrl.u32 %v425, 7
        %v427 = vadd.s32 %v426, 64
        %428 = vset.pattern.permute.xlu0 %v427
        %429 = vperm.xlu0 %428, %v376
        %v430 = vpop.permute.xlu0 %429
        %v431 = vlaneseq
        %v432 = vshrl.u32 %v431, 7
        %v433 = vadd.s32 %v432, 72
        %434 = vset.pattern.permute.xlu0 %v433
        %435 = vperm.xlu0 %434, %v376
        %v436 = vpop.permute.xlu0 %435
        %v437 = vlaneseq
        %v438 = vshrl.u32 %v437, 7
        %v439 = vadd.s32 %v438, 80
        %440 = vset.pattern.permute.xlu0 %v439
        %441 = vperm.xlu0 %440, %v376
        %v442 = vpop.permute.xlu0 %441
        %v443 = vlaneseq
        %v444 = vshrl.u32 %v443, 7
        %v445 = vadd.s32 %v444, 88
        %446 = vset.pattern.permute.xlu0 %v445
        %447 = vperm.xlu0 %446, %v376
        %v448 = vpop.permute.xlu0 %447
        %v449 = vlaneseq
        %v450 = vshrl.u32 %v449, 7
        %v451 = vadd.s32 %v450, 96
        %452 = vset.pattern.permute.xlu0 %v451
        %453 = vperm.xlu0 %452, %v376
        %v454 = vpop.permute.xlu0 %453
        %v455 = vlaneseq
        %v456 = vshrl.u32 %v455, 7
        %v457 = vadd.s32 %v456, 104
        %458 = vset.pattern.permute.xlu0 %v457
        %459 = vperm.xlu0 %458, %v376
        %v460 = vpop.permute.xlu0 %459
        %v461 = vlaneseq
        %v462 = vshrl.u32 %v461, 7
        %v463 = vadd.s32 %v462, 112
        %464 = vset.pattern.permute.xlu0 %v463
        %465 = vperm.xlu0 %464, %v376
        %v466 = vpop.permute.xlu0 %465
        %v467 = vlaneseq
        %v468 = vshrl.u32 %v467, 7
        %v469 = vadd.s32 %v468, 120
        %470 = vset.pattern.permute.xlu0 %v469
        %471 = vperm.xlu0 %470, %v376
        %v472 = vpop.permute.xlu0 %471
        %v473 = vperm.slane %v273, 2
        %v474 = vlaneseq
        %v475 = vshrl.u32 %v474, 7
        %477 = vset.pattern.permute.xlu0 %v475
        %478 = vperm.xlu0 %477, %v473
        %v479 = vpop.permute.xlu0 %478
        %v480 = vlaneseq
        %v481 = vshrl.u32 %v480, 7
        %v482 = vadd.s32 %v481, 8
        %483 = vset.pattern.permute.xlu0 %v482
        %484 = vperm.xlu0 %483, %v473
        %v485 = vpop.permute.xlu0 %484
        %v486 = vlaneseq
        %v487 = vshrl.u32 %v486, 7
        %v488 = vadd.s32 %v487, 16
        %489 = vset.pattern.permute.xlu0 %v488
        %490 = vperm.xlu0 %489, %v473
        %v491 = vpop.permute.xlu0 %490
        %v492 = vlaneseq
        %v493 = vshrl.u32 %v492, 7
        %v494 = vadd.s32 %v493, 24
        %495 = vset.pattern.permute.xlu0 %v494
        %496 = vperm.xlu0 %495, %v473
        %v497 = vpop.permute.xlu0 %496
        %v498 = vlaneseq
        %v499 = vshrl.u32 %v498, 7
        %v500 = vadd.s32 %v499, 32
        %501 = vset.pattern.permute.xlu0 %v500
        %502 = vperm.xlu0 %501, %v473
        %v503 = vpop.permute.xlu0 %502
        %v504 = vlaneseq
        %v505 = vshrl.u32 %v504, 7
        %v506 = vadd.s32 %v505, 40
        %507 = vset.pattern.permute.xlu0 %v506
        %508 = vperm.xlu0 %507, %v473
        %v509 = vpop.permute.xlu0 %508
        %v510 = vlaneseq
        %v511 = vshrl.u32 %v510, 7
        %v512 = vadd.s32 %v511, 48
        %513 = vset.pattern.permute.xlu0 %v512
        %514 = vperm.xlu0 %513, %v473
        %v515 = vpop.permute.xlu0 %514
        %v516 = vlaneseq
        %v517 = vshrl.u32 %v516, 7
        %v518 = vadd.s32 %v517, 56
        %519 = vset.pattern.permute.xlu0 %v518
        %520 = vperm.xlu0 %519, %v473
        %v521 = vpop.permute.xlu0 %520
        %v522 = vlaneseq
        %v523 = vshrl.u32 %v522, 7
        %v524 = vadd.s32 %v523, 64
        %525 = vset.pattern.permute.xlu0 %v524
        %526 = vperm.xlu0 %525, %v473
        %v527 = vpop.permute.xlu0 %526
        %v528 = vlaneseq
        %v529 = vshrl.u32 %v528, 7
        %v530 = vadd.s32 %v529, 72
        %531 = vset.pattern.permute.xlu0 %v530
        %532 = vperm.xlu0 %531, %v473
        %v533 = vpop.permute.xlu0 %532
        %v534 = vlaneseq
        %v535 = vshrl.u32 %v534, 7
        %v536 = vadd.s32 %v535, 80
        %537 = vset.pattern.permute.xlu0 %v536
        %538 = vperm.xlu0 %537, %v473
        %v539 = vpop.permute.xlu0 %538
        %v540 = vlaneseq
        %v541 = vshrl.u32 %v540, 7
        %v542 = vadd.s32 %v541, 88
        %543 = vset.pattern.permute.xlu0 %v542
        %544 = vperm.xlu0 %543, %v473
        %v545 = vpop.permute.xlu0 %544
        %v546 = vlaneseq
        %v547 = vshrl.u32 %v546, 7
        %v548 = vadd.s32 %v547, 96
        %549 = vset.pattern.permute.xlu0 %v548
        %550 = vperm.xlu0 %549, %v473
        %v551 = vpop.permute.xlu0 %550
        %v552 = vlaneseq
        %v553 = vshrl.u32 %v552, 7
        %v554 = vadd.s32 %v553, 104
        %555 = vset.pattern.permute.xlu0 %v554
        %556 = vperm.xlu0 %555, %v473
        %v557 = vpop.permute.xlu0 %556
        %v558 = vlaneseq
        %v559 = vshrl.u32 %v558, 7
        %v560 = vadd.s32 %v559, 112
        %561 = vset.pattern.permute.xlu0 %v560
        %562 = vperm.xlu0 %561, %v473
        %v563 = vpop.permute.xlu0 %562
        %v564 = vlaneseq
        %v565 = vshrl.u32 %v564, 7
        %v566 = vadd.s32 %v565, 120
        %567 = vset.pattern.permute.xlu0 %v566
        %568 = vperm.xlu0 %567, %v473
        %v569 = vpop.permute.xlu0 %568
        %v570 = vperm.slane %v273, 3
        %v571 = vlaneseq
        %v572 = vshrl.u32 %v571, 7
        %574 = vset.pattern.permute.xlu0 %v572
        %575 = vperm.xlu0 %574, %v570
        %v576 = vpop.permute.xlu0 %575
        %v577 = vlaneseq
        %v578 = vshrl.u32 %v577, 7
        %v579 = vadd.s32 %v578, 8
        %580 = vset.pattern.permute.xlu0 %v579
        %581 = vperm.xlu0 %580, %v570
        %v582 = vpop.permute.xlu0 %581
        %v583 = vlaneseq
        %v584 = vshrl.u32 %v583, 7
        %v585 = vadd.s32 %v584, 16
        %586 = vset.pattern.permute.xlu0 %v585
        %587 = vperm.xlu0 %586, %v570
        %v588 = vpop.permute.xlu0 %587
        %v589 = vlaneseq
        %v590 = vshrl.u32 %v589, 7
        %v591 = vadd.s32 %v590, 24
        %592 = vset.pattern.permute.xlu0 %v591
        %593 = vperm.xlu0 %592, %v570
        %v594 = vpop.permute.xlu0 %593
        %v595 = vlaneseq
        %v596 = vshrl.u32 %v595, 7
        %v597 = vadd.s32 %v596, 32
        %598 = vset.pattern.permute.xlu0 %v597
        %599 = vperm.xlu0 %598, %v570
        %v600 = vpop.permute.xlu0 %599
        %v601 = vlaneseq
        %v602 = vshrl.u32 %v601, 7
        %v603 = vadd.s32 %v602, 40
        %604 = vset.pattern.permute.xlu0 %v603
        %605 = vperm.xlu0 %604, %v570
        %v606 = vpop.permute.xlu0 %605
        %v607 = vlaneseq
        %v608 = vshrl.u32 %v607, 7
        %v609 = vadd.s32 %v608, 48
        %610 = vset.pattern.permute.xlu0 %v609
        %611 = vperm.xlu0 %610, %v570
        %v612 = vpop.permute.xlu0 %611
        %v613 = vlaneseq
        %v614 = vshrl.u32 %v613, 7
        %v615 = vadd.s32 %v614, 56
        %616 = vset.pattern.permute.xlu0 %v615
        %617 = vperm.xlu0 %616, %v570
        %v618 = vpop.permute.xlu0 %617
        %v619 = vlaneseq
        %v620 = vshrl.u32 %v619, 7
        %v621 = vadd.s32 %v620, 64
        %622 = vset.pattern.permute.xlu0 %v621
        %623 = vperm.xlu0 %622, %v570
        %v624 = vpop.permute.xlu0 %623
        %v625 = vlaneseq
        %v626 = vshrl.u32 %v625, 7
        %v627 = vadd.s32 %v626, 72
        %628 = vset.pattern.permute.xlu0 %v627
        %629 = vperm.xlu0 %628, %v570
        %v630 = vpop.permute.xlu0 %629
        %v631 = vlaneseq
        %v632 = vshrl.u32 %v631, 7
        %v633 = vadd.s32 %v632, 80
        %634 = vset.pattern.permute.xlu0 %v633
        %635 = vperm.xlu0 %634, %v570
        %v636 = vpop.permute.xlu0 %635
        %v637 = vlaneseq
        %v638 = vshrl.u32 %v637, 7
        %v639 = vadd.s32 %v638, 88
        %640 = vset.pattern.permute.xlu0 %v639
        %641 = vperm.xlu0 %640, %v570
        %v642 = vpop.permute.xlu0 %641
        %v643 = vlaneseq
        %v644 = vshrl.u32 %v643, 7
        %v645 = vadd.s32 %v644, 96
        %646 = vset.pattern.permute.xlu0 %v645
        %647 = vperm.xlu0 %646, %v570
        %v648 = vpop.permute.xlu0 %647
        %v649 = vlaneseq
        %v650 = vshrl.u32 %v649, 7
        %v651 = vadd.s32 %v650, 104
        %652 = vset.pattern.permute.xlu0 %v651
        %653 = vperm.xlu0 %652, %v570
        %v654 = vpop.permute.xlu0 %653
        %v655 = vlaneseq
        %v656 = vshrl.u32 %v655, 7
        %v657 = vadd.s32 %v656, 112
        %658 = vset.pattern.permute.xlu0 %v657
        %659 = vperm.xlu0 %658, %v570
        %v660 = vpop.permute.xlu0 %659
        %v661 = vlaneseq
        %v662 = vshrl.u32 %v661, 7
        %v663 = vadd.s32 %v662, 120
        %664 = vset.pattern.permute.xlu0 %v663
        %665 = vperm.xlu0 %664, %v570
        %v666 = vpop.permute.xlu0 %665
        %v667 = vperm.slane %v273, 4
        %v668 = vlaneseq
        %v669 = vshrl.u32 %v668, 7
        %671 = vset.pattern.permute.xlu0 %v669
        %672 = vperm.xlu0 %671, %v667
        %v673 = vpop.permute.xlu0 %672
        %v674 = vlaneseq
        %v675 = vshrl.u32 %v674, 7
        %v676 = vadd.s32 %v675, 8
        %677 = vset.pattern.permute.xlu0 %v676
        %678 = vperm.xlu0 %677, %v667
        %v679 = vpop.permute.xlu0 %678
        %v680 = vlaneseq
        %v681 = vshrl.u32 %v680, 7
        %v682 = vadd.s32 %v681, 16
        %683 = vset.pattern.permute.xlu0 %v682
        %684 = vperm.xlu0 %683, %v667
        %v685 = vpop.permute.xlu0 %684
        %v686 = vlaneseq
        %v687 = vshrl.u32 %v686, 7
        %v688 = vadd.s32 %v687, 24
        %689 = vset.pattern.permute.xlu0 %v688
        %690 = vperm.xlu0 %689, %v667
        %v691 = vpop.permute.xlu0 %690
        %v692 = vlaneseq
        %v693 = vshrl.u32 %v692, 7
        %v694 = vadd.s32 %v693, 32
        %695 = vset.pattern.permute.xlu0 %v694
        %696 = vperm.xlu0 %695, %v667
        %v697 = vpop.permute.xlu0 %696
        %v698 = vlaneseq
        %v699 = vshrl.u32 %v698, 7
        %v700 = vadd.s32 %v699, 40
        %701 = vset.pattern.permute.xlu0 %v700
        %702 = vperm.xlu0 %701, %v667
        %v703 = vpop.permute.xlu0 %702
        %v704 = vlaneseq
        %v705 = vshrl.u32 %v704, 7
        %v706 = vadd.s32 %v705, 48
        %707 = vset.pattern.permute.xlu0 %v706
        %708 = vperm.xlu0 %707, %v667
        %v709 = vpop.permute.xlu0 %708
        %v710 = vlaneseq
        %v711 = vshrl.u32 %v710, 7
        %v712 = vadd.s32 %v711, 56
        %713 = vset.pattern.permute.xlu0 %v712
        %714 = vperm.xlu0 %713, %v667
        %v715 = vpop.permute.xlu0 %714
        %v716 = vlaneseq
        %v717 = vshrl.u32 %v716, 7
        %v718 = vadd.s32 %v717, 64
        %719 = vset.pattern.permute.xlu0 %v718
        %720 = vperm.xlu0 %719, %v667
        %v721 = vpop.permute.xlu0 %720
        %v722 = vlaneseq
        %v723 = vshrl.u32 %v722, 7
        %v724 = vadd.s32 %v723, 72
        %725 = vset.pattern.permute.xlu0 %v724
        %726 = vperm.xlu0 %725, %v667
        %v727 = vpop.permute.xlu0 %726
        %v728 = vlaneseq
        %v729 = vshrl.u32 %v728, 7
        %v730 = vadd.s32 %v729, 80
        %731 = vset.pattern.permute.xlu0 %v730
        %732 = vperm.xlu0 %731, %v667
        %v733 = vpop.permute.xlu0 %732
        %v734 = vlaneseq
        %v735 = vshrl.u32 %v734, 7
        %v736 = vadd.s32 %v735, 88
        %737 = vset.pattern.permute.xlu0 %v736
        %738 = vperm.xlu0 %737, %v667
        %v739 = vpop.permute.xlu0 %738
        %v740 = vlaneseq
        %v741 = vshrl.u32 %v740, 7
        %v742 = vadd.s32 %v741, 96
        %743 = vset.pattern.permute.xlu0 %v742
        %744 = vperm.xlu0 %743, %v667
        %v745 = vpop.permute.xlu0 %744
        %v746 = vlaneseq
        %v747 = vshrl.u32 %v746, 7
        %v748 = vadd.s32 %v747, 104
        %749 = vset.pattern.permute.xlu0 %v748
        %750 = vperm.xlu0 %749, %v667
        %v751 = vpop.permute.xlu0 %750
        %v752 = vlaneseq
        %v753 = vshrl.u32 %v752, 7
        %v754 = vadd.s32 %v753, 112
        %755 = vset.pattern.permute.xlu0 %v754
        %756 = vperm.xlu0 %755, %v667
        %v757 = vpop.permute.xlu0 %756
        %v758 = vlaneseq
        %v759 = vshrl.u32 %v758, 7
        %v760 = vadd.s32 %v759, 120
        %761 = vset.pattern.permute.xlu0 %v760
        %762 = vperm.xlu0 %761, %v667
        %v763 = vpop.permute.xlu0 %762
        %v764 = vperm.slane %v273, 5
        %v765 = vlaneseq
        %v766 = vshrl.u32 %v765, 7
        %768 = vset.pattern.permute.xlu0 %v766
        %769 = vperm.xlu0 %768, %v764
        %v770 = vpop.permute.xlu0 %769
        %v771 = vlaneseq
        %v772 = vshrl.u32 %v771, 7
        %v773 = vadd.s32 %v772, 8
        %774 = vset.pattern.permute.xlu0 %v773
        %775 = vperm.xlu0 %774, %v764
        %v776 = vpop.permute.xlu0 %775
        %v777 = vlaneseq
        %v778 = vshrl.u32 %v777, 7
        %v779 = vadd.s32 %v778, 16
        %780 = vset.pattern.permute.xlu0 %v779
        %781 = vperm.xlu0 %780, %v764
        %v782 = vpop.permute.xlu0 %781
        %v783 = vlaneseq
        %v784 = vshrl.u32 %v783, 7
        %v785 = vadd.s32 %v784, 24
        %786 = vset.pattern.permute.xlu0 %v785
        %787 = vperm.xlu0 %786, %v764
        %v788 = vpop.permute.xlu0 %787
        %v789 = vlaneseq
        %v790 = vshrl.u32 %v789, 7
        %v791 = vadd.s32 %v790, 32
        %792 = vset.pattern.permute.xlu0 %v791
        %793 = vperm.xlu0 %792, %v764
        %v794 = vpop.permute.xlu0 %793
        %v795 = vlaneseq
        %v796 = vshrl.u32 %v795, 7
        %v797 = vadd.s32 %v796, 40
        %798 = vset.pattern.permute.xlu0 %v797
        %799 = vperm.xlu0 %798, %v764
        %v800 = vpop.permute.xlu0 %799
        %v801 = vlaneseq
        %v802 = vshrl.u32 %v801, 7
        %v803 = vadd.s32 %v802, 48
        %804 = vset.pattern.permute.xlu0 %v803
        %805 = vperm.xlu0 %804, %v764
        %v806 = vpop.permute.xlu0 %805
        %v807 = vlaneseq
        %v808 = vshrl.u32 %v807, 7
        %v809 = vadd.s32 %v808, 56
        %810 = vset.pattern.permute.xlu0 %v809
        %811 = vperm.xlu0 %810, %v764
        %v812 = vpop.permute.xlu0 %811
        %v813 = vlaneseq
        %v814 = vshrl.u32 %v813, 7
        %v815 = vadd.s32 %v814, 64
        %816 = vset.pattern.permute.xlu0 %v815
        %817 = vperm.xlu0 %816, %v764
        %v818 = vpop.permute.xlu0 %817
        %v819 = vlaneseq
        %v820 = vshrl.u32 %v819, 7
        %v821 = vadd.s32 %v820, 72
        %822 = vset.pattern.permute.xlu0 %v821
        %823 = vperm.xlu0 %822, %v764
        %v824 = vpop.permute.xlu0 %823
        %v825 = vlaneseq
        %v826 = vshrl.u32 %v825, 7
        %v827 = vadd.s32 %v826, 80
        %828 = vset.pattern.permute.xlu0 %v827
        %829 = vperm.xlu0 %828, %v764
        %v830 = vpop.permute.xlu0 %829
        %v831 = vlaneseq
        %v832 = vshrl.u32 %v831, 7
        %v833 = vadd.s32 %v832, 88
        %834 = vset.pattern.permute.xlu0 %v833
        %835 = vperm.xlu0 %834, %v764
        %v836 = vpop.permute.xlu0 %835
        %v837 = vlaneseq
        %v838 = vshrl.u32 %v837, 7
        %v839 = vadd.s32 %v838, 96
        %840 = vset.pattern.permute.xlu0 %v839
        %841 = vperm.xlu0 %840, %v764
        %v842 = vpop.permute.xlu0 %841
        %v843 = vlaneseq
        %v844 = vshrl.u32 %v843, 7
        %v845 = vadd.s32 %v844, 104
        %846 = vset.pattern.permute.xlu0 %v845
        %847 = vperm.xlu0 %846, %v764
        %v848 = vpop.permute.xlu0 %847
        %v849 = vlaneseq
        %v850 = vshrl.u32 %v849, 7
        %v851 = vadd.s32 %v850, 112
        %852 = vset.pattern.permute.xlu0 %v851
        %853 = vperm.xlu0 %852, %v764
        %v854 = vpop.permute.xlu0 %853
        %v855 = vlaneseq
        %v856 = vshrl.u32 %v855, 7
        %v857 = vadd.s32 %v856, 120
        %858 = vset.pattern.permute.xlu0 %v857
        %859 = vperm.xlu0 %858, %v764
        %v860 = vpop.permute.xlu0 %859
        %v861 = vperm.slane %v273, 6
        %v862 = vlaneseq
        %v863 = vshrl.u32 %v862, 7
        %865 = vset.pattern.permute.xlu0 %v863
        %866 = vperm.xlu0 %865, %v861
        %v867 = vpop.permute.xlu0 %866
        %v868 = vlaneseq
        %v869 = vshrl.u32 %v868, 7
        %v870 = vadd.s32 %v869, 8
        %871 = vset.pattern.permute.xlu0 %v870
        %872 = vperm.xlu0 %871, %v861
        %v873 = vpop.permute.xlu0 %872
        %v874 = vlaneseq
        %v875 = vshrl.u32 %v874, 7
        %v876 = vadd.s32 %v875, 16
        %877 = vset.pattern.permute.xlu0 %v876
        %878 = vperm.xlu0 %877, %v861
        %v879 = vpop.permute.xlu0 %878
        %v880 = vlaneseq
        %v881 = vshrl.u32 %v880, 7
        %v882 = vadd.s32 %v881, 24
        %883 = vset.pattern.permute.xlu0 %v882
        %884 = vperm.xlu0 %883, %v861
        %v885 = vpop.permute.xlu0 %884
        %v886 = vlaneseq
        %v887 = vshrl.u32 %v886, 7
        %v888 = vadd.s32 %v887, 32
        %889 = vset.pattern.permute.xlu0 %v888
        %890 = vperm.xlu0 %889, %v861
        %v891 = vpop.permute.xlu0 %890
        %v892 = vlaneseq
        %v893 = vshrl.u32 %v892, 7
        %v894 = vadd.s32 %v893, 40
        %895 = vset.pattern.permute.xlu0 %v894
        %896 = vperm.xlu0 %895, %v861
        %v897 = vpop.permute.xlu0 %896
        %v898 = vlaneseq
        %v899 = vshrl.u32 %v898, 7
        %v900 = vadd.s32 %v899, 48
        %901 = vset.pattern.permute.xlu0 %v900
        %902 = vperm.xlu0 %901, %v861
        %v903 = vpop.permute.xlu0 %902
        %v904 = vlaneseq
        %v905 = vshrl.u32 %v904, 7
        %v906 = vadd.s32 %v905, 56
        %907 = vset.pattern.permute.xlu0 %v906
        %908 = vperm.xlu0 %907, %v861
        %v909 = vpop.permute.xlu0 %908
        %v910 = vlaneseq
        %v911 = vshrl.u32 %v910, 7
        %v912 = vadd.s32 %v911, 64
        %913 = vset.pattern.permute.xlu0 %v912
        %914 = vperm.xlu0 %913, %v861
        %v915 = vpop.permute.xlu0 %914
        %v916 = vlaneseq
        %v917 = vshrl.u32 %v916, 7
        %v918 = vadd.s32 %v917, 72
        %919 = vset.pattern.permute.xlu0 %v918
        %920 = vperm.xlu0 %919, %v861
        %v921 = vpop.permute.xlu0 %920
        %v922 = vlaneseq
        %v923 = vshrl.u32 %v922, 7
        %v924 = vadd.s32 %v923, 80
        %925 = vset.pattern.permute.xlu0 %v924
        %926 = vperm.xlu0 %925, %v861
        %v927 = vpop.permute.xlu0 %926
        %v928 = vlaneseq
        %v929 = vshrl.u32 %v928, 7
        %v930 = vadd.s32 %v929, 88
        %931 = vset.pattern.permute.xlu0 %v930
        %932 = vperm.xlu0 %931, %v861
        %v933 = vpop.permute.xlu0 %932
        %v934 = vlaneseq
        %v935 = vshrl.u32 %v934, 7
        %v936 = vadd.s32 %v935, 96
        %937 = vset.pattern.permute.xlu0 %v936
        %938 = vperm.xlu0 %937, %v861
        %v939 = vpop.permute.xlu0 %938
        %v940 = vlaneseq
        %v941 = vshrl.u32 %v940, 7
        %v942 = vadd.s32 %v941, 104
        %943 = vset.pattern.permute.xlu0 %v942
        %944 = vperm.xlu0 %943, %v861
        %v945 = vpop.permute.xlu0 %944
        %v946 = vlaneseq
        %v947 = vshrl.u32 %v946, 7
        %v948 = vadd.s32 %v947, 112
        %949 = vset.pattern.permute.xlu0 %v948
        %950 = vperm.xlu0 %949, %v861
        %v951 = vpop.permute.xlu0 %950
        %v952 = vlaneseq
        %v953 = vshrl.u32 %v952, 7
        %v954 = vadd.s32 %v953, 120
        %955 = vset.pattern.permute.xlu0 %v954
        %956 = vperm.xlu0 %955, %v861
        %v957 = vpop.permute.xlu0 %956
        %v958 = vperm.slane %v273, 7
        %v959 = vlaneseq
        %v960 = vshrl.u32 %v959, 7
        %962 = vset.pattern.permute.xlu0 %v960
        %963 = vperm.xlu0 %962, %v958
        %v964 = vpop.permute.xlu0 %963
        %v965 = vlaneseq
        %v966 = vshrl.u32 %v965, 7
        %v967 = vadd.s32 %v966, 8
        %968 = vset.pattern.permute.xlu0 %v967
        %969 = vperm.xlu0 %968, %v958
        %v970 = vpop.permute.xlu0 %969
        %v971 = vlaneseq
        %v972 = vshrl.u32 %v971, 7
        %v973 = vadd.s32 %v972, 16
        %974 = vset.pattern.permute.xlu0 %v973
        %975 = vperm.xlu0 %974, %v958
        %v976 = vpop.permute.xlu0 %975
        %v977 = vlaneseq
        %v978 = vshrl.u32 %v977, 7
        %v979 = vadd.s32 %v978, 24
        %980 = vset.pattern.permute.xlu0 %v979
        %981 = vperm.xlu0 %980, %v958
        %v982 = vpop.permute.xlu0 %981
        %v983 = vlaneseq
        %v984 = vshrl.u32 %v983, 7
        %v985 = vadd.s32 %v984, 32
        %986 = vset.pattern.permute.xlu0 %v985
        %987 = vperm.xlu0 %986, %v958
        %v988 = vpop.permute.xlu0 %987
        %v989 = vlaneseq
        %v990 = vshrl.u32 %v989, 7
        %v991 = vadd.s32 %v990, 40
        %992 = vset.pattern.permute.xlu0 %v991
        %993 = vperm.xlu0 %992, %v958
        %v994 = vpop.permute.xlu0 %993
        %v995 = vlaneseq
        %v996 = vshrl.u32 %v995, 7
        %v997 = vadd.s32 %v996, 48
        %998 = vset.pattern.permute.xlu0 %v997
        %999 = vperm.xlu0 %998, %v958
        %v1000 = vpop.permute.xlu0 %999
        %v1001 = vlaneseq
        %v1002 = vshrl.u32 %v1001, 7
        %v1003 = vadd.s32 %v1002, 56
        %1004 = vset.pattern.permute.xlu0 %v1003
        %1005 = vperm.xlu0 %1004, %v958
        %v1006 = vpop.permute.xlu0 %1005
        %v1007 = vlaneseq
        %v1008 = vshrl.u32 %v1007, 7
        %v1009 = vadd.s32 %v1008, 64
        %1010 = vset.pattern.permute.xlu0 %v1009
        %1011 = vperm.xlu0 %1010, %v958
        %v1012 = vpop.permute.xlu0 %1011
        %v1013 = vlaneseq
        %v1014 = vshrl.u32 %v1013, 7
        %v1015 = vadd.s32 %v1014, 72
        %1016 = vset.pattern.permute.xlu0 %v1015
        %1017 = vperm.xlu0 %1016, %v958
        %v1018 = vpop.permute.xlu0 %1017
        %v1019 = vlaneseq
        %v1020 = vshrl.u32 %v1019, 7
        %v1021 = vadd.s32 %v1020, 80
        %1022 = vset.pattern.permute.xlu0 %v1021
        %1023 = vperm.xlu0 %1022, %v958
        %v1024 = vpop.permute.xlu0 %1023
        %v1025 = vlaneseq
        %v1026 = vshrl.u32 %v1025, 7
        %v1027 = vadd.s32 %v1026, 88
        %1028 = vset.pattern.permute.xlu0 %v1027
        %1029 = vperm.xlu0 %1028, %v958
        %v1030 = vpop.permute.xlu0 %1029
        %v1031 = vlaneseq
        %v1032 = vshrl.u32 %v1031, 7
        %v1033 = vadd.s32 %v1032, 96
        %1034 = vset.pattern.permute.xlu0 %v1033
        %1035 = vperm.xlu0 %1034, %v958
        %v1036 = vpop.permute.xlu0 %1035
        %v1037 = vlaneseq
        %v1038 = vshrl.u32 %v1037, 7
        %v1039 = vadd.s32 %v1038, 104
        %1040 = vset.pattern.permute.xlu0 %v1039
        %1041 = vperm.xlu0 %1040, %v958
        %v1042 = vpop.permute.xlu0 %1041
        %v1043 = vlaneseq
        %v1044 = vshrl.u32 %v1043, 7
        %v1045 = vadd.s32 %v1044, 112
        %1046 = vset.pattern.permute.xlu0 %v1045
        %1047 = vperm.xlu0 %1046, %v958
        %v1048 = vpop.permute.xlu0 %1047
        %v1049 = vlaneseq
        %v1050 = vshrl.u32 %v1049, 7
        %v1051 = vadd.s32 %v1050, 120
        %1052 = vset.pattern.permute.xlu0 %v1051
        %1053 = vperm.xlu0 %1052, %v958
        %v1054 = vpop.permute.xlu0 %1053
        %vm1055 = vcmp.eq.s32.totalorder %v285, %v275
        %vm1056 = vcmp.eq.s32.totalorder %v285, %v276
        %vm1057 = vcmp.eq.s32.totalorder %v285, %v277
        %vm1058 = vcmp.eq.s32.totalorder %v285, %v278
        %vm1059 = vcmp.eq.s32.totalorder %v291, %v275
        %vm1060 = vcmp.eq.s32.totalorder %v291, %v276
        %vm1061 = vcmp.eq.s32.totalorder %v291, %v277
        %vm1062 = vcmp.eq.s32.totalorder %v291, %v278
        %vm1063 = vcmp.eq.s32.totalorder %v297, %v275
        %vm1064 = vcmp.eq.s32.totalorder %v297, %v276
        %vm1065 = vcmp.eq.s32.totalorder %v297, %v277
        %vm1066 = vcmp.eq.s32.totalorder %v297, %v278
        %vm1067 = vcmp.eq.s32.totalorder %v303, %v275
        %vm1068 = vcmp.eq.s32.totalorder %v303, %v276
        %vm1069 = vcmp.eq.s32.totalorder %v303, %v277
        %vm1070 = vcmp.eq.s32.totalorder %v303, %v278
        %vm1071 = vcmp.eq.s32.totalorder %v309, %v275
        %vm1072 = vcmp.eq.s32.totalorder %v309, %v276
        %vm1073 = vcmp.eq.s32.totalorder %v309, %v277
        %vm1074 = vcmp.eq.s32.totalorder %v309, %v278
        %vm1075 = vcmp.eq.s32.totalorder %v315, %v275
        %vm1076 = vcmp.eq.s32.totalorder %v315, %v276
        %vm1077 = vcmp.eq.s32.totalorder %v315, %v277
        %vm1078 = vcmp.eq.s32.totalorder %v315, %v278
        %vm1079 = vcmp.eq.s32.totalorder %v321, %v275
        %vm1080 = vcmp.eq.s32.totalorder %v321, %v276
        %vm1081 = vcmp.eq.s32.totalorder %v321, %v277
        %vm1082 = vcmp.eq.s32.totalorder %v321, %v278
        %vm1083 = vcmp.eq.s32.totalorder %v327, %v275
        %vm1084 = vcmp.eq.s32.totalorder %v327, %v276
        %vm1085 = vcmp.eq.s32.totalorder %v327, %v277
        %vm1086 = vcmp.eq.s32.totalorder %v327, %v278
        %vm1087 = vcmp.eq.s32.totalorder %v333, %v275
        %vm1088 = vcmp.eq.s32.totalorder %v333, %v276
        %vm1089 = vcmp.eq.s32.totalorder %v333, %v277
        %vm1090 = vcmp.eq.s32.totalorder %v333, %v278
        %vm1091 = vcmp.eq.s32.totalorder %v339, %v275
        %vm1092 = vcmp.eq.s32.totalorder %v339, %v276
        %vm1093 = vcmp.eq.s32.totalorder %v339, %v277
        %vm1094 = vcmp.eq.s32.totalorder %v339, %v278
        %vm1095 = vcmp.eq.s32.totalorder %v345, %v275
        %vm1096 = vcmp.eq.s32.totalorder %v345, %v276
        %vm1097 = vcmp.eq.s32.totalorder %v345, %v277
        %vm1098 = vcmp.eq.s32.totalorder %v345, %v278
        %vm1099 = vcmp.eq.s32.totalorder %v351, %v275
        %vm1100 = vcmp.eq.s32.totalorder %v351, %v276
        %vm1101 = vcmp.eq.s32.totalorder %v351, %v277
        %vm1102 = vcmp.eq.s32.totalorder %v351, %v278
        %vm1103 = vcmp.eq.s32.totalorder %v357, %v275
        %vm1104 = vcmp.eq.s32.totalorder %v357, %v276
        %vm1105 = vcmp.eq.s32.totalorder %v357, %v277
        %vm1106 = vcmp.eq.s32.totalorder %v357, %v278
        %vm1107 = vcmp.eq.s32.totalorder %v363, %v275
        %vm1108 = vcmp.eq.s32.totalorder %v363, %v276
        %vm1109 = vcmp.eq.s32.totalorder %v363, %v277
        %vm1110 = vcmp.eq.s32.totalorder %v363, %v278
        %vm1111 = vcmp.eq.s32.totalorder %v369, %v275
        %vm1112 = vcmp.eq.s32.totalorder %v369, %v276
        %vm1113 = vcmp.eq.s32.totalorder %v369, %v277
        %vm1114 = vcmp.eq.s32.totalorder %v369, %v278
        %vm1115 = vcmp.eq.s32.totalorder %v375, %v275
        %vm1116 = vcmp.eq.s32.totalorder %v375, %v276
        %vm1117 = vcmp.eq.s32.totalorder %v375, %v277
        %vm1118 = vcmp.eq.s32.totalorder %v375, %v278
        %vm1119 = vcmp.eq.s32.totalorder %v382, %v275
        %vm1120 = vcmp.eq.s32.totalorder %v382, %v276
        %vm1121 = vcmp.eq.s32.totalorder %v382, %v277
        %vm1122 = vcmp.eq.s32.totalorder %v382, %v278
        %vm1123 = vcmp.eq.s32.totalorder %v388, %v275
        %vm1124 = vcmp.eq.s32.totalorder %v388, %v276
        %vm1125 = vcmp.eq.s32.totalorder %v388, %v277
        %vm1126 = vcmp.eq.s32.totalorder %v388, %v278
        %vm1127 = vcmp.eq.s32.totalorder %v394, %v275
        %vm1128 = vcmp.eq.s32.totalorder %v394, %v276
        %vm1129 = vcmp.eq.s32.totalorder %v394, %v277
        %vm1130 = vcmp.eq.s32.totalorder %v394, %v278
        %vm1131 = vcmp.eq.s32.totalorder %v400, %v275
        %vm1132 = vcmp.eq.s32.totalorder %v400, %v276
        %vm1133 = vcmp.eq.s32.totalorder %v400, %v277
        %vm1134 = vcmp.eq.s32.totalorder %v400, %v278
        %vm1135 = vcmp.eq.s32.totalorder %v406, %v275
        %vm1136 = vcmp.eq.s32.totalorder %v406, %v276
        %vm1137 = vcmp.eq.s32.totalorder %v406, %v277
        %vm1138 = vcmp.eq.s32.totalorder %v406, %v278
        %vm1139 = vcmp.eq.s32.totalorder %v412, %v275
        %vm1140 = vcmp.eq.s32.totalorder %v412, %v276
        %vm1141 = vcmp.eq.s32.totalorder %v412, %v277
        %vm1142 = vcmp.eq.s32.totalorder %v412, %v278
        %vm1143 = vcmp.eq.s32.totalorder %v418, %v275
        %vm1144 = vcmp.eq.s32.totalorder %v418, %v276
        %vm1145 = vcmp.eq.s32.totalorder %v418, %v277
        %vm1146 = vcmp.eq.s32.totalorder %v418, %v278
        %vm1147 = vcmp.eq.s32.totalorder %v424, %v275
        %vm1148 = vcmp.eq.s32.totalorder %v424, %v276
        %vm1149 = vcmp.eq.s32.totalorder %v424, %v277
        %vm1150 = vcmp.eq.s32.totalorder %v424, %v278
        %vm1151 = vcmp.eq.s32.totalorder %v430, %v275
        %vm1152 = vcmp.eq.s32.totalorder %v430, %v276
        %vm1153 = vcmp.eq.s32.totalorder %v430, %v277
        %vm1154 = vcmp.eq.s32.totalorder %v430, %v278
        %vm1155 = vcmp.eq.s32.totalorder %v436, %v275
        %vm1156 = vcmp.eq.s32.totalorder %v436, %v276
        %vm1157 = vcmp.eq.s32.totalorder %v436, %v277
        %vm1158 = vcmp.eq.s32.totalorder %v436, %v278
        %vm1159 = vcmp.eq.s32.totalorder %v442, %v275
        %vm1160 = vcmp.eq.s32.totalorder %v442, %v276
        %vm1161 = vcmp.eq.s32.totalorder %v442, %v277
        %vm1162 = vcmp.eq.s32.totalorder %v442, %v278
        %vm1163 = vcmp.eq.s32.totalorder %v448, %v275
        %vm1164 = vcmp.eq.s32.totalorder %v448, %v276
        %vm1165 = vcmp.eq.s32.totalorder %v448, %v277
        %vm1166 = vcmp.eq.s32.totalorder %v448, %v278
        %vm1167 = vcmp.eq.s32.totalorder %v454, %v275
        %vm1168 = vcmp.eq.s32.totalorder %v454, %v276
        %vm1169 = vcmp.eq.s32.totalorder %v454, %v277
        %vm1170 = vcmp.eq.s32.totalorder %v454, %v278
        %vm1171 = vcmp.eq.s32.totalorder %v460, %v275
        %vm1172 = vcmp.eq.s32.totalorder %v460, %v276
        %vm1173 = vcmp.eq.s32.totalorder %v460, %v277
        %vm1174 = vcmp.eq.s32.totalorder %v460, %v278
        %vm1175 = vcmp.eq.s32.totalorder %v466, %v275
        %vm1176 = vcmp.eq.s32.totalorder %v466, %v276
        %vm1177 = vcmp.eq.s32.totalorder %v466, %v277
        %vm1178 = vcmp.eq.s32.totalorder %v466, %v278
        %vm1179 = vcmp.eq.s32.totalorder %v472, %v275
        %vm1180 = vcmp.eq.s32.totalorder %v472, %v276
        %vm1181 = vcmp.eq.s32.totalorder %v472, %v277
        %vm1182 = vcmp.eq.s32.totalorder %v472, %v278
        %vm1183 = vcmp.eq.s32.totalorder %v479, %v275
        %vm1184 = vcmp.eq.s32.totalorder %v479, %v276
        %vm1185 = vcmp.eq.s32.totalorder %v479, %v277
        %vm1186 = vcmp.eq.s32.totalorder %v479, %v278
        %vm1187 = vcmp.eq.s32.totalorder %v485, %v275
        %vm1188 = vcmp.eq.s32.totalorder %v485, %v276
        %vm1189 = vcmp.eq.s32.totalorder %v485, %v277
        %vm1190 = vcmp.eq.s32.totalorder %v485, %v278
        %vm1191 = vcmp.eq.s32.totalorder %v491, %v275
        %vm1192 = vcmp.eq.s32.totalorder %v491, %v276
        %vm1193 = vcmp.eq.s32.totalorder %v491, %v277
        %vm1194 = vcmp.eq.s32.totalorder %v491, %v278
        %vm1195 = vcmp.eq.s32.totalorder %v497, %v275
        %vm1196 = vcmp.eq.s32.totalorder %v497, %v276
        %vm1197 = vcmp.eq.s32.totalorder %v497, %v277
        %vm1198 = vcmp.eq.s32.totalorder %v497, %v278
        %vm1199 = vcmp.eq.s32.totalorder %v503, %v275
        %vm1200 = vcmp.eq.s32.totalorder %v503, %v276
        %vm1201 = vcmp.eq.s32.totalorder %v503, %v277
        %vm1202 = vcmp.eq.s32.totalorder %v503, %v278
        %vm1203 = vcmp.eq.s32.totalorder %v509, %v275
        %vm1204 = vcmp.eq.s32.totalorder %v509, %v276
        %vm1205 = vcmp.eq.s32.totalorder %v509, %v277
        %vm1206 = vcmp.eq.s32.totalorder %v509, %v278
        %vm1207 = vcmp.eq.s32.totalorder %v515, %v275
        %vm1208 = vcmp.eq.s32.totalorder %v515, %v276
        %vm1209 = vcmp.eq.s32.totalorder %v515, %v277
        %vm1210 = vcmp.eq.s32.totalorder %v515, %v278
        %vm1211 = vcmp.eq.s32.totalorder %v521, %v275
        %vm1212 = vcmp.eq.s32.totalorder %v521, %v276
        %vm1213 = vcmp.eq.s32.totalorder %v521, %v277
        %vm1214 = vcmp.eq.s32.totalorder %v521, %v278
        %vm1215 = vcmp.eq.s32.totalorder %v527, %v275
        %vm1216 = vcmp.eq.s32.totalorder %v527, %v276
        %vm1217 = vcmp.eq.s32.totalorder %v527, %v277
        %vm1218 = vcmp.eq.s32.totalorder %v527, %v278
        %vm1219 = vcmp.eq.s32.totalorder %v533, %v275
        %vm1220 = vcmp.eq.s32.totalorder %v533, %v276
        %vm1221 = vcmp.eq.s32.totalorder %v533, %v277
        %vm1222 = vcmp.eq.s32.totalorder %v533, %v278
        %vm1223 = vcmp.eq.s32.totalorder %v539, %v275
        %vm1224 = vcmp.eq.s32.totalorder %v539, %v276
        %vm1225 = vcmp.eq.s32.totalorder %v539, %v277
        %vm1226 = vcmp.eq.s32.totalorder %v539, %v278
        %vm1227 = vcmp.eq.s32.totalorder %v545, %v275
        %vm1228 = vcmp.eq.s32.totalorder %v545, %v276
        %vm1229 = vcmp.eq.s32.totalorder %v545, %v277
        %vm1230 = vcmp.eq.s32.totalorder %v545, %v278
        %vm1231 = vcmp.eq.s32.totalorder %v551, %v275
        %vm1232 = vcmp.eq.s32.totalorder %v551, %v276
        %vm1233 = vcmp.eq.s32.totalorder %v551, %v277
        %vm1234 = vcmp.eq.s32.totalorder %v551, %v278
        %vm1235 = vcmp.eq.s32.totalorder %v557, %v275
        %vm1236 = vcmp.eq.s32.totalorder %v557, %v276
        %vm1237 = vcmp.eq.s32.totalorder %v557, %v277
        %vm1238 = vcmp.eq.s32.totalorder %v557, %v278
        %vm1239 = vcmp.eq.s32.totalorder %v563, %v275
        %vm1240 = vcmp.eq.s32.totalorder %v563, %v276
        %vm1241 = vcmp.eq.s32.totalorder %v563, %v277
        %vm1242 = vcmp.eq.s32.totalorder %v563, %v278
        %vm1243 = vcmp.eq.s32.totalorder %v569, %v275
        %vm1244 = vcmp.eq.s32.totalorder %v569, %v276
        %vm1245 = vcmp.eq.s32.totalorder %v569, %v277
        %vm1246 = vcmp.eq.s32.totalorder %v569, %v278
        %vm1247 = vcmp.eq.s32.totalorder %v576, %v275
        %vm1248 = vcmp.eq.s32.totalorder %v576, %v276
        %vm1249 = vcmp.eq.s32.totalorder %v576, %v277
        %vm1250 = vcmp.eq.s32.totalorder %v576, %v278
        %vm1251 = vcmp.eq.s32.totalorder %v582, %v275
        %vm1252 = vcmp.eq.s32.totalorder %v582, %v276
        %vm1253 = vcmp.eq.s32.totalorder %v582, %v277
        %vm1254 = vcmp.eq.s32.totalorder %v582, %v278
        %vm1255 = vcmp.eq.s32.totalorder %v588, %v275
        %vm1256 = vcmp.eq.s32.totalorder %v588, %v276
        %vm1257 = vcmp.eq.s32.totalorder %v588, %v277
        %vm1258 = vcmp.eq.s32.totalorder %v588, %v278
        %vm1259 = vcmp.eq.s32.totalorder %v594, %v275
        %vm1260 = vcmp.eq.s32.totalorder %v594, %v276
        %vm1261 = vcmp.eq.s32.totalorder %v594, %v277
        %vm1262 = vcmp.eq.s32.totalorder %v594, %v278
        %vm1263 = vcmp.eq.s32.totalorder %v600, %v275
        %vm1264 = vcmp.eq.s32.totalorder %v600, %v276
        %vm1265 = vcmp.eq.s32.totalorder %v600, %v277
        %vm1266 = vcmp.eq.s32.totalorder %v600, %v278
        %vm1267 = vcmp.eq.s32.totalorder %v606, %v275
        %vm1268 = vcmp.eq.s32.totalorder %v606, %v276
        %vm1269 = vcmp.eq.s32.totalorder %v606, %v277
        %vm1270 = vcmp.eq.s32.totalorder %v606, %v278
        %vm1271 = vcmp.eq.s32.totalorder %v612, %v275
        %vm1272 = vcmp.eq.s32.totalorder %v612, %v276
        %vm1273 = vcmp.eq.s32.totalorder %v612, %v277
        %vm1274 = vcmp.eq.s32.totalorder %v612, %v278
        %vm1275 = vcmp.eq.s32.totalorder %v618, %v275
        %vm1276 = vcmp.eq.s32.totalorder %v618, %v276
        %vm1277 = vcmp.eq.s32.totalorder %v618, %v277
        %vm1278 = vcmp.eq.s32.totalorder %v618, %v278
        %vm1279 = vcmp.eq.s32.totalorder %v624, %v275
        %vm1280 = vcmp.eq.s32.totalorder %v624, %v276
        %vm1281 = vcmp.eq.s32.totalorder %v624, %v277
        %vm1282 = vcmp.eq.s32.totalorder %v624, %v278
        %vm1283 = vcmp.eq.s32.totalorder %v630, %v275
        %vm1284 = vcmp.eq.s32.totalorder %v630, %v276
        %vm1285 = vcmp.eq.s32.totalorder %v630, %v277
        %vm1286 = vcmp.eq.s32.totalorder %v630, %v278
        %vm1287 = vcmp.eq.s32.totalorder %v636, %v275
        %vm1288 = vcmp.eq.s32.totalorder %v636, %v276
        %vm1289 = vcmp.eq.s32.totalorder %v636, %v277
        %vm1290 = vcmp.eq.s32.totalorder %v636, %v278
        %vm1291 = vcmp.eq.s32.totalorder %v642, %v275
        %vm1292 = vcmp.eq.s32.totalorder %v642, %v276
        %vm1293 = vcmp.eq.s32.totalorder %v642, %v277
        %vm1294 = vcmp.eq.s32.totalorder %v642, %v278
        %vm1295 = vcmp.eq.s32.totalorder %v648, %v275
        %vm1296 = vcmp.eq.s32.totalorder %v648, %v276
        %vm1297 = vcmp.eq.s32.totalorder %v648, %v277
        %vm1298 = vcmp.eq.s32.totalorder %v648, %v278
        %vm1299 = vcmp.eq.s32.totalorder %v654, %v275
        %vm1300 = vcmp.eq.s32.totalorder %v654, %v276
        %vm1301 = vcmp.eq.s32.totalorder %v654, %v277
        %vm1302 = vcmp.eq.s32.totalorder %v654, %v278
        %vm1303 = vcmp.eq.s32.totalorder %v660, %v275
        %vm1304 = vcmp.eq.s32.totalorder %v660, %v276
        %vm1305 = vcmp.eq.s32.totalorder %v660, %v277
        %vm1306 = vcmp.eq.s32.totalorder %v660, %v278
        %vm1307 = vcmp.eq.s32.totalorder %v666, %v275
        %vm1308 = vcmp.eq.s32.totalorder %v666, %v276
        %vm1309 = vcmp.eq.s32.totalorder %v666, %v277
        %vm1310 = vcmp.eq.s32.totalorder %v666, %v278
        %vm1311 = vcmp.eq.s32.totalorder %v673, %v275
        %vm1312 = vcmp.eq.s32.totalorder %v673, %v276
        %vm1313 = vcmp.eq.s32.totalorder %v673, %v277
        %vm1314 = vcmp.eq.s32.totalorder %v673, %v278
        %vm1315 = vcmp.eq.s32.totalorder %v679, %v275
        %vm1316 = vcmp.eq.s32.totalorder %v679, %v276
        %vm1317 = vcmp.eq.s32.totalorder %v679, %v277
        %vm1318 = vcmp.eq.s32.totalorder %v679, %v278
        %vm1319 = vcmp.eq.s32.totalorder %v685, %v275
        %vm1320 = vcmp.eq.s32.totalorder %v685, %v276
        %vm1321 = vcmp.eq.s32.totalorder %v685, %v277
        %vm1322 = vcmp.eq.s32.totalorder %v685, %v278
        %vm1323 = vcmp.eq.s32.totalorder %v691, %v275
        %vm1324 = vcmp.eq.s32.totalorder %v691, %v276
        %vm1325 = vcmp.eq.s32.totalorder %v691, %v277
        %vm1326 = vcmp.eq.s32.totalorder %v691, %v278
        %vm1327 = vcmp.eq.s32.totalorder %v697, %v275
        %vm1328 = vcmp.eq.s32.totalorder %v697, %v276
        %vm1329 = vcmp.eq.s32.totalorder %v697, %v277
        %vm1330 = vcmp.eq.s32.totalorder %v697, %v278
        %vm1331 = vcmp.eq.s32.totalorder %v703, %v275
        %vm1332 = vcmp.eq.s32.totalorder %v703, %v276
        %vm1333 = vcmp.eq.s32.totalorder %v703, %v277
        %vm1334 = vcmp.eq.s32.totalorder %v703, %v278
        %vm1335 = vcmp.eq.s32.totalorder %v709, %v275
        %vm1336 = vcmp.eq.s32.totalorder %v709, %v276
        %vm1337 = vcmp.eq.s32.totalorder %v709, %v277
        %vm1338 = vcmp.eq.s32.totalorder %v709, %v278
        %vm1339 = vcmp.eq.s32.totalorder %v715, %v275
        %vm1340 = vcmp.eq.s32.totalorder %v715, %v276
        %vm1341 = vcmp.eq.s32.totalorder %v715, %v277
        %vm1342 = vcmp.eq.s32.totalorder %v715, %v278
        %vm1343 = vcmp.eq.s32.totalorder %v721, %v275
        %vm1344 = vcmp.eq.s32.totalorder %v721, %v276
        %vm1345 = vcmp.eq.s32.totalorder %v721, %v277
        %vm1346 = vcmp.eq.s32.totalorder %v721, %v278
        %vm1347 = vcmp.eq.s32.totalorder %v727, %v275
        %vm1348 = vcmp.eq.s32.totalorder %v727, %v276
        %vm1349 = vcmp.eq.s32.totalorder %v727, %v277
        %vm1350 = vcmp.eq.s32.totalorder %v727, %v278
        %vm1351 = vcmp.eq.s32.totalorder %v733, %v275
        %vm1352 = vcmp.eq.s32.totalorder %v733, %v276
        %vm1353 = vcmp.eq.s32.totalorder %v733, %v277
        %vm1354 = vcmp.eq.s32.totalorder %v733, %v278
        %vm1355 = vcmp.eq.s32.totalorder %v739, %v275
        %vm1356 = vcmp.eq.s32.totalorder %v739, %v276
        %vm1357 = vcmp.eq.s32.totalorder %v739, %v277
        %vm1358 = vcmp.eq.s32.totalorder %v739, %v278
        %vm1359 = vcmp.eq.s32.totalorder %v745, %v275
        %vm1360 = vcmp.eq.s32.totalorder %v745, %v276
        %vm1361 = vcmp.eq.s32.totalorder %v745, %v277
        %vm1362 = vcmp.eq.s32.totalorder %v745, %v278
        %vm1363 = vcmp.eq.s32.totalorder %v751, %v275
        %vm1364 = vcmp.eq.s32.totalorder %v751, %v276
        %vm1365 = vcmp.eq.s32.totalorder %v751, %v277
        %vm1366 = vcmp.eq.s32.totalorder %v751, %v278
        %vm1367 = vcmp.eq.s32.totalorder %v757, %v275
        %vm1368 = vcmp.eq.s32.totalorder %v757, %v276
        %vm1369 = vcmp.eq.s32.totalorder %v757, %v277
        %vm1370 = vcmp.eq.s32.totalorder %v757, %v278
        %vm1371 = vcmp.eq.s32.totalorder %v763, %v275
        %vm1372 = vcmp.eq.s32.totalorder %v763, %v276
        %vm1373 = vcmp.eq.s32.totalorder %v763, %v277
        %vm1374 = vcmp.eq.s32.totalorder %v763, %v278
        %vm1375 = vcmp.eq.s32.totalorder %v770, %v275
        %vm1376 = vcmp.eq.s32.totalorder %v770, %v276
        %vm1377 = vcmp.eq.s32.totalorder %v770, %v277
        %vm1378 = vcmp.eq.s32.totalorder %v770, %v278
        %vm1379 = vcmp.eq.s32.totalorder %v776, %v275
        %vm1380 = vcmp.eq.s32.totalorder %v776, %v276
        %vm1381 = vcmp.eq.s32.totalorder %v776, %v277
        %vm1382 = vcmp.eq.s32.totalorder %v776, %v278
        %vm1383 = vcmp.eq.s32.totalorder %v782, %v275
        %vm1384 = vcmp.eq.s32.totalorder %v782, %v276
        %vm1385 = vcmp.eq.s32.totalorder %v782, %v277
        %vm1386 = vcmp.eq.s32.totalorder %v782, %v278
        %vm1387 = vcmp.eq.s32.totalorder %v788, %v275
        %vm1388 = vcmp.eq.s32.totalorder %v788, %v276
        %vm1389 = vcmp.eq.s32.totalorder %v788, %v277
        %vm1390 = vcmp.eq.s32.totalorder %v788, %v278
        %vm1391 = vcmp.eq.s32.totalorder %v794, %v275
        %vm1392 = vcmp.eq.s32.totalorder %v794, %v276
        %vm1393 = vcmp.eq.s32.totalorder %v794, %v277
        %vm1394 = vcmp.eq.s32.totalorder %v794, %v278
        %vm1395 = vcmp.eq.s32.totalorder %v800, %v275
        %vm1396 = vcmp.eq.s32.totalorder %v800, %v276
        %vm1397 = vcmp.eq.s32.totalorder %v800, %v277
        %vm1398 = vcmp.eq.s32.totalorder %v800, %v278
        %vm1399 = vcmp.eq.s32.totalorder %v806, %v275
        %vm1400 = vcmp.eq.s32.totalorder %v806, %v276
        %vm1401 = vcmp.eq.s32.totalorder %v806, %v277
        %vm1402 = vcmp.eq.s32.totalorder %v806, %v278
        %vm1403 = vcmp.eq.s32.totalorder %v812, %v275
        %vm1404 = vcmp.eq.s32.totalorder %v812, %v276
        %vm1405 = vcmp.eq.s32.totalorder %v812, %v277
        %vm1406 = vcmp.eq.s32.totalorder %v812, %v278
        %vm1407 = vcmp.eq.s32.totalorder %v818, %v275
        %vm1408 = vcmp.eq.s32.totalorder %v818, %v276
        %vm1409 = vcmp.eq.s32.totalorder %v818, %v277
        %vm1410 = vcmp.eq.s32.totalorder %v818, %v278
        %vm1411 = vcmp.eq.s32.totalorder %v824, %v275
        %vm1412 = vcmp.eq.s32.totalorder %v824, %v276
        %vm1413 = vcmp.eq.s32.totalorder %v824, %v277
        %vm1414 = vcmp.eq.s32.totalorder %v824, %v278
        %vm1415 = vcmp.eq.s32.totalorder %v830, %v275
        %vm1416 = vcmp.eq.s32.totalorder %v830, %v276
        %vm1417 = vcmp.eq.s32.totalorder %v830, %v277
        %vm1418 = vcmp.eq.s32.totalorder %v830, %v278
        %vm1419 = vcmp.eq.s32.totalorder %v836, %v275
        %vm1420 = vcmp.eq.s32.totalorder %v836, %v276
        %vm1421 = vcmp.eq.s32.totalorder %v836, %v277
        %vm1422 = vcmp.eq.s32.totalorder %v836, %v278
        %vm1423 = vcmp.eq.s32.totalorder %v842, %v275
        %vm1424 = vcmp.eq.s32.totalorder %v842, %v276
        %vm1425 = vcmp.eq.s32.totalorder %v842, %v277
        %vm1426 = vcmp.eq.s32.totalorder %v842, %v278
        %vm1427 = vcmp.eq.s32.totalorder %v848, %v275
        %vm1428 = vcmp.eq.s32.totalorder %v848, %v276
        %vm1429 = vcmp.eq.s32.totalorder %v848, %v277
        %vm1430 = vcmp.eq.s32.totalorder %v848, %v278
        %vm1431 = vcmp.eq.s32.totalorder %v854, %v275
        %vm1432 = vcmp.eq.s32.totalorder %v854, %v276
        %vm1433 = vcmp.eq.s32.totalorder %v854, %v277
        %vm1434 = vcmp.eq.s32.totalorder %v854, %v278
        %vm1435 = vcmp.eq.s32.totalorder %v860, %v275
        %vm1436 = vcmp.eq.s32.totalorder %v860, %v276
        %vm1437 = vcmp.eq.s32.totalorder %v860, %v277
        %vm1438 = vcmp.eq.s32.totalorder %v860, %v278
        %vm1439 = vcmp.eq.s32.totalorder %v867, %v275
        %vm1440 = vcmp.eq.s32.totalorder %v867, %v276
        %vm1441 = vcmp.eq.s32.totalorder %v867, %v277
        %vm1442 = vcmp.eq.s32.totalorder %v867, %v278
        %vm1443 = vcmp.eq.s32.totalorder %v873, %v275
        %vm1444 = vcmp.eq.s32.totalorder %v873, %v276
        %vm1445 = vcmp.eq.s32.totalorder %v873, %v277
        %vm1446 = vcmp.eq.s32.totalorder %v873, %v278
        %vm1447 = vcmp.eq.s32.totalorder %v879, %v275
        %vm1448 = vcmp.eq.s32.totalorder %v879, %v276
        %vm1449 = vcmp.eq.s32.totalorder %v879, %v277
        %vm1450 = vcmp.eq.s32.totalorder %v879, %v278
        %vm1451 = vcmp.eq.s32.totalorder %v885, %v275
        %vm1452 = vcmp.eq.s32.totalorder %v885, %v276
        %vm1453 = vcmp.eq.s32.totalorder %v885, %v277
        %vm1454 = vcmp.eq.s32.totalorder %v885, %v278
        %vm1455 = vcmp.eq.s32.totalorder %v891, %v275
        %vm1456 = vcmp.eq.s32.totalorder %v891, %v276
        %vm1457 = vcmp.eq.s32.totalorder %v891, %v277
        %vm1458 = vcmp.eq.s32.totalorder %v891, %v278
        %vm1459 = vcmp.eq.s32.totalorder %v897, %v275
        %vm1460 = vcmp.eq.s32.totalorder %v897, %v276
        %vm1461 = vcmp.eq.s32.totalorder %v897, %v277
        %vm1462 = vcmp.eq.s32.totalorder %v897, %v278
        %vm1463 = vcmp.eq.s32.totalorder %v903, %v275
        %vm1464 = vcmp.eq.s32.totalorder %v903, %v276
        %vm1465 = vcmp.eq.s32.totalorder %v903, %v277
        %vm1466 = vcmp.eq.s32.totalorder %v903, %v278
        %vm1467 = vcmp.eq.s32.totalorder %v909, %v275
        %vm1468 = vcmp.eq.s32.totalorder %v909, %v276
        %vm1469 = vcmp.eq.s32.totalorder %v909, %v277
        %vm1470 = vcmp.eq.s32.totalorder %v909, %v278
        %vm1471 = vcmp.eq.s32.totalorder %v915, %v275
        %vm1472 = vcmp.eq.s32.totalorder %v915, %v276
        %vm1473 = vcmp.eq.s32.totalorder %v915, %v277
        %vm1474 = vcmp.eq.s32.totalorder %v915, %v278
        %vm1475 = vcmp.eq.s32.totalorder %v921, %v275
        %vm1476 = vcmp.eq.s32.totalorder %v921, %v276
        %vm1477 = vcmp.eq.s32.totalorder %v921, %v277
        %vm1478 = vcmp.eq.s32.totalorder %v921, %v278
        %vm1479 = vcmp.eq.s32.totalorder %v927, %v275
        %vm1480 = vcmp.eq.s32.totalorder %v927, %v276
        %vm1481 = vcmp.eq.s32.totalorder %v927, %v277
        %vm1482 = vcmp.eq.s32.totalorder %v927, %v278
        %vm1483 = vcmp.eq.s32.totalorder %v933, %v275
        %vm1484 = vcmp.eq.s32.totalorder %v933, %v276
        %vm1485 = vcmp.eq.s32.totalorder %v933, %v277
        %vm1486 = vcmp.eq.s32.totalorder %v933, %v278
        %vm1487 = vcmp.eq.s32.totalorder %v939, %v275
        %vm1488 = vcmp.eq.s32.totalorder %v939, %v276
        %vm1489 = vcmp.eq.s32.totalorder %v939, %v277
        %vm1490 = vcmp.eq.s32.totalorder %v939, %v278
        %vm1491 = vcmp.eq.s32.totalorder %v945, %v275
        %vm1492 = vcmp.eq.s32.totalorder %v945, %v276
        %vm1493 = vcmp.eq.s32.totalorder %v945, %v277
        %vm1494 = vcmp.eq.s32.totalorder %v945, %v278
        %vm1495 = vcmp.eq.s32.totalorder %v951, %v275
        %vm1496 = vcmp.eq.s32.totalorder %v951, %v276
        %vm1497 = vcmp.eq.s32.totalorder %v951, %v277
        %vm1498 = vcmp.eq.s32.totalorder %v951, %v278
        %vm1499 = vcmp.eq.s32.totalorder %v957, %v275
        %vm1500 = vcmp.eq.s32.totalorder %v957, %v276
        %vm1501 = vcmp.eq.s32.totalorder %v957, %v277
        %vm1502 = vcmp.eq.s32.totalorder %v957, %v278
        %vm1503 = vcmp.eq.s32.totalorder %v964, %v275
        %vm1504 = vcmp.eq.s32.totalorder %v964, %v276
        %vm1505 = vcmp.eq.s32.totalorder %v964, %v277
        %vm1506 = vcmp.eq.s32.totalorder %v964, %v278
        %vm1507 = vcmp.eq.s32.totalorder %v970, %v275
        %vm1508 = vcmp.eq.s32.totalorder %v970, %v276
        %vm1509 = vcmp.eq.s32.totalorder %v970, %v277
        %vm1510 = vcmp.eq.s32.totalorder %v970, %v278
        %vm1511 = vcmp.eq.s32.totalorder %v976, %v275
        %vm1512 = vcmp.eq.s32.totalorder %v976, %v276
        %vm1513 = vcmp.eq.s32.totalorder %v976, %v277
        %vm1514 = vcmp.eq.s32.totalorder %v976, %v278
        %vm1515 = vcmp.eq.s32.totalorder %v982, %v275
        %vm1516 = vcmp.eq.s32.totalorder %v982, %v276
        %vm1517 = vcmp.eq.s32.totalorder %v982, %v277
        %vm1518 = vcmp.eq.s32.totalorder %v982, %v278
        %vm1519 = vcmp.eq.s32.totalorder %v988, %v275
        %vm1520 = vcmp.eq.s32.totalorder %v988, %v276
        %vm1521 = vcmp.eq.s32.totalorder %v988, %v277
        %vm1522 = vcmp.eq.s32.totalorder %v988, %v278
        %vm1523 = vcmp.eq.s32.totalorder %v994, %v275
        %vm1524 = vcmp.eq.s32.totalorder %v994, %v276
        %vm1525 = vcmp.eq.s32.totalorder %v994, %v277
        %vm1526 = vcmp.eq.s32.totalorder %v994, %v278
        %vm1527 = vcmp.eq.s32.totalorder %v1000, %v275
        %vm1528 = vcmp.eq.s32.totalorder %v1000, %v276
        %vm1529 = vcmp.eq.s32.totalorder %v1000, %v277
        %vm1530 = vcmp.eq.s32.totalorder %v1000, %v278
        %vm1531 = vcmp.eq.s32.totalorder %v1006, %v275
        %vm1532 = vcmp.eq.s32.totalorder %v1006, %v276
        %vm1533 = vcmp.eq.s32.totalorder %v1006, %v277
        %vm1534 = vcmp.eq.s32.totalorder %v1006, %v278
        %vm1535 = vcmp.eq.s32.totalorder %v1012, %v275
        %vm1536 = vcmp.eq.s32.totalorder %v1012, %v276
        %vm1537 = vcmp.eq.s32.totalorder %v1012, %v277
        %vm1538 = vcmp.eq.s32.totalorder %v1012, %v278
        %vm1539 = vcmp.eq.s32.totalorder %v1018, %v275
        %vm1540 = vcmp.eq.s32.totalorder %v1018, %v276
        %vm1541 = vcmp.eq.s32.totalorder %v1018, %v277
        %vm1542 = vcmp.eq.s32.totalorder %v1018, %v278
        %vm1543 = vcmp.eq.s32.totalorder %v1024, %v275
        %vm1544 = vcmp.eq.s32.totalorder %v1024, %v276
        %vm1545 = vcmp.eq.s32.totalorder %v1024, %v277
        %vm1546 = vcmp.eq.s32.totalorder %v1024, %v278
        %vm1547 = vcmp.eq.s32.totalorder %v1030, %v275
        %vm1548 = vcmp.eq.s32.totalorder %v1030, %v276
        %vm1549 = vcmp.eq.s32.totalorder %v1030, %v277
        %vm1550 = vcmp.eq.s32.totalorder %v1030, %v278
        %vm1551 = vcmp.eq.s32.totalorder %v1036, %v275
        %vm1552 = vcmp.eq.s32.totalorder %v1036, %v276
        %vm1553 = vcmp.eq.s32.totalorder %v1036, %v277
        %vm1554 = vcmp.eq.s32.totalorder %v1036, %v278
        %vm1555 = vcmp.eq.s32.totalorder %v1042, %v275
        %vm1556 = vcmp.eq.s32.totalorder %v1042, %v276
        %vm1557 = vcmp.eq.s32.totalorder %v1042, %v277
        %vm1558 = vcmp.eq.s32.totalorder %v1042, %v278
        %vm1559 = vcmp.eq.s32.totalorder %v1048, %v275
        %vm1560 = vcmp.eq.s32.totalorder %v1048, %v276
        %vm1561 = vcmp.eq.s32.totalorder %v1048, %v277
        %vm1562 = vcmp.eq.s32.totalorder %v1048, %v278
        %vm1563 = vcmp.eq.s32.totalorder %v1054, %v275
        %vm1564 = vcmp.eq.s32.totalorder %v1054, %v276
        %vm1565 = vcmp.eq.s32.totalorder %v1054, %v277
        %vm1566 = vcmp.eq.s32.totalorder %v1054, %v278
        %v1567 = vsel %vm1055, 1, 0
        %v1568 = vsel %vm1056, 1, 0
        %v1569 = vsel %vm1057, 1, 0
        %v1570 = vsel %vm1058, 1, 0
        %v1571 = vsel %vm1059, 1, 0
        %v1572 = vsel %vm1060, 1, 0
        %v1573 = vsel %vm1061, 1, 0
        %v1574 = vsel %vm1062, 1, 0
        %v1575 = vsel %vm1063, 1, 0
        %v1576 = vsel %vm1064, 1, 0
        %v1577 = vsel %vm1065, 1, 0
        %v1578 = vsel %vm1066, 1, 0
        %v1579 = vsel %vm1067, 1, 0
        %v1580 = vsel %vm1068, 1, 0
        %v1581 = vsel %vm1069, 1, 0
        %v1582 = vsel %vm1070, 1, 0
        %v1583 = vsel %vm1071, 1, 0
        %v1584 = vsel %vm1072, 1, 0
        %v1585 = vsel %vm1073, 1, 0
        %v1586 = vsel %vm1074, 1, 0
        %v1587 = vsel %vm1075, 1, 0
        %v1588 = vsel %vm1076, 1, 0
        %v1589 = vsel %vm1077, 1, 0
        %v1590 = vsel %vm1078, 1, 0
        %v1591 = vsel %vm1079, 1, 0
        %v1592 = vsel %vm1080, 1, 0
        %v1593 = vsel %vm1081, 1, 0
        %v1594 = vsel %vm1082, 1, 0
        %v1595 = vsel %vm1083, 1, 0
        %v1596 = vsel %vm1084, 1, 0
        %v1597 = vsel %vm1085, 1, 0
        %v1598 = vsel %vm1086, 1, 0
        %v1599 = vsel %vm1087, 1, 0
        %v1600 = vsel %vm1088, 1, 0
        %v1601 = vsel %vm1089, 1, 0
        %v1602 = vsel %vm1090, 1, 0
        %v1603 = vsel %vm1091, 1, 0
        %v1604 = vsel %vm1092, 1, 0
        %v1605 = vsel %vm1093, 1, 0
        %v1606 = vsel %vm1094, 1, 0
        %v1607 = vsel %vm1095, 1, 0
        %v1608 = vsel %vm1096, 1, 0
        %v1609 = vsel %vm1097, 1, 0
        %v1610 = vsel %vm1098, 1, 0
        %v1611 = vsel %vm1099, 1, 0
        %v1612 = vsel %vm1100, 1, 0
        %v1613 = vsel %vm1101, 1, 0
        %v1614 = vsel %vm1102, 1, 0
        %v1615 = vsel %vm1103, 1, 0
        %v1616 = vsel %vm1104, 1, 0
        %v1617 = vsel %vm1105, 1, 0
        %v1618 = vsel %vm1106, 1, 0
        %v1619 = vsel %vm1107, 1, 0
        %v1620 = vsel %vm1108, 1, 0
        %v1621 = vsel %vm1109, 1, 0
        %v1622 = vsel %vm1110, 1, 0
        %v1623 = vsel %vm1111, 1, 0
        %v1624 = vsel %vm1112, 1, 0
        %v1625 = vsel %vm1113, 1, 0
        %v1626 = vsel %vm1114, 1, 0
        %v1627 = vsel %vm1115, 1, 0
        %v1628 = vsel %vm1116, 1, 0
        %v1629 = vsel %vm1117, 1, 0
        %v1630 = vsel %vm1118, 1, 0
        %v1631 = vsel %vm1119, 1, 0
        %v1632 = vsel %vm1120, 1, 0
        %v1633 = vsel %vm1121, 1, 0
        %v1634 = vsel %vm1122, 1, 0
        %v1635 = vsel %vm1123, 1, 0
        %v1636 = vsel %vm1124, 1, 0
        %v1637 = vsel %vm1125, 1, 0
        %v1638 = vsel %vm1126, 1, 0
        %v1639 = vsel %vm1127, 1, 0
        %v1640 = vsel %vm1128, 1, 0
        %v1641 = vsel %vm1129, 1, 0
        %v1642 = vsel %vm1130, 1, 0
        %v1643 = vsel %vm1131, 1, 0
        %v1644 = vsel %vm1132, 1, 0
        %v1645 = vsel %vm1133, 1, 0
        %v1646 = vsel %vm1134, 1, 0
        %v1647 = vsel %vm1135, 1, 0
        %v1648 = vsel %vm1136, 1, 0
        %v1649 = vsel %vm1137, 1, 0
        %v1650 = vsel %vm1138, 1, 0
        %v1651 = vsel %vm1139, 1, 0
        %v1652 = vsel %vm1140, 1, 0
        %v1653 = vsel %vm1141, 1, 0
        %v1654 = vsel %vm1142, 1, 0
        %v1655 = vsel %vm1143, 1, 0
        %v1656 = vsel %vm1144, 1, 0
        %v1657 = vsel %vm1145, 1, 0
        %v1658 = vsel %vm1146, 1, 0
        %v1659 = vsel %vm1147, 1, 0
        %v1660 = vsel %vm1148, 1, 0
        %v1661 = vsel %vm1149, 1, 0
        %v1662 = vsel %vm1150, 1, 0
        %v1663 = vsel %vm1151, 1, 0
        %v1664 = vsel %vm1152, 1, 0
        %v1665 = vsel %vm1153, 1, 0
        %v1666 = vsel %vm1154, 1, 0
        %v1667 = vsel %vm1155, 1, 0
        %v1668 = vsel %vm1156, 1, 0
        %v1669 = vsel %vm1157, 1, 0
        %v1670 = vsel %vm1158, 1, 0
        %v1671 = vsel %vm1159, 1, 0
        %v1672 = vsel %vm1160, 1, 0
        %v1673 = vsel %vm1161, 1, 0
        %v1674 = vsel %vm1162, 1, 0
        %v1675 = vsel %vm1163, 1, 0
        %v1676 = vsel %vm1164, 1, 0
        %v1677 = vsel %vm1165, 1, 0
        %v1678 = vsel %vm1166, 1, 0
        %v1679 = vsel %vm1167, 1, 0
        %v1680 = vsel %vm1168, 1, 0
        %v1681 = vsel %vm1169, 1, 0
        %v1682 = vsel %vm1170, 1, 0
        %v1683 = vsel %vm1171, 1, 0
        %v1684 = vsel %vm1172, 1, 0
        %v1685 = vsel %vm1173, 1, 0
        %v1686 = vsel %vm1174, 1, 0
        %v1687 = vsel %vm1175, 1, 0
        %v1688 = vsel %vm1176, 1, 0
        %v1689 = vsel %vm1177, 1, 0
        %v1690 = vsel %vm1178, 1, 0
        %v1691 = vsel %vm1179, 1, 0
        %v1692 = vsel %vm1180, 1, 0
        %v1693 = vsel %vm1181, 1, 0
        %v1694 = vsel %vm1182, 1, 0
        %v1695 = vsel %vm1183, 1, 0
        %v1696 = vsel %vm1184, 1, 0
        %v1697 = vsel %vm1185, 1, 0
        %v1698 = vsel %vm1186, 1, 0
        %v1699 = vsel %vm1187, 1, 0
        %v1700 = vsel %vm1188, 1, 0
        %v1701 = vsel %vm1189, 1, 0
        %v1702 = vsel %vm1190, 1, 0
        %v1703 = vsel %vm1191, 1, 0
        %v1704 = vsel %vm1192, 1, 0
        %v1705 = vsel %vm1193, 1, 0
        %v1706 = vsel %vm1194, 1, 0
        %v1707 = vsel %vm1195, 1, 0
        %v1708 = vsel %vm1196, 1, 0
        %v1709 = vsel %vm1197, 1, 0
        %v1710 = vsel %vm1198, 1, 0
        %v1711 = vsel %vm1199, 1, 0
        %v1712 = vsel %vm1200, 1, 0
        %v1713 = vsel %vm1201, 1, 0
        %v1714 = vsel %vm1202, 1, 0
        %v1715 = vsel %vm1203, 1, 0
        %v1716 = vsel %vm1204, 1, 0
        %v1717 = vsel %vm1205, 1, 0
        %v1718 = vsel %vm1206, 1, 0
        %v1719 = vsel %vm1207, 1, 0
        %v1720 = vsel %vm1208, 1, 0
        %v1721 = vsel %vm1209, 1, 0
        %v1722 = vsel %vm1210, 1, 0
        %v1723 = vsel %vm1211, 1, 0
        %v1724 = vsel %vm1212, 1, 0
        %v1725 = vsel %vm1213, 1, 0
        %v1726 = vsel %vm1214, 1, 0
        %v1727 = vsel %vm1215, 1, 0
        %v1728 = vsel %vm1216, 1, 0
        %v1729 = vsel %vm1217, 1, 0
        %v1730 = vsel %vm1218, 1, 0
        %v1731 = vsel %vm1219, 1, 0
        %v1732 = vsel %vm1220, 1, 0
        %v1733 = vsel %vm1221, 1, 0
        %v1734 = vsel %vm1222, 1, 0
        %v1735 = vsel %vm1223, 1, 0
        %v1736 = vsel %vm1224, 1, 0
        %v1737 = vsel %vm1225, 1, 0
        %v1738 = vsel %vm1226, 1, 0
        %v1739 = vsel %vm1227, 1, 0
        %v1740 = vsel %vm1228, 1, 0
        %v1741 = vsel %vm1229, 1, 0
        %v1742 = vsel %vm1230, 1, 0
        %v1743 = vsel %vm1231, 1, 0
        %v1744 = vsel %vm1232, 1, 0
        %v1745 = vsel %vm1233, 1, 0
        %v1746 = vsel %vm1234, 1, 0
        %v1747 = vsel %vm1235, 1, 0
        %v1748 = vsel %vm1236, 1, 0
        %v1749 = vsel %vm1237, 1, 0
        %v1750 = vsel %vm1238, 1, 0
        %v1751 = vsel %vm1239, 1, 0
        %v1752 = vsel %vm1240, 1, 0
        %v1753 = vsel %vm1241, 1, 0
        %v1754 = vsel %vm1242, 1, 0
        %v1755 = vsel %vm1243, 1, 0
        %v1756 = vsel %vm1244, 1, 0
        %v1757 = vsel %vm1245, 1, 0
        %v1758 = vsel %vm1246, 1, 0
        %v1759 = vsel %vm1247, 1, 0
        %v1760 = vsel %vm1248, 1, 0
        %v1761 = vsel %vm1249, 1, 0
        %v1762 = vsel %vm1250, 1, 0
        %v1763 = vsel %vm1251, 1, 0
        %v1764 = vsel %vm1252, 1, 0
        %v1765 = vsel %vm1253, 1, 0
        %v1766 = vsel %vm1254, 1, 0
        %v1767 = vsel %vm1255, 1, 0
        %v1768 = vsel %vm1256, 1, 0
        %v1769 = vsel %vm1257, 1, 0
        %v1770 = vsel %vm1258, 1, 0
        %v1771 = vsel %vm1259, 1, 0
        %v1772 = vsel %vm1260, 1, 0
        %v1773 = vsel %vm1261, 1, 0
        %v1774 = vsel %vm1262, 1, 0
        %v1775 = vsel %vm1263, 1, 0
        %v1776 = vsel %vm1264, 1, 0
        %v1777 = vsel %vm1265, 1, 0
        %v1778 = vsel %vm1266, 1, 0
        %v1779 = vsel %vm1267, 1, 0
        %v1780 = vsel %vm1268, 1, 0
        %v1781 = vsel %vm1269, 1, 0
        %v1782 = vsel %vm1270, 1, 0
        %v1783 = vsel %vm1271, 1, 0
        %v1784 = vsel %vm1272, 1, 0
        %v1785 = vsel %vm1273, 1, 0
        %v1786 = vsel %vm1274, 1, 0
        %v1787 = vsel %vm1275, 1, 0
        %v1788 = vsel %vm1276, 1, 0
        %v1789 = vsel %vm1277, 1, 0
        %v1790 = vsel %vm1278, 1, 0
        %v1791 = vsel %vm1279, 1, 0
        %v1792 = vsel %vm1280, 1, 0
        %v1793 = vsel %vm1281, 1, 0
        %v1794 = vsel %vm1282, 1, 0
        %v1795 = vsel %vm1283, 1, 0
        %v1796 = vsel %vm1284, 1, 0
        %v1797 = vsel %vm1285, 1, 0
        %v1798 = vsel %vm1286, 1, 0
        %v1799 = vsel %vm1287, 1, 0
        %v1800 = vsel %vm1288, 1, 0
        %v1801 = vsel %vm1289, 1, 0
        %v1802 = vsel %vm1290, 1, 0
        %v1803 = vsel %vm1291, 1, 0
        %v1804 = vsel %vm1292, 1, 0
        %v1805 = vsel %vm1293, 1, 0
        %v1806 = vsel %vm1294, 1, 0
        %v1807 = vsel %vm1295, 1, 0
        %v1808 = vsel %vm1296, 1, 0
        %v1809 = vsel %vm1297, 1, 0
        %v1810 = vsel %vm1298, 1, 0
        %v1811 = vsel %vm1299, 1, 0
        %v1812 = vsel %vm1300, 1, 0
        %v1813 = vsel %vm1301, 1, 0
        %v1814 = vsel %vm1302, 1, 0
        %v1815 = vsel %vm1303, 1, 0
        %v1816 = vsel %vm1304, 1, 0
        %v1817 = vsel %vm1305, 1, 0
        %v1818 = vsel %vm1306, 1, 0
        %v1819 = vsel %vm1307, 1, 0
        %v1820 = vsel %vm1308, 1, 0
        %v1821 = vsel %vm1309, 1, 0
        %v1822 = vsel %vm1310, 1, 0
        %v1823 = vsel %vm1311, 1, 0
        %v1824 = vsel %vm1312, 1, 0
        %v1825 = vsel %vm1313, 1, 0
        %v1826 = vsel %vm1314, 1, 0
        %v1827 = vsel %vm1315, 1, 0
        %v1828 = vsel %vm1316, 1, 0
        %v1829 = vsel %vm1317, 1, 0
        %v1830 = vsel %vm1318, 1, 0
        %v1831 = vsel %vm1319, 1, 0
        %v1832 = vsel %vm1320, 1, 0
        %v1833 = vsel %vm1321, 1, 0
        %v1834 = vsel %vm1322, 1, 0
        %v1835 = vsel %vm1323, 1, 0
        %v1836 = vsel %vm1324, 1, 0
        %v1837 = vsel %vm1325, 1, 0
        %v1838 = vsel %vm1326, 1, 0
        %v1839 = vsel %vm1327, 1, 0
        %v1840 = vsel %vm1328, 1, 0
        %v1841 = vsel %vm1329, 1, 0
        %v1842 = vsel %vm1330, 1, 0
        %v1843 = vsel %vm1331, 1, 0
        %v1844 = vsel %vm1332, 1, 0
        %v1845 = vsel %vm1333, 1, 0
        %v1846 = vsel %vm1334, 1, 0
        %v1847 = vsel %vm1335, 1, 0
        %v1848 = vsel %vm1336, 1, 0
        %v1849 = vsel %vm1337, 1, 0
        %v1850 = vsel %vm1338, 1, 0
        %v1851 = vsel %vm1339, 1, 0
        %v1852 = vsel %vm1340, 1, 0
        %v1853 = vsel %vm1341, 1, 0
        %v1854 = vsel %vm1342, 1, 0
        %v1855 = vsel %vm1343, 1, 0
        %v1856 = vsel %vm1344, 1, 0
        %v1857 = vsel %vm1345, 1, 0
        %v1858 = vsel %vm1346, 1, 0
        %v1859 = vsel %vm1347, 1, 0
        %v1860 = vsel %vm1348, 1, 0
        %v1861 = vsel %vm1349, 1, 0
        %v1862 = vsel %vm1350, 1, 0
        %v1863 = vsel %vm1351, 1, 0
        %v1864 = vsel %vm1352, 1, 0
        %v1865 = vsel %vm1353, 1, 0
        %v1866 = vsel %vm1354, 1, 0
        %v1867 = vsel %vm1355, 1, 0
        %v1868 = vsel %vm1356, 1, 0
        %v1869 = vsel %vm1357, 1, 0
        %v1870 = vsel %vm1358, 1, 0
        %v1871 = vsel %vm1359, 1, 0
        %v1872 = vsel %vm1360, 1, 0
        %v1873 = vsel %vm1361, 1, 0
        %v1874 = vsel %vm1362, 1, 0
        %v1875 = vsel %vm1363, 1, 0
        %v1876 = vsel %vm1364, 1, 0
        %v1877 = vsel %vm1365, 1, 0
        %v1878 = vsel %vm1366, 1, 0
        %v1879 = vsel %vm1367, 1, 0
        %v1880 = vsel %vm1368, 1, 0
        %v1881 = vsel %vm1369, 1, 0
        %v1882 = vsel %vm1370, 1, 0
        %v1883 = vsel %vm1371, 1, 0
        %v1884 = vsel %vm1372, 1, 0
        %v1885 = vsel %vm1373, 1, 0
        %v1886 = vsel %vm1374, 1, 0
        %v1887 = vsel %vm1375, 1, 0
        %v1888 = vsel %vm1376, 1, 0
        %v1889 = vsel %vm1377, 1, 0
        %v1890 = vsel %vm1378, 1, 0
        %v1891 = vsel %vm1379, 1, 0
        %v1892 = vsel %vm1380, 1, 0
        %v1893 = vsel %vm1381, 1, 0
        %v1894 = vsel %vm1382, 1, 0
        %v1895 = vsel %vm1383, 1, 0
        %v1896 = vsel %vm1384, 1, 0
        %v1897 = vsel %vm1385, 1, 0
        %v1898 = vsel %vm1386, 1, 0
        %v1899 = vsel %vm1387, 1, 0
        %v1900 = vsel %vm1388, 1, 0
        %v1901 = vsel %vm1389, 1, 0
        %v1902 = vsel %vm1390, 1, 0
        %v1903 = vsel %vm1391, 1, 0
        %v1904 = vsel %vm1392, 1, 0
        %v1905 = vsel %vm1393, 1, 0
        %v1906 = vsel %vm1394, 1, 0
        %v1907 = vsel %vm1395, 1, 0
        %v1908 = vsel %vm1396, 1, 0
        %v1909 = vsel %vm1397, 1, 0
        %v1910 = vsel %vm1398, 1, 0
        %v1911 = vsel %vm1399, 1, 0
        %v1912 = vsel %vm1400, 1, 0
        %v1913 = vsel %vm1401, 1, 0
        %v1914 = vsel %vm1402, 1, 0
        %v1915 = vsel %vm1403, 1, 0
        %v1916 = vsel %vm1404, 1, 0
        %v1917 = vsel %vm1405, 1, 0
        %v1918 = vsel %vm1406, 1, 0
        %v1919 = vsel %vm1407, 1, 0
        %v1920 = vsel %vm1408, 1, 0
        %v1921 = vsel %vm1409, 1, 0
        %v1922 = vsel %vm1410, 1, 0
        %v1923 = vsel %vm1411, 1, 0
        %v1924 = vsel %vm1412, 1, 0
        %v1925 = vsel %vm1413, 1, 0
        %v1926 = vsel %vm1414, 1, 0
        %v1927 = vsel %vm1415, 1, 0
        %v1928 = vsel %vm1416, 1, 0
        %v1929 = vsel %vm1417, 1, 0
        %v1930 = vsel %vm1418, 1, 0
        %v1931 = vsel %vm1419, 1, 0
        %v1932 = vsel %vm1420, 1, 0
        %v1933 = vsel %vm1421, 1, 0
        %v1934 = vsel %vm1422, 1, 0
        %v1935 = vsel %vm1423, 1, 0
        %v1936 = vsel %vm1424, 1, 0
        %v1937 = vsel %vm1425, 1, 0
        %v1938 = vsel %vm1426, 1, 0
        %v1939 = vsel %vm1427, 1, 0
        %v1940 = vsel %vm1428, 1, 0
        %v1941 = vsel %vm1429, 1, 0
        %v1942 = vsel %vm1430, 1, 0
        %v1943 = vsel %vm1431, 1, 0
        %v1944 = vsel %vm1432, 1, 0
        %v1945 = vsel %vm1433, 1, 0
        %v1946 = vsel %vm1434, 1, 0
        %v1947 = vsel %vm1435, 1, 0
        %v1948 = vsel %vm1436, 1, 0
        %v1949 = vsel %vm1437, 1, 0
        %v1950 = vsel %vm1438, 1, 0
        %v1951 = vsel %vm1439, 1, 0
        %v1952 = vsel %vm1440, 1, 0
        %v1953 = vsel %vm1441, 1, 0
        %v1954 = vsel %vm1442, 1, 0
        %v1955 = vsel %vm1443, 1, 0
        %v1956 = vsel %vm1444, 1, 0
        %v1957 = vsel %vm1445, 1, 0
        %v1958 = vsel %vm1446, 1, 0
        %v1959 = vsel %vm1447, 1, 0
        %v1960 = vsel %vm1448, 1, 0
        %v1961 = vsel %vm1449, 1, 0
        %v1962 = vsel %vm1450, 1, 0
        %v1963 = vsel %vm1451, 1, 0
        %v1964 = vsel %vm1452, 1, 0
        %v1965 = vsel %vm1453, 1, 0
        %v1966 = vsel %vm1454, 1, 0
        %v1967 = vsel %vm1455, 1, 0
        %v1968 = vsel %vm1456, 1, 0
        %v1969 = vsel %vm1457, 1, 0
        %v1970 = vsel %vm1458, 1, 0
        %v1971 = vsel %vm1459, 1, 0
        %v1972 = vsel %vm1460, 1, 0
        %v1973 = vsel %vm1461, 1, 0
        %v1974 = vsel %vm1462, 1, 0
        %v1975 = vsel %vm1463, 1, 0
        %v1976 = vsel %vm1464, 1, 0
        %v1977 = vsel %vm1465, 1, 0
        %v1978 = vsel %vm1466, 1, 0
        %v1979 = vsel %vm1467, 1, 0
        %v1980 = vsel %vm1468, 1, 0
        %v1981 = vsel %vm1469, 1, 0
        %v1982 = vsel %vm1470, 1, 0
        %v1983 = vsel %vm1471, 1, 0
        %v1984 = vsel %vm1472, 1, 0
        %v1985 = vsel %vm1473, 1, 0
        %v1986 = vsel %vm1474, 1, 0
        %v1987 = vsel %vm1475, 1, 0
        %v1988 = vsel %vm1476, 1, 0
        %v1989 = vsel %vm1477, 1, 0
        %v1990 = vsel %vm1478, 1, 0
        %v1991 = vsel %vm1479, 1, 0
        %v1992 = vsel %vm1480, 1, 0
        %v1993 = vsel %vm1481, 1, 0
        %v1994 = vsel %vm1482, 1, 0
        %v1995 = vsel %vm1483, 1, 0
        %v1996 = vsel %vm1484, 1, 0
        %v1997 = vsel %vm1485, 1, 0
        %v1998 = vsel %vm1486, 1, 0
        %v1999 = vsel %vm1487, 1, 0
        %v2000 = vsel %vm1488, 1, 0
        %v2001 = vsel %vm1489, 1, 0
        %v2002 = vsel %vm1490, 1, 0
        %v2003 = vsel %vm1491, 1, 0
        %v2004 = vsel %vm1492, 1, 0
        %v2005 = vsel %vm1493, 1, 0
        %v2006 = vsel %vm1494, 1, 0
        %v2007 = vsel %vm1495, 1, 0
        %v2008 = vsel %vm1496, 1, 0
        %v2009 = vsel %vm1497, 1, 0
        %v2010 = vsel %vm1498, 1, 0
        %v2011 = vsel %vm1499, 1, 0
        %v2012 = vsel %vm1500, 1, 0
        %v2013 = vsel %vm1501, 1, 0
        %v2014 = vsel %vm1502, 1, 0
        %v2015 = vsel %vm1503, 1, 0
        %v2016 = vsel %vm1504, 1, 0
        %v2017 = vsel %vm1505, 1, 0
        %v2018 = vsel %vm1506, 1, 0
        %v2019 = vsel %vm1507, 1, 0
        %v2020 = vsel %vm1508, 1, 0
        %v2021 = vsel %vm1509, 1, 0
        %v2022 = vsel %vm1510, 1, 0
        %v2023 = vsel %vm1511, 1, 0
        %v2024 = vsel %vm1512, 1, 0
        %v2025 = vsel %vm1513, 1, 0
        %v2026 = vsel %vm1514, 1, 0
        %v2027 = vsel %vm1515, 1, 0
        %v2028 = vsel %vm1516, 1, 0
        %v2029 = vsel %vm1517, 1, 0
        %v2030 = vsel %vm1518, 1, 0
        %v2031 = vsel %vm1519, 1, 0
        %v2032 = vsel %vm1520, 1, 0
        %v2033 = vsel %vm1521, 1, 0
        %v2034 = vsel %vm1522, 1, 0
        %v2035 = vsel %vm1523, 1, 0
        %v2036 = vsel %vm1524, 1, 0
        %v2037 = vsel %vm1525, 1, 0
        %v2038 = vsel %vm1526, 1, 0
        %v2039 = vsel %vm1527, 1, 0
        %v2040 = vsel %vm1528, 1, 0
        %v2041 = vsel %vm1529, 1, 0
        %v2042 = vsel %vm1530, 1, 0
        %v2043 = vsel %vm1531, 1, 0
        %v2044 = vsel %vm1532, 1, 0
        %v2045 = vsel %vm1533, 1, 0
        %v2046 = vsel %vm1534, 1, 0
        %v2047 = vsel %vm1535, 1, 0
        %v2048 = vsel %vm1536, 1, 0
        %v2049 = vsel %vm1537, 1, 0
        %v2050 = vsel %vm1538, 1, 0
        %v2051 = vsel %vm1539, 1, 0
        %v2052 = vsel %vm1540, 1, 0
        %v2053 = vsel %vm1541, 1, 0
        %v2054 = vsel %vm1542, 1, 0
        %v2055 = vsel %vm1543, 1, 0
        %v2056 = vsel %vm1544, 1, 0
        %v2057 = vsel %vm1545, 1, 0
        %v2058 = vsel %vm1546, 1, 0
        %v2059 = vsel %vm1547, 1, 0
        %v2060 = vsel %vm1548, 1, 0
        %v2061 = vsel %vm1549, 1, 0
        %v2062 = vsel %vm1550, 1, 0
        %v2063 = vsel %vm1551, 1, 0
        %v2064 = vsel %vm1552, 1, 0
        %v2065 = vsel %vm1553, 1, 0
        %v2066 = vsel %vm1554, 1, 0
        %v2067 = vsel %vm1555, 1, 0
        %v2068 = vsel %vm1556, 1, 0
        %v2069 = vsel %vm1557, 1, 0
        %v2070 = vsel %vm1558, 1, 0
        %v2071 = vsel %vm1559, 1, 0
        %v2072 = vsel %vm1560, 1, 0
        %v2073 = vsel %vm1561, 1, 0
        %v2074 = vsel %vm1562, 1, 0
        %v2075 = vsel %vm1563, 1, 0
        %v2076 = vsel %vm1564, 1, 0
        %v2077 = vsel %vm1565, 1, 0
        %v2078 = vsel %vm1566, 1, 0
        %v2079 = vcvt.s32.f32 %v1567
        %v2080 = vcvt.s32.f32 %v1568
        %v2081 = vcvt.s32.f32 %v1569
        %v2082 = vcvt.s32.f32 %v1570
        %v2083 = vcvt.s32.f32 %v1571
        %v2084 = vcvt.s32.f32 %v1572
        %v2085 = vcvt.s32.f32 %v1573
        %v2086 = vcvt.s32.f32 %v1574
        %v2087 = vcvt.s32.f32 %v1575
        %v2088 = vcvt.s32.f32 %v1576
        %v2089 = vcvt.s32.f32 %v1577
        %v2090 = vcvt.s32.f32 %v1578
        %v2091 = vcvt.s32.f32 %v1579
        %v2092 = vcvt.s32.f32 %v1580
        %v2093 = vcvt.s32.f32 %v1581
        %v2094 = vcvt.s32.f32 %v1582
        %v2095 = vcvt.s32.f32 %v1583
        %v2096 = vcvt.s32.f32 %v1584
        %v2097 = vcvt.s32.f32 %v1585
        %v2098 = vcvt.s32.f32 %v1586
        %v2099 = vcvt.s32.f32 %v1587
        %v2100 = vcvt.s32.f32 %v1588
        %v2101 = vcvt.s32.f32 %v1589
        %v2102 = vcvt.s32.f32 %v1590
        %v2103 = vcvt.s32.f32 %v1591
        %v2104 = vcvt.s32.f32 %v1592
        %v2105 = vcvt.s32.f32 %v1593
        %v2106 = vcvt.s32.f32 %v1594
        %v2107 = vcvt.s32.f32 %v1595
        %v2108 = vcvt.s32.f32 %v1596
        %v2109 = vcvt.s32.f32 %v1597
        %v2110 = vcvt.s32.f32 %v1598
        %v2111 = vcvt.s32.f32 %v1599
        %v2112 = vcvt.s32.f32 %v1600
        %v2113 = vcvt.s32.f32 %v1601
        %v2114 = vcvt.s32.f32 %v1602
        %v2115 = vcvt.s32.f32 %v1603
        %v2116 = vcvt.s32.f32 %v1604
        %v2117 = vcvt.s32.f32 %v1605
        %v2118 = vcvt.s32.f32 %v1606
        %v2119 = vcvt.s32.f32 %v1607
        %v2120 = vcvt.s32.f32 %v1608
        %v2121 = vcvt.s32.f32 %v1609
        %v2122 = vcvt.s32.f32 %v1610
        %v2123 = vcvt.s32.f32 %v1611
        %v2124 = vcvt.s32.f32 %v1612
        %v2125 = vcvt.s32.f32 %v1613
        %v2126 = vcvt.s32.f32 %v1614
        %v2127 = vcvt.s32.f32 %v1615
        %v2128 = vcvt.s32.f32 %v1616
        %v2129 = vcvt.s32.f32 %v1617
        %v2130 = vcvt.s32.f32 %v1618
        %v2131 = vcvt.s32.f32 %v1619
        %v2132 = vcvt.s32.f32 %v1620
        %v2133 = vcvt.s32.f32 %v1621
        %v2134 = vcvt.s32.f32 %v1622
        %v2135 = vcvt.s32.f32 %v1623
        %v2136 = vcvt.s32.f32 %v1624
        %v2137 = vcvt.s32.f32 %v1625
        %v2138 = vcvt.s32.f32 %v1626
        %v2139 = vcvt.s32.f32 %v1627
        %v2140 = vcvt.s32.f32 %v1628
        %v2141 = vcvt.s32.f32 %v1629
        %v2142 = vcvt.s32.f32 %v1630
        %v2143 = vcvt.s32.f32 %v1631
        %v2144 = vcvt.s32.f32 %v1632
        %v2145 = vcvt.s32.f32 %v1633
        %v2146 = vcvt.s32.f32 %v1634
        %v2147 = vcvt.s32.f32 %v1635
        %v2148 = vcvt.s32.f32 %v1636
        %v2149 = vcvt.s32.f32 %v1637
        %v2150 = vcvt.s32.f32 %v1638
        %v2151 = vcvt.s32.f32 %v1639
        %v2152 = vcvt.s32.f32 %v1640
        %v2153 = vcvt.s32.f32 %v1641
        %v2154 = vcvt.s32.f32 %v1642
        %v2155 = vcvt.s32.f32 %v1643
        %v2156 = vcvt.s32.f32 %v1644
        %v2157 = vcvt.s32.f32 %v1645
        %v2158 = vcvt.s32.f32 %v1646
        %v2159 = vcvt.s32.f32 %v1647
        %v2160 = vcvt.s32.f32 %v1648
        %v2161 = vcvt.s32.f32 %v1649
        %v2162 = vcvt.s32.f32 %v1650
        %v2163 = vcvt.s32.f32 %v1651
        %v2164 = vcvt.s32.f32 %v1652
        %v2165 = vcvt.s32.f32 %v1653
        %v2166 = vcvt.s32.f32 %v1654
        %v2167 = vcvt.s32.f32 %v1655
        %v2168 = vcvt.s32.f32 %v1656
        %v2169 = vcvt.s32.f32 %v1657
        %v2170 = vcvt.s32.f32 %v1658
        %v2171 = vcvt.s32.f32 %v1659
        %v2172 = vcvt.s32.f32 %v1660
        %v2173 = vcvt.s32.f32 %v1661
        %v2174 = vcvt.s32.f32 %v1662
        %v2175 = vcvt.s32.f32 %v1663
        %v2176 = vcvt.s32.f32 %v1664
        %v2177 = vcvt.s32.f32 %v1665
        %v2178 = vcvt.s32.f32 %v1666
        %v2179 = vcvt.s32.f32 %v1667
        %v2180 = vcvt.s32.f32 %v1668
        %v2181 = vcvt.s32.f32 %v1669
        %v2182 = vcvt.s32.f32 %v1670
        %v2183 = vcvt.s32.f32 %v1671
        %v2184 = vcvt.s32.f32 %v1672
        %v2185 = vcvt.s32.f32 %v1673
        %v2186 = vcvt.s32.f32 %v1674
        %v2187 = vcvt.s32.f32 %v1675
        %v2188 = vcvt.s32.f32 %v1676
        %v2189 = vcvt.s32.f32 %v1677
        %v2190 = vcvt.s32.f32 %v1678
        %v2191 = vcvt.s32.f32 %v1679
        %v2192 = vcvt.s32.f32 %v1680
        %v2193 = vcvt.s32.f32 %v1681
        %v2194 = vcvt.s32.f32 %v1682
        %v2195 = vcvt.s32.f32 %v1683
        %v2196 = vcvt.s32.f32 %v1684
        %v2197 = vcvt.s32.f32 %v1685
        %v2198 = vcvt.s32.f32 %v1686
        %v2199 = vcvt.s32.f32 %v1687
        %v2200 = vcvt.s32.f32 %v1688
        %v2201 = vcvt.s32.f32 %v1689
        %v2202 = vcvt.s32.f32 %v1690
        %v2203 = vcvt.s32.f32 %v1691
        %v2204 = vcvt.s32.f32 %v1692
        %v2205 = vcvt.s32.f32 %v1693
        %v2206 = vcvt.s32.f32 %v1694
        %v2207 = vcvt.s32.f32 %v1695
        %v2208 = vcvt.s32.f32 %v1696
        %v2209 = vcvt.s32.f32 %v1697
        %v2210 = vcvt.s32.f32 %v1698
        %v2211 = vcvt.s32.f32 %v1699
        %v2212 = vcvt.s32.f32 %v1700
        %v2213 = vcvt.s32.f32 %v1701
        %v2214 = vcvt.s32.f32 %v1702
        %v2215 = vcvt.s32.f32 %v1703
        %v2216 = vcvt.s32.f32 %v1704
        %v2217 = vcvt.s32.f32 %v1705
        %v2218 = vcvt.s32.f32 %v1706
        %v2219 = vcvt.s32.f32 %v1707
        %v2220 = vcvt.s32.f32 %v1708
        %v2221 = vcvt.s32.f32 %v1709
        %v2222 = vcvt.s32.f32 %v1710
        %v2223 = vcvt.s32.f32 %v1711
        %v2224 = vcvt.s32.f32 %v1712
        %v2225 = vcvt.s32.f32 %v1713
        %v2226 = vcvt.s32.f32 %v1714
        %v2227 = vcvt.s32.f32 %v1715
        %v2228 = vcvt.s32.f32 %v1716
        %v2229 = vcvt.s32.f32 %v1717
        %v2230 = vcvt.s32.f32 %v1718
        %v2231 = vcvt.s32.f32 %v1719
        %v2232 = vcvt.s32.f32 %v1720
        %v2233 = vcvt.s32.f32 %v1721
        %v2234 = vcvt.s32.f32 %v1722
        %v2235 = vcvt.s32.f32 %v1723
        %v2236 = vcvt.s32.f32 %v1724
        %v2237 = vcvt.s32.f32 %v1725
        %v2238 = vcvt.s32.f32 %v1726
        %v2239 = vcvt.s32.f32 %v1727
        %v2240 = vcvt.s32.f32 %v1728
        %v2241 = vcvt.s32.f32 %v1729
        %v2242 = vcvt.s32.f32 %v1730
        %v2243 = vcvt.s32.f32 %v1731
        %v2244 = vcvt.s32.f32 %v1732
        %v2245 = vcvt.s32.f32 %v1733
        %v2246 = vcvt.s32.f32 %v1734
        %v2247 = vcvt.s32.f32 %v1735
        %v2248 = vcvt.s32.f32 %v1736
        %v2249 = vcvt.s32.f32 %v1737
        %v2250 = vcvt.s32.f32 %v1738
        %v2251 = vcvt.s32.f32 %v1739
        %v2252 = vcvt.s32.f32 %v1740
        %v2253 = vcvt.s32.f32 %v1741
        %v2254 = vcvt.s32.f32 %v1742
        %v2255 = vcvt.s32.f32 %v1743
        %v2256 = vcvt.s32.f32 %v1744
        %v2257 = vcvt.s32.f32 %v1745
        %v2258 = vcvt.s32.f32 %v1746
        %v2259 = vcvt.s32.f32 %v1747
        %v2260 = vcvt.s32.f32 %v1748
        %v2261 = vcvt.s32.f32 %v1749
        %v2262 = vcvt.s32.f32 %v1750
        %v2263 = vcvt.s32.f32 %v1751
        %v2264 = vcvt.s32.f32 %v1752
        %v2265 = vcvt.s32.f32 %v1753
        %v2266 = vcvt.s32.f32 %v1754
        %v2267 = vcvt.s32.f32 %v1755
        %v2268 = vcvt.s32.f32 %v1756
        %v2269 = vcvt.s32.f32 %v1757
        %v2270 = vcvt.s32.f32 %v1758
        %v2271 = vcvt.s32.f32 %v1759
        %v2272 = vcvt.s32.f32 %v1760
        %v2273 = vcvt.s32.f32 %v1761
        %v2274 = vcvt.s32.f32 %v1762
        %v2275 = vcvt.s32.f32 %v1763
        %v2276 = vcvt.s32.f32 %v1764
        %v2277 = vcvt.s32.f32 %v1765
        %v2278 = vcvt.s32.f32 %v1766
        %v2279 = vcvt.s32.f32 %v1767
        %v2280 = vcvt.s32.f32 %v1768
        %v2281 = vcvt.s32.f32 %v1769
        %v2282 = vcvt.s32.f32 %v1770
        %v2283 = vcvt.s32.f32 %v1771
        %v2284 = vcvt.s32.f32 %v1772
        %v2285 = vcvt.s32.f32 %v1773
        %v2286 = vcvt.s32.f32 %v1774
        %v2287 = vcvt.s32.f32 %v1775
        %v2288 = vcvt.s32.f32 %v1776
        %v2289 = vcvt.s32.f32 %v1777
        %v2290 = vcvt.s32.f32 %v1778
        %v2291 = vcvt.s32.f32 %v1779
        %v2292 = vcvt.s32.f32 %v1780
        %v2293 = vcvt.s32.f32 %v1781
        %v2294 = vcvt.s32.f32 %v1782
        %v2295 = vcvt.s32.f32 %v1783
        %v2296 = vcvt.s32.f32 %v1784
        %v2297 = vcvt.s32.f32 %v1785
        %v2298 = vcvt.s32.f32 %v1786
        %v2299 = vcvt.s32.f32 %v1787
        %v2300 = vcvt.s32.f32 %v1788
        %v2301 = vcvt.s32.f32 %v1789
        %v2302 = vcvt.s32.f32 %v1790
        %v2303 = vcvt.s32.f32 %v1791
        %v2304 = vcvt.s32.f32 %v1792
        %v2305 = vcvt.s32.f32 %v1793
        %v2306 = vcvt.s32.f32 %v1794
        %v2307 = vcvt.s32.f32 %v1795
        %v2308 = vcvt.s32.f32 %v1796
        %v2309 = vcvt.s32.f32 %v1797
        %v2310 = vcvt.s32.f32 %v1798
        %v2311 = vcvt.s32.f32 %v1799
        %v2312 = vcvt.s32.f32 %v1800
        %v2313 = vcvt.s32.f32 %v1801
        %v2314 = vcvt.s32.f32 %v1802
        %v2315 = vcvt.s32.f32 %v1803
        %v2316 = vcvt.s32.f32 %v1804
        %v2317 = vcvt.s32.f32 %v1805
        %v2318 = vcvt.s32.f32 %v1806
        %v2319 = vcvt.s32.f32 %v1807
        %v2320 = vcvt.s32.f32 %v1808
        %v2321 = vcvt.s32.f32 %v1809
        %v2322 = vcvt.s32.f32 %v1810
        %v2323 = vcvt.s32.f32 %v1811
        %v2324 = vcvt.s32.f32 %v1812
        %v2325 = vcvt.s32.f32 %v1813
        %v2326 = vcvt.s32.f32 %v1814
        %v2327 = vcvt.s32.f32 %v1815
        %v2328 = vcvt.s32.f32 %v1816
        %v2329 = vcvt.s32.f32 %v1817
        %v2330 = vcvt.s32.f32 %v1818
        %v2331 = vcvt.s32.f32 %v1819
        %v2332 = vcvt.s32.f32 %v1820
        %v2333 = vcvt.s32.f32 %v1821
        %v2334 = vcvt.s32.f32 %v1822
        %v2335 = vcvt.s32.f32 %v1823
        %v2336 = vcvt.s32.f32 %v1824
        %v2337 = vcvt.s32.f32 %v1825
        %v2338 = vcvt.s32.f32 %v1826
        %v2339 = vcvt.s32.f32 %v1827
        %v2340 = vcvt.s32.f32 %v1828
        %v2341 = vcvt.s32.f32 %v1829
        %v2342 = vcvt.s32.f32 %v1830
        %v2343 = vcvt.s32.f32 %v1831
        %v2344 = vcvt.s32.f32 %v1832
        %v2345 = vcvt.s32.f32 %v1833
        %v2346 = vcvt.s32.f32 %v1834
        %v2347 = vcvt.s32.f32 %v1835
        %v2348 = vcvt.s32.f32 %v1836
        %v2349 = vcvt.s32.f32 %v1837
        %v2350 = vcvt.s32.f32 %v1838
        %v2351 = vcvt.s32.f32 %v1839
        %v2352 = vcvt.s32.f32 %v1840
        %v2353 = vcvt.s32.f32 %v1841
        %v2354 = vcvt.s32.f32 %v1842
        %v2355 = vcvt.s32.f32 %v1843
        %v2356 = vcvt.s32.f32 %v1844
        %v2357 = vcvt.s32.f32 %v1845
        %v2358 = vcvt.s32.f32 %v1846
        %v2359 = vcvt.s32.f32 %v1847
        %v2360 = vcvt.s32.f32 %v1848
        %v2361 = vcvt.s32.f32 %v1849
        %v2362 = vcvt.s32.f32 %v1850
        %v2363 = vcvt.s32.f32 %v1851
        %v2364 = vcvt.s32.f32 %v1852
        %v2365 = vcvt.s32.f32 %v1853
        %v2366 = vcvt.s32.f32 %v1854
        %v2367 = vcvt.s32.f32 %v1855
        %v2368 = vcvt.s32.f32 %v1856
        %v2369 = vcvt.s32.f32 %v1857
        %v2370 = vcvt.s32.f32 %v1858
        %v2371 = vcvt.s32.f32 %v1859
        %v2372 = vcvt.s32.f32 %v1860
        %v2373 = vcvt.s32.f32 %v1861
        %v2374 = vcvt.s32.f32 %v1862
        %v2375 = vcvt.s32.f32 %v1863
        %v2376 = vcvt.s32.f32 %v1864
        %v2377 = vcvt.s32.f32 %v1865
        %v2378 = vcvt.s32.f32 %v1866
        %v2379 = vcvt.s32.f32 %v1867
        %v2380 = vcvt.s32.f32 %v1868
        %v2381 = vcvt.s32.f32 %v1869
        %v2382 = vcvt.s32.f32 %v1870
        %v2383 = vcvt.s32.f32 %v1871
        %v2384 = vcvt.s32.f32 %v1872
        %v2385 = vcvt.s32.f32 %v1873
        %v2386 = vcvt.s32.f32 %v1874
        %v2387 = vcvt.s32.f32 %v1875
        %v2388 = vcvt.s32.f32 %v1876
        %v2389 = vcvt.s32.f32 %v1877
        %v2390 = vcvt.s32.f32 %v1878
        %v2391 = vcvt.s32.f32 %v1879
        %v2392 = vcvt.s32.f32 %v1880
        %v2393 = vcvt.s32.f32 %v1881
        %v2394 = vcvt.s32.f32 %v1882
        %v2395 = vcvt.s32.f32 %v1883
        %v2396 = vcvt.s32.f32 %v1884
        %v2397 = vcvt.s32.f32 %v1885
        %v2398 = vcvt.s32.f32 %v1886
        %v2399 = vcvt.s32.f32 %v1887
        %v2400 = vcvt.s32.f32 %v1888
        %v2401 = vcvt.s32.f32 %v1889
        %v2402 = vcvt.s32.f32 %v1890
        %v2403 = vcvt.s32.f32 %v1891
        %v2404 = vcvt.s32.f32 %v1892
        %v2405 = vcvt.s32.f32 %v1893
        %v2406 = vcvt.s32.f32 %v1894
        %v2407 = vcvt.s32.f32 %v1895
        %v2408 = vcvt.s32.f32 %v1896
        %v2409 = vcvt.s32.f32 %v1897
        %v2410 = vcvt.s32.f32 %v1898
        %v2411 = vcvt.s32.f32 %v1899
        %v2412 = vcvt.s32.f32 %v1900
        %v2413 = vcvt.s32.f32 %v1901
        %v2414 = vcvt.s32.f32 %v1902
        %v2415 = vcvt.s32.f32 %v1903
        %v2416 = vcvt.s32.f32 %v1904
        %v2417 = vcvt.s32.f32 %v1905
        %v2418 = vcvt.s32.f32 %v1906
        %v2419 = vcvt.s32.f32 %v1907
        %v2420 = vcvt.s32.f32 %v1908
        %v2421 = vcvt.s32.f32 %v1909
        %v2422 = vcvt.s32.f32 %v1910
        %v2423 = vcvt.s32.f32 %v1911
        %v2424 = vcvt.s32.f32 %v1912
        %v2425 = vcvt.s32.f32 %v1913
        %v2426 = vcvt.s32.f32 %v1914
        %v2427 = vcvt.s32.f32 %v1915
        %v2428 = vcvt.s32.f32 %v1916
        %v2429 = vcvt.s32.f32 %v1917
        %v2430 = vcvt.s32.f32 %v1918
        %v2431 = vcvt.s32.f32 %v1919
        %v2432 = vcvt.s32.f32 %v1920
        %v2433 = vcvt.s32.f32 %v1921
        %v2434 = vcvt.s32.f32 %v1922
        %v2435 = vcvt.s32.f32 %v1923
        %v2436 = vcvt.s32.f32 %v1924
        %v2437 = vcvt.s32.f32 %v1925
        %v2438 = vcvt.s32.f32 %v1926
        %v2439 = vcvt.s32.f32 %v1927
        %v2440 = vcvt.s32.f32 %v1928
        %v2441 = vcvt.s32.f32 %v1929
        %v2442 = vcvt.s32.f32 %v1930
        %v2443 = vcvt.s32.f32 %v1931
        %v2444 = vcvt.s32.f32 %v1932
        %v2445 = vcvt.s32.f32 %v1933
        %v2446 = vcvt.s32.f32 %v1934
        %v2447 = vcvt.s32.f32 %v1935
        %v2448 = vcvt.s32.f32 %v1936
        %v2449 = vcvt.s32.f32 %v1937
        %v2450 = vcvt.s32.f32 %v1938
        %v2451 = vcvt.s32.f32 %v1939
        %v2452 = vcvt.s32.f32 %v1940
        %v2453 = vcvt.s32.f32 %v1941
        %v2454 = vcvt.s32.f32 %v1942
        %v2455 = vcvt.s32.f32 %v1943
        %v2456 = vcvt.s32.f32 %v1944
        %v2457 = vcvt.s32.f32 %v1945
        %v2458 = vcvt.s32.f32 %v1946
        %v2459 = vcvt.s32.f32 %v1947
        %v2460 = vcvt.s32.f32 %v1948
        %v2461 = vcvt.s32.f32 %v1949
        %v2462 = vcvt.s32.f32 %v1950
        %v2463 = vcvt.s32.f32 %v1951
        %v2464 = vcvt.s32.f32 %v1952
        %v2465 = vcvt.s32.f32 %v1953
        %v2466 = vcvt.s32.f32 %v1954
        %v2467 = vcvt.s32.f32 %v1955
        %v2468 = vcvt.s32.f32 %v1956
        %v2469 = vcvt.s32.f32 %v1957
        %v2470 = vcvt.s32.f32 %v1958
        %v2471 = vcvt.s32.f32 %v1959
        %v2472 = vcvt.s32.f32 %v1960
        %v2473 = vcvt.s32.f32 %v1961
        %v2474 = vcvt.s32.f32 %v1962
        %v2475 = vcvt.s32.f32 %v1963
        %v2476 = vcvt.s32.f32 %v1964
        %v2477 = vcvt.s32.f32 %v1965
        %v2478 = vcvt.s32.f32 %v1966
        %v2479 = vcvt.s32.f32 %v1967
        %v2480 = vcvt.s32.f32 %v1968
        %v2481 = vcvt.s32.f32 %v1969
        %v2482 = vcvt.s32.f32 %v1970
        %v2483 = vcvt.s32.f32 %v1971
        %v2484 = vcvt.s32.f32 %v1972
        %v2485 = vcvt.s32.f32 %v1973
        %v2486 = vcvt.s32.f32 %v1974
        %v2487 = vcvt.s32.f32 %v1975
        %v2488 = vcvt.s32.f32 %v1976
        %v2489 = vcvt.s32.f32 %v1977
        %v2490 = vcvt.s32.f32 %v1978
        %v2491 = vcvt.s32.f32 %v1979
        %v2492 = vcvt.s32.f32 %v1980
        %v2493 = vcvt.s32.f32 %v1981
        %v2494 = vcvt.s32.f32 %v1982
        %v2495 = vcvt.s32.f32 %v1983
        %v2496 = vcvt.s32.f32 %v1984
        %v2497 = vcvt.s32.f32 %v1985
        %v2498 = vcvt.s32.f32 %v1986
        %v2499 = vcvt.s32.f32 %v1987
        %v2500 = vcvt.s32.f32 %v1988
        %v2501 = vcvt.s32.f32 %v1989
        %v2502 = vcvt.s32.f32 %v1990
        %v2503 = vcvt.s32.f32 %v1991
        %v2504 = vcvt.s32.f32 %v1992
        %v2505 = vcvt.s32.f32 %v1993
        %v2506 = vcvt.s32.f32 %v1994
        %v2507 = vcvt.s32.f32 %v1995
        %v2508 = vcvt.s32.f32 %v1996
        %v2509 = vcvt.s32.f32 %v1997
        %v2510 = vcvt.s32.f32 %v1998
        %v2511 = vcvt.s32.f32 %v1999
        %v2512 = vcvt.s32.f32 %v2000
        %v2513 = vcvt.s32.f32 %v2001
        %v2514 = vcvt.s32.f32 %v2002
        %v2515 = vcvt.s32.f32 %v2003
        %v2516 = vcvt.s32.f32 %v2004
        %v2517 = vcvt.s32.f32 %v2005
        %v2518 = vcvt.s32.f32 %v2006
        %v2519 = vcvt.s32.f32 %v2007
        %v2520 = vcvt.s32.f32 %v2008
        %v2521 = vcvt.s32.f32 %v2009
        %v2522 = vcvt.s32.f32 %v2010
        %v2523 = vcvt.s32.f32 %v2011
        %v2524 = vcvt.s32.f32 %v2012
        %v2525 = vcvt.s32.f32 %v2013
        %v2526 = vcvt.s32.f32 %v2014
        %v2527 = vcvt.s32.f32 %v2015
        %v2528 = vcvt.s32.f32 %v2016
        %v2529 = vcvt.s32.f32 %v2017
        %v2530 = vcvt.s32.f32 %v2018
        %v2531 = vcvt.s32.f32 %v2019
        %v2532 = vcvt.s32.f32 %v2020
        %v2533 = vcvt.s32.f32 %v2021
        %v2534 = vcvt.s32.f32 %v2022
        %v2535 = vcvt.s32.f32 %v2023
        %v2536 = vcvt.s32.f32 %v2024
        %v2537 = vcvt.s32.f32 %v2025
        %v2538 = vcvt.s32.f32 %v2026
        %v2539 = vcvt.s32.f32 %v2027
        %v2540 = vcvt.s32.f32 %v2028
        %v2541 = vcvt.s32.f32 %v2029
        %v2542 = vcvt.s32.f32 %v2030
        %v2543 = vcvt.s32.f32 %v2031
        %v2544 = vcvt.s32.f32 %v2032
        %v2545 = vcvt.s32.f32 %v2033
        %v2546 = vcvt.s32.f32 %v2034
        %v2547 = vcvt.s32.f32 %v2035
        %v2548 = vcvt.s32.f32 %v2036
        %v2549 = vcvt.s32.f32 %v2037
        %v2550 = vcvt.s32.f32 %v2038
        %v2551 = vcvt.s32.f32 %v2039
        %v2552 = vcvt.s32.f32 %v2040
        %v2553 = vcvt.s32.f32 %v2041
        %v2554 = vcvt.s32.f32 %v2042
        %v2555 = vcvt.s32.f32 %v2043
        %v2556 = vcvt.s32.f32 %v2044
        %v2557 = vcvt.s32.f32 %v2045
        %v2558 = vcvt.s32.f32 %v2046
        %v2559 = vcvt.s32.f32 %v2047
        %v2560 = vcvt.s32.f32 %v2048
        %v2561 = vcvt.s32.f32 %v2049
        %v2562 = vcvt.s32.f32 %v2050
        %v2563 = vcvt.s32.f32 %v2051
        %v2564 = vcvt.s32.f32 %v2052
        %v2565 = vcvt.s32.f32 %v2053
        %v2566 = vcvt.s32.f32 %v2054
        %v2567 = vcvt.s32.f32 %v2055
        %v2568 = vcvt.s32.f32 %v2056
        %v2569 = vcvt.s32.f32 %v2057
        %v2570 = vcvt.s32.f32 %v2058
        %v2571 = vcvt.s32.f32 %v2059
        %v2572 = vcvt.s32.f32 %v2060
        %v2573 = vcvt.s32.f32 %v2061
        %v2574 = vcvt.s32.f32 %v2062
        %v2575 = vcvt.s32.f32 %v2063
        %v2576 = vcvt.s32.f32 %v2064
        %v2577 = vcvt.s32.f32 %v2065
        %v2578 = vcvt.s32.f32 %v2066
        %v2579 = vcvt.s32.f32 %v2067
        %v2580 = vcvt.s32.f32 %v2068
        %v2581 = vcvt.s32.f32 %v2069
        %v2582 = vcvt.s32.f32 %v2070
        %v2583 = vcvt.s32.f32 %v2071
        %v2584 = vcvt.s32.f32 %v2072
        %v2585 = vcvt.s32.f32 %v2073
        %v2586 = vcvt.s32.f32 %v2074
        %v2587 = vcvt.s32.f32 %v2075
        %v2588 = vcvt.s32.f32 %v2076
        %v2589 = vcvt.s32.f32 %v2077
        %v2590 = vcvt.s32.f32 %v2078
        %v2591 = vadd.f32 %v2079, %v2083
        %v2592 = vadd.f32 %v2591, %v2087
        %v2593 = vadd.f32 %v2592, %v2091
        %v2594 = vadd.f32 %v2593, %v2095
        %v2595 = vadd.f32 %v2594, %v2099
        %v2596 = vadd.f32 %v2595, %v2103
        %v2597 = vadd.f32 %v2596, %v2107
        %v2598 = vadd.f32 %v2597, %v2111
        %v2599 = vadd.f32 %v2598, %v2115
        %v2600 = vadd.f32 %v2599, %v2119
        %v2601 = vadd.f32 %v2600, %v2123
        %v2602 = vadd.f32 %v2601, %v2127
        %v2603 = vadd.f32 %v2602, %v2131
        %v2604 = vadd.f32 %v2603, %v2135
        %v2605 = vadd.f32 %v2604, %v2139
        %v2606 = vrot.slane %v2605, 4
        %v2607 = vadd.f32 %v2605, %v2606
        %v2608 = vrot.slane %v2607, 2
        %v2609 = vadd.f32 %v2607, %v2608
        %v2610 = vrot.slane %v2609, 1
        %v2611 = vadd.f32 %v2609, %v2610
        %v2612 = vadd.f32 %v2080, %v2084
        %v2613 = vadd.f32 %v2612, %v2088
        %v2614 = vadd.f32 %v2613, %v2092
        %v2615 = vadd.f32 %v2614, %v2096
        %v2616 = vadd.f32 %v2615, %v2100
        %v2617 = vadd.f32 %v2616, %v2104
        %v2618 = vadd.f32 %v2617, %v2108
        %v2619 = vadd.f32 %v2618, %v2112
        %v2620 = vadd.f32 %v2619, %v2116
        %v2621 = vadd.f32 %v2620, %v2120
        %v2622 = vadd.f32 %v2621, %v2124
        %v2623 = vadd.f32 %v2622, %v2128
        %v2624 = vadd.f32 %v2623, %v2132
        %v2625 = vadd.f32 %v2624, %v2136
        %v2626 = vadd.f32 %v2625, %v2140
        %v2627 = vrot.slane %v2626, 4
        %v2628 = vadd.f32 %v2626, %v2627
        %v2629 = vrot.slane %v2628, 2
        %v2630 = vadd.f32 %v2628, %v2629
        %v2631 = vrot.slane %v2630, 1
        %v2632 = vadd.f32 %v2630, %v2631
        %v2633 = vadd.f32 %v2081, %v2085
        %v2634 = vadd.f32 %v2633, %v2089
        %v2635 = vadd.f32 %v2634, %v2093
        %v2636 = vadd.f32 %v2635, %v2097
        %v2637 = vadd.f32 %v2636, %v2101
        %v2638 = vadd.f32 %v2637, %v2105
        %v2639 = vadd.f32 %v2638, %v2109
        %v2640 = vadd.f32 %v2639, %v2113
        %v2641 = vadd.f32 %v2640, %v2117
        %v2642 = vadd.f32 %v2641, %v2121
        %v2643 = vadd.f32 %v2642, %v2125
        %v2644 = vadd.f32 %v2643, %v2129
        %v2645 = vadd.f32 %v2644, %v2133
        %v2646 = vadd.f32 %v2645, %v2137
        %v2647 = vadd.f32 %v2646, %v2141
        %v2648 = vrot.slane %v2647, 4
        %v2649 = vadd.f32 %v2647, %v2648
        %v2650 = vrot.slane %v2649, 2
        %v2651 = vadd.f32 %v2649, %v2650
        %v2652 = vrot.slane %v2651, 1
        %v2653 = vadd.f32 %v2651, %v2652
        %v2654 = vadd.f32 %v2082, %v2086
        %v2655 = vadd.f32 %v2654, %v2090
        %v2656 = vadd.f32 %v2655, %v2094
        %v2657 = vadd.f32 %v2656, %v2098
        %v2658 = vadd.f32 %v2657, %v2102
        %v2659 = vadd.f32 %v2658, %v2106
        %v2660 = vadd.f32 %v2659, %v2110
        %v2661 = vadd.f32 %v2660, %v2114
        %v2662 = vadd.f32 %v2661, %v2118
        %v2663 = vadd.f32 %v2662, %v2122
        %v2664 = vadd.f32 %v2663, %v2126
        %v2665 = vadd.f32 %v2664, %v2130
        %v2666 = vadd.f32 %v2665, %v2134
        %v2667 = vadd.f32 %v2666, %v2138
        %v2668 = vadd.f32 %v2667, %v2142
        %v2669 = vrot.slane %v2668, 4
        %v2670 = vadd.f32 %v2668, %v2669
        %v2671 = vrot.slane %v2670, 2
        %v2672 = vadd.f32 %v2670, %v2671
        %v2673 = vrot.slane %v2672, 1
        %v2674 = vadd.f32 %v2672, %v2673
        %v2675 = vadd.f32 %v2143, %v2147
        %v2676 = vadd.f32 %v2675, %v2151
        %v2677 = vadd.f32 %v2676, %v2155
        %v2678 = vadd.f32 %v2677, %v2159
        %v2679 = vadd.f32 %v2678, %v2163
        %v2680 = vadd.f32 %v2679, %v2167
        %v2681 = vadd.f32 %v2680, %v2171
        %v2682 = vadd.f32 %v2681, %v2175
        %v2683 = vadd.f32 %v2682, %v2179
        %v2684 = vadd.f32 %v2683, %v2183
        %v2685 = vadd.f32 %v2684, %v2187
        %v2686 = vadd.f32 %v2685, %v2191
        %v2687 = vadd.f32 %v2686, %v2195
        %v2688 = vadd.f32 %v2687, %v2199
        %v2689 = vadd.f32 %v2688, %v2203
        %v2690 = vrot.slane %v2689, 4
        %v2691 = vadd.f32 %v2689, %v2690
        %v2692 = vrot.slane %v2691, 2
        %v2693 = vadd.f32 %v2691, %v2692
        %v2694 = vrot.slane %v2693, 1
        %v2695 = vadd.f32 %v2693, %v2694
        %v2696 = vadd.f32 %v2144, %v2148
        %v2697 = vadd.f32 %v2696, %v2152
        %v2698 = vadd.f32 %v2697, %v2156
        %v2699 = vadd.f32 %v2698, %v2160
        %v2700 = vadd.f32 %v2699, %v2164
        %v2701 = vadd.f32 %v2700, %v2168
        %v2702 = vadd.f32 %v2701, %v2172
        %v2703 = vadd.f32 %v2702, %v2176
        %v2704 = vadd.f32 %v2703, %v2180
        %v2705 = vadd.f32 %v2704, %v2184
        %v2706 = vadd.f32 %v2705, %v2188
        %v2707 = vadd.f32 %v2706, %v2192
        %v2708 = vadd.f32 %v2707, %v2196
        %v2709 = vadd.f32 %v2708, %v2200
        %v2710 = vadd.f32 %v2709, %v2204
        %v2711 = vrot.slane %v2710, 4
        %v2712 = vadd.f32 %v2710, %v2711
        %v2713 = vrot.slane %v2712, 2
        %v2714 = vadd.f32 %v2712, %v2713
        %v2715 = vrot.slane %v2714, 1
        %v2716 = vadd.f32 %v2714, %v2715
        %v2717 = vadd.f32 %v2145, %v2149
        %v2718 = vadd.f32 %v2717, %v2153
        %v2719 = vadd.f32 %v2718, %v2157
        %v2720 = vadd.f32 %v2719, %v2161
        %v2721 = vadd.f32 %v2720, %v2165
        %v2722 = vadd.f32 %v2721, %v2169
        %v2723 = vadd.f32 %v2722, %v2173
        %v2724 = vadd.f32 %v2723, %v2177
        %v2725 = vadd.f32 %v2724, %v2181
        %v2726 = vadd.f32 %v2725, %v2185
        %v2727 = vadd.f32 %v2726, %v2189
        %v2728 = vadd.f32 %v2727, %v2193
        %v2729 = vadd.f32 %v2728, %v2197
        %v2730 = vadd.f32 %v2729, %v2201
        %v2731 = vadd.f32 %v2730, %v2205
        %v2732 = vrot.slane %v2731, 4
        %v2733 = vadd.f32 %v2731, %v2732
        %v2734 = vrot.slane %v2733, 2
        %v2735 = vadd.f32 %v2733, %v2734
        %v2736 = vrot.slane %v2735, 1
        %v2737 = vadd.f32 %v2735, %v2736
        %v2738 = vadd.f32 %v2146, %v2150
        %v2739 = vadd.f32 %v2738, %v2154
        %v2740 = vadd.f32 %v2739, %v2158
        %v2741 = vadd.f32 %v2740, %v2162
        %v2742 = vadd.f32 %v2741, %v2166
        %v2743 = vadd.f32 %v2742, %v2170
        %v2744 = vadd.f32 %v2743, %v2174
        %v2745 = vadd.f32 %v2744, %v2178
        %v2746 = vadd.f32 %v2745, %v2182
        %v2747 = vadd.f32 %v2746, %v2186
        %v2748 = vadd.f32 %v2747, %v2190
        %v2749 = vadd.f32 %v2748, %v2194
        %v2750 = vadd.f32 %v2749, %v2198
        %v2751 = vadd.f32 %v2750, %v2202
        %v2752 = vadd.f32 %v2751, %v2206
        %v2753 = vrot.slane %v2752, 4
        %v2754 = vadd.f32 %v2752, %v2753
        %v2755 = vrot.slane %v2754, 2
        %v2756 = vadd.f32 %v2754, %v2755
        %v2757 = vrot.slane %v2756, 1
        %v2758 = vadd.f32 %v2756, %v2757
        %v2759 = vadd.f32 %v2207, %v2211
        %v2760 = vadd.f32 %v2759, %v2215
        %v2761 = vadd.f32 %v2760, %v2219
        %v2762 = vadd.f32 %v2761, %v2223
        %v2763 = vadd.f32 %v2762, %v2227
        %v2764 = vadd.f32 %v2763, %v2231
        %v2765 = vadd.f32 %v2764, %v2235
        %v2766 = vadd.f32 %v2765, %v2239
        %v2767 = vadd.f32 %v2766, %v2243
        %v2768 = vadd.f32 %v2767, %v2247
        %v2769 = vadd.f32 %v2768, %v2251
        %v2770 = vadd.f32 %v2769, %v2255
        %v2771 = vadd.f32 %v2770, %v2259
        %v2772 = vadd.f32 %v2771, %v2263
        %v2773 = vadd.f32 %v2772, %v2267
        %v2774 = vrot.slane %v2773, 4
        %v2775 = vadd.f32 %v2773, %v2774
        %v2776 = vrot.slane %v2775, 2
        %v2777 = vadd.f32 %v2775, %v2776
        %v2778 = vrot.slane %v2777, 1
        %v2779 = vadd.f32 %v2777, %v2778
        %v2780 = vadd.f32 %v2208, %v2212
        %v2781 = vadd.f32 %v2780, %v2216
        %v2782 = vadd.f32 %v2781, %v2220
        %v2783 = vadd.f32 %v2782, %v2224
        %v2784 = vadd.f32 %v2783, %v2228
        %v2785 = vadd.f32 %v2784, %v2232
        %v2786 = vadd.f32 %v2785, %v2236
        %v2787 = vadd.f32 %v2786, %v2240
        %v2788 = vadd.f32 %v2787, %v2244
        %v2789 = vadd.f32 %v2788, %v2248
        %v2790 = vadd.f32 %v2789, %v2252
        %v2791 = vadd.f32 %v2790, %v2256
        %v2792 = vadd.f32 %v2791, %v2260
        %v2793 = vadd.f32 %v2792, %v2264
        %v2794 = vadd.f32 %v2793, %v2268
        %v2795 = vrot.slane %v2794, 4
        %v2796 = vadd.f32 %v2794, %v2795
        %v2797 = vrot.slane %v2796, 2
        %v2798 = vadd.f32 %v2796, %v2797
        %v2799 = vrot.slane %v2798, 1
        %v2800 = vadd.f32 %v2798, %v2799
        %v2801 = vadd.f32 %v2209, %v2213
        %v2802 = vadd.f32 %v2801, %v2217
        %v2803 = vadd.f32 %v2802, %v2221
        %v2804 = vadd.f32 %v2803, %v2225
        %v2805 = vadd.f32 %v2804, %v2229
        %v2806 = vadd.f32 %v2805, %v2233
        %v2807 = vadd.f32 %v2806, %v2237
        %v2808 = vadd.f32 %v2807, %v2241
        %v2809 = vadd.f32 %v2808, %v2245
        %v2810 = vadd.f32 %v2809, %v2249
        %v2811 = vadd.f32 %v2810, %v2253
        %v2812 = vadd.f32 %v2811, %v2257
        %v2813 = vadd.f32 %v2812, %v2261
        %v2814 = vadd.f32 %v2813, %v2265
        %v2815 = vadd.f32 %v2814, %v2269
        %v2816 = vrot.slane %v2815, 4
        %v2817 = vadd.f32 %v2815, %v2816
        %v2818 = vrot.slane %v2817, 2
        %v2819 = vadd.f32 %v2817, %v2818
        %v2820 = vrot.slane %v2819, 1
        %v2821 = vadd.f32 %v2819, %v2820
        %v2822 = vadd.f32 %v2210, %v2214
        %v2823 = vadd.f32 %v2822, %v2218
        %v2824 = vadd.f32 %v2823, %v2222
        %v2825 = vadd.f32 %v2824, %v2226
        %v2826 = vadd.f32 %v2825, %v2230
        %v2827 = vadd.f32 %v2826, %v2234
        %v2828 = vadd.f32 %v2827, %v2238
        %v2829 = vadd.f32 %v2828, %v2242
        %v2830 = vadd.f32 %v2829, %v2246
        %v2831 = vadd.f32 %v2830, %v2250
        %v2832 = vadd.f32 %v2831, %v2254
        %v2833 = vadd.f32 %v2832, %v2258
        %v2834 = vadd.f32 %v2833, %v2262
        %v2835 = vadd.f32 %v2834, %v2266
        %v2836 = vadd.f32 %v2835, %v2270
        %v2837 = vrot.slane %v2836, 4
        %v2838 = vadd.f32 %v2836, %v2837
        %v2839 = vrot.slane %v2838, 2
        %v2840 = vadd.f32 %v2838, %v2839
        %v2841 = vrot.slane %v2840, 1
        %v2842 = vadd.f32 %v2840, %v2841
        %v2843 = vadd.f32 %v2271, %v2275
        %v2844 = vadd.f32 %v2843, %v2279
        %v2845 = vadd.f32 %v2844, %v2283
        %v2846 = vadd.f32 %v2845, %v2287
        %v2847 = vadd.f32 %v2846, %v2291
        %v2848 = vadd.f32 %v2847, %v2295
        %v2849 = vadd.f32 %v2848, %v2299
        %v2850 = vadd.f32 %v2849, %v2303
        %v2851 = vadd.f32 %v2850, %v2307
        %v2852 = vadd.f32 %v2851, %v2311
        %v2853 = vadd.f32 %v2852, %v2315
        %v2854 = vadd.f32 %v2853, %v2319
        %v2855 = vadd.f32 %v2854, %v2323
        %v2856 = vadd.f32 %v2855, %v2327
        %v2857 = vadd.f32 %v2856, %v2331
        %v2858 = vrot.slane %v2857, 4
        %v2859 = vadd.f32 %v2857, %v2858
        %v2860 = vrot.slane %v2859, 2
        %v2861 = vadd.f32 %v2859, %v2860
        %v2862 = vrot.slane %v2861, 1
        %v2863 = vadd.f32 %v2861, %v2862
        %v2864 = vadd.f32 %v2272, %v2276
        %v2865 = vadd.f32 %v2864, %v2280
        %v2866 = vadd.f32 %v2865, %v2284
        %v2867 = vadd.f32 %v2866, %v2288
        %v2868 = vadd.f32 %v2867, %v2292
        %v2869 = vadd.f32 %v2868, %v2296
        %v2870 = vadd.f32 %v2869, %v2300
        %v2871 = vadd.f32 %v2870, %v2304
        %v2872 = vadd.f32 %v2871, %v2308
        %v2873 = vadd.f32 %v2872, %v2312
        %v2874 = vadd.f32 %v2873, %v2316
        %v2875 = vadd.f32 %v2874, %v2320
        %v2876 = vadd.f32 %v2875, %v2324
        %v2877 = vadd.f32 %v2876, %v2328
        %v2878 = vadd.f32 %v2877, %v2332
        %v2879 = vrot.slane %v2878, 4
        %v2880 = vadd.f32 %v2878, %v2879
        %v2881 = vrot.slane %v2880, 2
        %v2882 = vadd.f32 %v2880, %v2881
        %v2883 = vrot.slane %v2882, 1
        %v2884 = vadd.f32 %v2882, %v2883
        %v2885 = vadd.f32 %v2273, %v2277
        %v2886 = vadd.f32 %v2885, %v2281
        %v2887 = vadd.f32 %v2886, %v2285
        %v2888 = vadd.f32 %v2887, %v2289
        %v2889 = vadd.f32 %v2888, %v2293
        %v2890 = vadd.f32 %v2889, %v2297
        %v2891 = vadd.f32 %v2890, %v2301
        %v2892 = vadd.f32 %v2891, %v2305
        %v2893 = vadd.f32 %v2892, %v2309
        %v2894 = vadd.f32 %v2893, %v2313
        %v2895 = vadd.f32 %v2894, %v2317
        %v2896 = vadd.f32 %v2895, %v2321
        %v2897 = vadd.f32 %v2896, %v2325
        %v2898 = vadd.f32 %v2897, %v2329
        %v2899 = vadd.f32 %v2898, %v2333
        %v2900 = vrot.slane %v2899, 4
        %v2901 = vadd.f32 %v2899, %v2900
        %v2902 = vrot.slane %v2901, 2
        %v2903 = vadd.f32 %v2901, %v2902
        %v2904 = vrot.slane %v2903, 1
        %v2905 = vadd.f32 %v2903, %v2904
        %v2906 = vadd.f32 %v2274, %v2278
        %v2907 = vadd.f32 %v2906, %v2282
        %v2908 = vadd.f32 %v2907, %v2286
        %v2909 = vadd.f32 %v2908, %v2290
        %v2910 = vadd.f32 %v2909, %v2294
        %v2911 = vadd.f32 %v2910, %v2298
        %v2912 = vadd.f32 %v2911, %v2302
        %v2913 = vadd.f32 %v2912, %v2306
        %v2914 = vadd.f32 %v2913, %v2310
        %v2915 = vadd.f32 %v2914, %v2314
        %v2916 = vadd.f32 %v2915, %v2318
        %v2917 = vadd.f32 %v2916, %v2322
        %v2918 = vadd.f32 %v2917, %v2326
        %v2919 = vadd.f32 %v2918, %v2330
        %v2920 = vadd.f32 %v2919, %v2334
        %v2921 = vrot.slane %v2920, 4
        %v2922 = vadd.f32 %v2920, %v2921
        %v2923 = vrot.slane %v2922, 2
        %v2924 = vadd.f32 %v2922, %v2923
        %v2925 = vrot.slane %v2924, 1
        %v2926 = vadd.f32 %v2924, %v2925
        %v2927 = vadd.f32 %v2335, %v2339
        %v2928 = vadd.f32 %v2927, %v2343
        %v2929 = vadd.f32 %v2928, %v2347
        %v2930 = vadd.f32 %v2929, %v2351
        %v2931 = vadd.f32 %v2930, %v2355
        %v2932 = vadd.f32 %v2931, %v2359
        %v2933 = vadd.f32 %v2932, %v2363
        %v2934 = vadd.f32 %v2933, %v2367
        %v2935 = vadd.f32 %v2934, %v2371
        %v2936 = vadd.f32 %v2935, %v2375
        %v2937 = vadd.f32 %v2936, %v2379
        %v2938 = vadd.f32 %v2937, %v2383
        %v2939 = vadd.f32 %v2938, %v2387
        %v2940 = vadd.f32 %v2939, %v2391
        %v2941 = vadd.f32 %v2940, %v2395
        %v2942 = vrot.slane %v2941, 4
        %v2943 = vadd.f32 %v2941, %v2942
        %v2944 = vrot.slane %v2943, 2
        %v2945 = vadd.f32 %v2943, %v2944
        %v2946 = vrot.slane %v2945, 1
        %v2947 = vadd.f32 %v2945, %v2946
        %v2948 = vadd.f32 %v2336, %v2340
        %v2949 = vadd.f32 %v2948, %v2344
        %v2950 = vadd.f32 %v2949, %v2348
        %v2951 = vadd.f32 %v2950, %v2352
        %v2952 = vadd.f32 %v2951, %v2356
        %v2953 = vadd.f32 %v2952, %v2360
        %v2954 = vadd.f32 %v2953, %v2364
        %v2955 = vadd.f32 %v2954, %v2368
        %v2956 = vadd.f32 %v2955, %v2372
        %v2957 = vadd.f32 %v2956, %v2376
        %v2958 = vadd.f32 %v2957, %v2380
        %v2959 = vadd.f32 %v2958, %v2384
        %v2960 = vadd.f32 %v2959, %v2388
        %v2961 = vadd.f32 %v2960, %v2392
        %v2962 = vadd.f32 %v2961, %v2396
        %v2963 = vrot.slane %v2962, 4
        %v2964 = vadd.f32 %v2962, %v2963
        %v2965 = vrot.slane %v2964, 2
        %v2966 = vadd.f32 %v2964, %v2965
        %v2967 = vrot.slane %v2966, 1
        %v2968 = vadd.f32 %v2966, %v2967
        %v2969 = vadd.f32 %v2337, %v2341
        %v2970 = vadd.f32 %v2969, %v2345
        %v2971 = vadd.f32 %v2970, %v2349
        %v2972 = vadd.f32 %v2971, %v2353
        %v2973 = vadd.f32 %v2972, %v2357
        %v2974 = vadd.f32 %v2973, %v2361
        %v2975 = vadd.f32 %v2974, %v2365
        %v2976 = vadd.f32 %v2975, %v2369
        %v2977 = vadd.f32 %v2976, %v2373
        %v2978 = vadd.f32 %v2977, %v2377
        %v2979 = vadd.f32 %v2978, %v2381
        %v2980 = vadd.f32 %v2979, %v2385
        %v2981 = vadd.f32 %v2980, %v2389
        %v2982 = vadd.f32 %v2981, %v2393
        %v2983 = vadd.f32 %v2982, %v2397
        %v2984 = vrot.slane %v2983, 4
        %v2985 = vadd.f32 %v2983, %v2984
        %v2986 = vrot.slane %v2985, 2
        %v2987 = vadd.f32 %v2985, %v2986
        %v2988 = vrot.slane %v2987, 1
        %v2989 = vadd.f32 %v2987, %v2988
        %v2990 = vadd.f32 %v2338, %v2342
        %v2991 = vadd.f32 %v2990, %v2346
        %v2992 = vadd.f32 %v2991, %v2350
        %v2993 = vadd.f32 %v2992, %v2354
        %v2994 = vadd.f32 %v2993, %v2358
        %v2995 = vadd.f32 %v2994, %v2362
        %v2996 = vadd.f32 %v2995, %v2366
        %v2997 = vadd.f32 %v2996, %v2370
        %v2998 = vadd.f32 %v2997, %v2374
        %v2999 = vadd.f32 %v2998, %v2378
        %v3000 = vadd.f32 %v2999, %v2382
        %v3001 = vadd.f32 %v3000, %v2386
        %v3002 = vadd.f32 %v3001, %v2390
        %v3003 = vadd.f32 %v3002, %v2394
        %v3004 = vadd.f32 %v3003, %v2398
        %v3005 = vrot.slane %v3004, 4
        %v3006 = vadd.f32 %v3004, %v3005
        %v3007 = vrot.slane %v3006, 2
        %v3008 = vadd.f32 %v3006, %v3007
        %v3009 = vrot.slane %v3008, 1
        %v3010 = vadd.f32 %v3008, %v3009
        %v3011 = vadd.f32 %v2399, %v2403
        %v3012 = vadd.f32 %v3011, %v2407
        %v3013 = vadd.f32 %v3012, %v2411
        %v3014 = vadd.f32 %v3013, %v2415
        %v3015 = vadd.f32 %v3014, %v2419
        %v3016 = vadd.f32 %v3015, %v2423
        %v3017 = vadd.f32 %v3016, %v2427
        %v3018 = vadd.f32 %v3017, %v2431
        %v3019 = vadd.f32 %v3018, %v2435
        %v3020 = vadd.f32 %v3019, %v2439
        %v3021 = vadd.f32 %v3020, %v2443
        %v3022 = vadd.f32 %v3021, %v2447
        %v3023 = vadd.f32 %v3022, %v2451
        %v3024 = vadd.f32 %v3023, %v2455
        %v3025 = vadd.f32 %v3024, %v2459
        %v3026 = vrot.slane %v3025, 4
        %v3027 = vadd.f32 %v3025, %v3026
        %v3028 = vrot.slane %v3027, 2
        %v3029 = vadd.f32 %v3027, %v3028
        %v3030 = vrot.slane %v3029, 1
        %v3031 = vadd.f32 %v3029, %v3030
        %v3032 = vadd.f32 %v2400, %v2404
        %v3033 = vadd.f32 %v3032, %v2408
        %v3034 = vadd.f32 %v3033, %v2412
        %v3035 = vadd.f32 %v3034, %v2416
        %v3036 = vadd.f32 %v3035, %v2420
        %v3037 = vadd.f32 %v3036, %v2424
        %v3038 = vadd.f32 %v3037, %v2428
        %v3039 = vadd.f32 %v3038, %v2432
        %v3040 = vadd.f32 %v3039, %v2436
        %v3041 = vadd.f32 %v3040, %v2440
        %v3042 = vadd.f32 %v3041, %v2444
        %v3043 = vadd.f32 %v3042, %v2448
        %v3044 = vadd.f32 %v3043, %v2452
        %v3045 = vadd.f32 %v3044, %v2456
        %v3046 = vadd.f32 %v3045, %v2460
        %v3047 = vrot.slane %v3046, 4
        %v3048 = vadd.f32 %v3046, %v3047
        %v3049 = vrot.slane %v3048, 2
        %v3050 = vadd.f32 %v3048, %v3049
        %v3051 = vrot.slane %v3050, 1
        %v3052 = vadd.f32 %v3050, %v3051
        %v3053 = vadd.f32 %v2401, %v2405
        %v3054 = vadd.f32 %v3053, %v2409
        %v3055 = vadd.f32 %v3054, %v2413
        %v3056 = vadd.f32 %v3055, %v2417
        %v3057 = vadd.f32 %v3056, %v2421
        %v3058 = vadd.f32 %v3057, %v2425
        %v3059 = vadd.f32 %v3058, %v2429
        %v3060 = vadd.f32 %v3059, %v2433
        %v3061 = vadd.f32 %v3060, %v2437
        %v3062 = vadd.f32 %v3061, %v2441
        %v3063 = vadd.f32 %v3062, %v2445
        %v3064 = vadd.f32 %v3063, %v2449
        %v3065 = vadd.f32 %v3064, %v2453
        %v3066 = vadd.f32 %v3065, %v2457
        %v3067 = vadd.f32 %v3066, %v2461
        %v3068 = vrot.slane %v3067, 4
        %v3069 = vadd.f32 %v3067, %v3068
        %v3070 = vrot.slane %v3069, 2
        %v3071 = vadd.f32 %v3069, %v3070
        %v3072 = vrot.slane %v3071, 1
        %v3073 = vadd.f32 %v3071, %v3072
        %v3074 = vadd.f32 %v2402, %v2406
        %v3075 = vadd.f32 %v3074, %v2410
        %v3076 = vadd.f32 %v3075, %v2414
        %v3077 = vadd.f32 %v3076, %v2418
        %v3078 = vadd.f32 %v3077, %v2422
        %v3079 = vadd.f32 %v3078, %v2426
        %v3080 = vadd.f32 %v3079, %v2430
        %v3081 = vadd.f32 %v3080, %v2434
        %v3082 = vadd.f32 %v3081, %v2438
        %v3083 = vadd.f32 %v3082, %v2442
        %v3084 = vadd.f32 %v3083, %v2446
        %v3085 = vadd.f32 %v3084, %v2450
        %v3086 = vadd.f32 %v3085, %v2454
        %v3087 = vadd.f32 %v3086, %v2458
        %v3088 = vadd.f32 %v3087, %v2462
        %v3089 = vrot.slane %v3088, 4
        %v3090 = vadd.f32 %v3088, %v3089
        %v3091 = vrot.slane %v3090, 2
        %v3092 = vadd.f32 %v3090, %v3091
        %v3093 = vrot.slane %v3092, 1
        %v3094 = vadd.f32 %v3092, %v3093
        %v3095 = vadd.f32 %v2463, %v2467
        %v3096 = vadd.f32 %v3095, %v2471
        %v3097 = vadd.f32 %v3096, %v2475
        %v3098 = vadd.f32 %v3097, %v2479
        %v3099 = vadd.f32 %v3098, %v2483
        %v3100 = vadd.f32 %v3099, %v2487
        %v3101 = vadd.f32 %v3100, %v2491
        %v3102 = vadd.f32 %v3101, %v2495
        %v3103 = vadd.f32 %v3102, %v2499
        %v3104 = vadd.f32 %v3103, %v2503
        %v3105 = vadd.f32 %v3104, %v2507
        %v3106 = vadd.f32 %v3105, %v2511
        %v3107 = vadd.f32 %v3106, %v2515
        %v3108 = vadd.f32 %v3107, %v2519
        %v3109 = vadd.f32 %v3108, %v2523
        %v3110 = vrot.slane %v3109, 4
        %v3111 = vadd.f32 %v3109, %v3110
        %v3112 = vrot.slane %v3111, 2
        %v3113 = vadd.f32 %v3111, %v3112
        %v3114 = vrot.slane %v3113, 1
        %v3115 = vadd.f32 %v3113, %v3114
        %v3116 = vadd.f32 %v2464, %v2468
        %v3117 = vadd.f32 %v3116, %v2472
        %v3118 = vadd.f32 %v3117, %v2476
        %v3119 = vadd.f32 %v3118, %v2480
        %v3120 = vadd.f32 %v3119, %v2484
        %v3121 = vadd.f32 %v3120, %v2488
        %v3122 = vadd.f32 %v3121, %v2492
        %v3123 = vadd.f32 %v3122, %v2496
        %v3124 = vadd.f32 %v3123, %v2500
        %v3125 = vadd.f32 %v3124, %v2504
        %v3126 = vadd.f32 %v3125, %v2508
        %v3127 = vadd.f32 %v3126, %v2512
        %v3128 = vadd.f32 %v3127, %v2516
        %v3129 = vadd.f32 %v3128, %v2520
        %v3130 = vadd.f32 %v3129, %v2524
        %v3131 = vrot.slane %v3130, 4
        %v3132 = vadd.f32 %v3130, %v3131
        %v3133 = vrot.slane %v3132, 2
        %v3134 = vadd.f32 %v3132, %v3133
        %v3135 = vrot.slane %v3134, 1
        %v3136 = vadd.f32 %v3134, %v3135
        %v3137 = vadd.f32 %v2465, %v2469
        %v3138 = vadd.f32 %v3137, %v2473
        %v3139 = vadd.f32 %v3138, %v2477
        %v3140 = vadd.f32 %v3139, %v2481
        %v3141 = vadd.f32 %v3140, %v2485
        %v3142 = vadd.f32 %v3141, %v2489
        %v3143 = vadd.f32 %v3142, %v2493
        %v3144 = vadd.f32 %v3143, %v2497
        %v3145 = vadd.f32 %v3144, %v2501
        %v3146 = vadd.f32 %v3145, %v2505
        %v3147 = vadd.f32 %v3146, %v2509
        %v3148 = vadd.f32 %v3147, %v2513
        %v3149 = vadd.f32 %v3148, %v2517
        %v3150 = vadd.f32 %v3149, %v2521
        %v3151 = vadd.f32 %v3150, %v2525
        %v3152 = vrot.slane %v3151, 4
        %v3153 = vadd.f32 %v3151, %v3152
        %v3154 = vrot.slane %v3153, 2
        %v3155 = vadd.f32 %v3153, %v3154
        %v3156 = vrot.slane %v3155, 1
        %v3157 = vadd.f32 %v3155, %v3156
        %v3158 = vadd.f32 %v2466, %v2470
        %v3159 = vadd.f32 %v3158, %v2474
        %v3160 = vadd.f32 %v3159, %v2478
        %v3161 = vadd.f32 %v3160, %v2482
        %v3162 = vadd.f32 %v3161, %v2486
        %v3163 = vadd.f32 %v3162, %v2490
        %v3164 = vadd.f32 %v3163, %v2494
        %v3165 = vadd.f32 %v3164, %v2498
        %v3166 = vadd.f32 %v3165, %v2502
        %v3167 = vadd.f32 %v3166, %v2506
        %v3168 = vadd.f32 %v3167, %v2510
        %v3169 = vadd.f32 %v3168, %v2514
        %v3170 = vadd.f32 %v3169, %v2518
        %v3171 = vadd.f32 %v3170, %v2522
        %v3172 = vadd.f32 %v3171, %v2526
        %v3173 = vrot.slane %v3172, 4
        %v3174 = vadd.f32 %v3172, %v3173
        %v3175 = vrot.slane %v3174, 2
        %v3176 = vadd.f32 %v3174, %v3175
        %v3177 = vrot.slane %v3176, 1
        %v3178 = vadd.f32 %v3176, %v3177
        %v3179 = vadd.f32 %v2527, %v2531
        %v3180 = vadd.f32 %v3179, %v2535
        %v3181 = vadd.f32 %v3180, %v2539
        %v3182 = vadd.f32 %v3181, %v2543
        %v3183 = vadd.f32 %v3182, %v2547
        %v3184 = vadd.f32 %v3183, %v2551
        %v3185 = vadd.f32 %v3184, %v2555
        %v3186 = vadd.f32 %v3185, %v2559
        %v3187 = vadd.f32 %v3186, %v2563
        %v3188 = vadd.f32 %v3187, %v2567
        %v3189 = vadd.f32 %v3188, %v2571
        %v3190 = vadd.f32 %v3189, %v2575
        %v3191 = vadd.f32 %v3190, %v2579
        %v3192 = vadd.f32 %v3191, %v2583
        %v3193 = vadd.f32 %v3192, %v2587
        %v3194 = vrot.slane %v3193, 4
        %v3195 = vadd.f32 %v3193, %v3194
        %v3196 = vrot.slane %v3195, 2
        %v3197 = vadd.f32 %v3195, %v3196
        %v3198 = vrot.slane %v3197, 1
        %v3199 = vadd.f32 %v3197, %v3198
        %v3200 = vadd.f32 %v2528, %v2532
        %v3201 = vadd.f32 %v3200, %v2536
        %v3202 = vadd.f32 %v3201, %v2540
        %v3203 = vadd.f32 %v3202, %v2544
        %v3204 = vadd.f32 %v3203, %v2548
        %v3205 = vadd.f32 %v3204, %v2552
        %v3206 = vadd.f32 %v3205, %v2556
        %v3207 = vadd.f32 %v3206, %v2560
        %v3208 = vadd.f32 %v3207, %v2564
        %v3209 = vadd.f32 %v3208, %v2568
        %v3210 = vadd.f32 %v3209, %v2572
        %v3211 = vadd.f32 %v3210, %v2576
        %v3212 = vadd.f32 %v3211, %v2580
        %v3213 = vadd.f32 %v3212, %v2584
        %v3214 = vadd.f32 %v3213, %v2588
        %v3215 = vrot.slane %v3214, 4
        %v3216 = vadd.f32 %v3214, %v3215
        %v3217 = vrot.slane %v3216, 2
        %v3218 = vadd.f32 %v3216, %v3217
        %v3219 = vrot.slane %v3218, 1
        %v3220 = vadd.f32 %v3218, %v3219
        %v3221 = vadd.f32 %v2529, %v2533
        %v3222 = vadd.f32 %v3221, %v2537
        %v3223 = vadd.f32 %v3222, %v2541
        %v3224 = vadd.f32 %v3223, %v2545
        %v3225 = vadd.f32 %v3224, %v2549
        %v3226 = vadd.f32 %v3225, %v2553
        %v3227 = vadd.f32 %v3226, %v2557
        %v3228 = vadd.f32 %v3227, %v2561
        %v3229 = vadd.f32 %v3228, %v2565
        %v3230 = vadd.f32 %v3229, %v2569
        %v3231 = vadd.f32 %v3230, %v2573
        %v3232 = vadd.f32 %v3231, %v2577
        %v3233 = vadd.f32 %v3232, %v2581
        %v3234 = vadd.f32 %v3233, %v2585
        %v3235 = vadd.f32 %v3234, %v2589
        %v3236 = vrot.slane %v3235, 4
        %v3237 = vadd.f32 %v3235, %v3236
        %v3238 = vrot.slane %v3237, 2
        %v3239 = vadd.f32 %v3237, %v3238
        %v3240 = vrot.slane %v3239, 1
        %v3241 = vadd.f32 %v3239, %v3240
        %v3242 = vadd.f32 %v2530, %v2534
        %v3243 = vadd.f32 %v3242, %v2538
        %v3244 = vadd.f32 %v3243, %v2542
        %v3245 = vadd.f32 %v3244, %v2546
        %v3246 = vadd.f32 %v3245, %v2550
        %v3247 = vadd.f32 %v3246, %v2554
        %v3248 = vadd.f32 %v3247, %v2558
        %v3249 = vadd.f32 %v3248, %v2562
        %v3250 = vadd.f32 %v3249, %v2566
        %v3251 = vadd.f32 %v3250, %v2570
        %v3252 = vadd.f32 %v3251, %v2574
        %v3253 = vadd.f32 %v3252, %v2578
        %v3254 = vadd.f32 %v3253, %v2582
        %v3255 = vadd.f32 %v3254, %v2586
        %v3256 = vadd.f32 %v3255, %v2590
        %v3257 = vrot.slane %v3256, 4
        %v3258 = vadd.f32 %v3256, %v3257
        %v3259 = vrot.slane %v3258, 2
        %v3260 = vadd.f32 %v3258, %v3259
        %v3261 = vrot.slane %v3260, 1
        %v3262 = vadd.f32 %v3260, %v3261
        %vm3295 = vcmask 1041409
        %v3296 = vsel %vm3295, %v2695, %v2611
        %vm3297 = vcmask 1042434
        %v3298 = vsel %vm3297, %v2779, %v3296
        %vm3299 = vcmask 1043459
        %v3300 = vsel %vm3299, %v2863, %v3298
        %vm3301 = vcmask 1044484
        %v3302 = vsel %vm3301, %v2947, %v3300
        %vm3303 = vcmask 1045509
        %v3304 = vsel %vm3303, %v3031, %v3302
        %vm3305 = vcmask 1046534
        %v3306 = vsel %vm3305, %v3115, %v3304
        %vm3307 = vcmask 1047559
        %v3308 = vsel %vm3307, %v3199, %v3306
        %v3309 = vsel %vm3295, %v2716, %v2632
        %v3310 = vsel %vm3297, %v2800, %v3309
        %v3311 = vsel %vm3299, %v2884, %v3310
        %v3312 = vsel %vm3301, %v2968, %v3311
        %v3313 = vsel %vm3303, %v3052, %v3312
        %v3314 = vsel %vm3305, %v3136, %v3313
        %v3315 = vsel %vm3307, %v3220, %v3314
        %v3316 = vsel %vm3295, %v2737, %v2653
        %v3317 = vsel %vm3297, %v2821, %v3316
        %v3318 = vsel %vm3299, %v2905, %v3317
        %v3319 = vsel %vm3301, %v2989, %v3318
        %v3320 = vsel %vm3303, %v3073, %v3319
        %v3321 = vsel %vm3305, %v3157, %v3320
        %v3322 = vsel %vm3307, %v3241, %v3321
        %v3323 = vsel %vm3295, %v2758, %v2674
        %v3324 = vsel %vm3297, %v2842, %v3323
        %v3325 = vsel %vm3299, %v2926, %v3324
        %v3326 = vsel %vm3301, %v3010, %v3325
        %v3327 = vsel %vm3303, %v3094, %v3326
        %v3328 = vsel %vm3305, %v3178, %v3327
        %v3329 = vsel %vm3307, %v3262, %v3328
        %v3334 = vadd.f32 %v3308, %v3315
        %v3335 = vadd.f32 %v3334, %v3322
        %v3336 = vadd.f32 %v3335, %v3329
        %3337 = vadd.xlane.f32.xlu0 %v3336
        %v3338 = vpop.xlane.xlu0 %3337
        %v3339 = vmax.f32 %v3338, 1.0
        %v3340 = vpack.c.bf16 %v2611, %v2611
        %v3341 = vpack.c.bf16 %v2632, %v2632
        %v3342 = vpack.c.bf16 %v2653, %v2653
        %v3343 = vpack.c.bf16 %v2674, %v2674
        %v3344 = vpack.c.bf16 %v2695, %v2695
        %v3345 = vpack.c.bf16 %v2716, %v2716
        %v3346 = vpack.c.bf16 %v2737, %v2737
        %v3347 = vpack.c.bf16 %v2758, %v2758
        %v3348 = vpack.c.bf16 %v2779, %v2779
        %v3349 = vpack.c.bf16 %v2800, %v2800
        %v3350 = vpack.c.bf16 %v2821, %v2821
        %v3351 = vpack.c.bf16 %v2842, %v2842
        %v3352 = vpack.c.bf16 %v2863, %v2863
        %v3353 = vpack.c.bf16 %v2884, %v2884
        %v3354 = vpack.c.bf16 %v2905, %v2905
        %v3355 = vpack.c.bf16 %v2926, %v2926
        %v3356 = vpack.c.bf16 %v2947, %v2947
        %v3357 = vpack.c.bf16 %v2968, %v2968
        %v3358 = vpack.c.bf16 %v2989, %v2989
        %v3359 = vpack.c.bf16 %v3010, %v3010
        %v3360 = vpack.c.bf16 %v3031, %v3031
        %v3361 = vpack.c.bf16 %v3052, %v3052
        %v3362 = vpack.c.bf16 %v3073, %v3073
        %v3363 = vpack.c.bf16 %v3094, %v3094
        %v3364 = vpack.c.bf16 %v3115, %v3115
        %v3365 = vpack.c.bf16 %v3136, %v3136
        %v3366 = vpack.c.bf16 %v3157, %v3157
        %v3367 = vpack.c.bf16 %v3178, %v3178
        %v3368 = vpack.c.bf16 %v3199, %v3199
        %v3369 = vpack.c.bf16 %v3220, %v3220
        %v3370 = vpack.c.bf16 %v3241, %v3241
        %v3371 = vpack.c.bf16 %v3262, %v3262
        %v3372 = vld [vmem:[#allocation2] sm:$0xf]
        %v3373 = vld [vmem:[#allocation2 + $0x4] sm:$0xf]
        %v3374 = vld [vmem:[#allocation2 + $0x8] sm:$0xf]
        %v3375 = vld [vmem:[#allocation2 + $0xc] sm:$0xf]
        %v3376 = vld [vmem:[#allocation2 + $0x10] sm:$0xf]
        %v3377 = vld [vmem:[#allocation2 + $0x14] sm:$0xf]
        %v3378 = vld [vmem:[#allocation2 + $0x18] sm:$0xf]
        %v3379 = vld [vmem:[#allocation2 + $0x1c] sm:$0xf]
        %v3380 = vld [vmem:[#allocation2 + $0x20] sm:$0xf]
        %v3381 = vld [vmem:[#allocation2 + $0x24] sm:$0xf]
        %v3382 = vld [vmem:[#allocation2 + $0x28] sm:$0xf]
        %v3383 = vld [vmem:[#allocation2 + $0x2c] sm:$0xf]
        %v3384 = vld [vmem:[#allocation2 + $0x30] sm:$0xf]
        %v3385 = vld [vmem:[#allocation2 + $0x34] sm:$0xf]
        %v3386 = vld [vmem:[#allocation2 + $0x38] sm:$0xf]
        %v3387 = vld [vmem:[#allocation2 + $0x3c] sm:$0xf]
        %v3388 = vld [vmem:[#allocation2 + $0x40] sm:$0xf]
        %v3389 = vld [vmem:[#allocation2 + $0x44] sm:$0xf]
        %v3390 = vld [vmem:[#allocation2 + $0x48] sm:$0xf]
        %v3391 = vld [vmem:[#allocation2 + $0x4c] sm:$0xf]
        %v3392 = vld [vmem:[#allocation2 + $0x50] sm:$0xf]
        %v3393 = vld [vmem:[#allocation2 + $0x54] sm:$0xf]
        %v3394 = vld [vmem:[#allocation2 + $0x58] sm:$0xf]
        %v3395 = vld [vmem:[#allocation2 + $0x5c] sm:$0xf]
        %v3396 = vld [vmem:[#allocation2 + $0x60] sm:$0xf]
        %v3397 = vld [vmem:[#allocation2 + $0x64] sm:$0xf]
        %v3398 = vld [vmem:[#allocation2 + $0x68] sm:$0xf]
        %v3399 = vld [vmem:[#allocation2 + $0x6c] sm:$0xf]
        %v3400 = vld [vmem:[#allocation2 + $0x70] sm:$0xf]
        %v3401 = vld [vmem:[#allocation2 + $0x74] sm:$0xf]
        %v3402 = vld [vmem:[#allocation2 + $0x78] sm:$0xf]
        %v3403 = vld [vmem:[#allocation2 + $0x7c] sm:$0xf]
        %v3404 = vld [vmem:[#allocation2 + $0x80] sm:$0xf]
        %v3405 = vld [vmem:[#allocation2 + $0x84] sm:$0xf]
        %v3406 = vld [vmem:[#allocation2 + $0x88] sm:$0xf]
        %v3407 = vld [vmem:[#allocation2 + $0x8c] sm:$0xf]
        %v3408 = vld [vmem:[#allocation2 + $0x90] sm:$0xf]
        %v3409 = vld [vmem:[#allocation2 + $0x94] sm:$0xf]
        %v3410 = vld [vmem:[#allocation2 + $0x98] sm:$0xf]
        %v3411 = vld [vmem:[#allocation2 + $0x9c] sm:$0xf]
        %v3412 = vld [vmem:[#allocation2 + $0xa0] sm:$0xf]
        %v3413 = vld [vmem:[#allocation2 + $0xa4] sm:$0xf]
        %v3414 = vld [vmem:[#allocation2 + $0xa8] sm:$0xf]
        %v3415 = vld [vmem:[#allocation2 + $0xac] sm:$0xf]
        %v3416 = vld [vmem:[#allocation2 + $0xb0] sm:$0xf]
        %v3417 = vld [vmem:[#allocation2 + $0xb4] sm:$0xf]
        %v3418 = vld [vmem:[#allocation2 + $0xb8] sm:$0xf]
        %v3419 = vld [vmem:[#allocation2 + $0xbc] sm:$0xf]
        %v3420 = vld [vmem:[#allocation2 + $0xc0] sm:$0xf]
        %v3421 = vld [vmem:[#allocation2 + $0xc4] sm:$0xf]
        %v3422 = vld [vmem:[#allocation2 + $0xc8] sm:$0xf]
        %v3423 = vld [vmem:[#allocation2 + $0xcc] sm:$0xf]
        %v3424 = vld [vmem:[#allocation2 + $0xd0] sm:$0xf]
        %v3425 = vld [vmem:[#allocation2 + $0xd4] sm:$0xf]
        %v3426 = vld [vmem:[#allocation2 + $0xd8] sm:$0xf]
        %v3427 = vld [vmem:[#allocation2 + $0xdc] sm:$0xf]
        %v3428 = vld [vmem:[#allocation2 + $0xe0] sm:$0xf]
        %v3429 = vld [vmem:[#allocation2 + $0xe4] sm:$0xf]
        %v3430 = vld [vmem:[#allocation2 + $0xe8] sm:$0xf]
        %v3431 = vld [vmem:[#allocation2 + $0xec] sm:$0xf]
        %v3432 = vld [vmem:[#allocation2 + $0xf0] sm:$0xf]
        %v3433 = vld [vmem:[#allocation2 + $0xf4] sm:$0xf]
        %v3434 = vld [vmem:[#allocation2 + $0xf8] sm:$0xf]
        %v3435 = vld [vmem:[#allocation2 + $0xfc] sm:$0xf]
        %v3468 = vunpack.c.l.b16 %v3340
        %v3469 = vunpack.c.l.b16 %v3341
        %v3470 = vunpack.c.l.b16 %v3342
        %v3471 = vunpack.c.l.b16 %v3343
        %v3472 = vunpack.c.l.b16 %v3344
        %v3473 = vunpack.c.l.b16 %v3345
        %v3474 = vunpack.c.l.b16 %v3346
        %v3475 = vunpack.c.l.b16 %v3347
        %v3476 = vunpack.c.l.b16 %v3348
        %v3477 = vunpack.c.l.b16 %v3349
        %v3478 = vunpack.c.l.b16 %v3350
        %v3479 = vunpack.c.l.b16 %v3351
        %v3480 = vunpack.c.l.b16 %v3352
        %v3481 = vunpack.c.l.b16 %v3353
        %v3482 = vunpack.c.l.b16 %v3354
        %v3483 = vunpack.c.l.b16 %v3355
        %v3484 = vunpack.c.l.b16 %v3356
        %v3485 = vunpack.c.l.b16 %v3357
        %v3486 = vunpack.c.l.b16 %v3358
        %v3487 = vunpack.c.l.b16 %v3359
        %v3488 = vunpack.c.l.b16 %v3360
        %v3489 = vunpack.c.l.b16 %v3361
        %v3490 = vunpack.c.l.b16 %v3362
        %v3491 = vunpack.c.l.b16 %v3363
        %v3492 = vunpack.c.l.b16 %v3364
        %v3493 = vunpack.c.l.b16 %v3365
        %v3494 = vunpack.c.l.b16 %v3366
        %v3495 = vunpack.c.l.b16 %v3367
        %v3496 = vunpack.c.l.b16 %v3368
        %v3497 = vunpack.c.l.b16 %v3369
        %v3498 = vunpack.c.l.b16 %v3370
        %v3499 = vunpack.c.l.b16 %v3371
        %v3500 = vsel %vm3295, %v3472, %v3468
        %v3501 = vsel %vm3297, %v3476, %v3500
        %v3502 = vsel %vm3299, %v3480, %v3501
        %v3503 = vsel %vm3301, %v3484, %v3502
        %v3504 = vsel %vm3303, %v3488, %v3503
        %v3505 = vsel %vm3305, %v3492, %v3504
        %v3506 = vsel %vm3307, %v3496, %v3505
        %v3507 = vsel %vm3295, %v3473, %v3469
        %v3508 = vsel %vm3297, %v3477, %v3507
        %v3509 = vsel %vm3299, %v3481, %v3508
        %v3510 = vsel %vm3301, %v3485, %v3509
        %v3511 = vsel %vm3303, %v3489, %v3510
        %v3512 = vsel %vm3305, %v3493, %v3511
        %v3513 = vsel %vm3307, %v3497, %v3512
        %v3514 = vsel %vm3295, %v3474, %v3470
        %v3515 = vsel %vm3297, %v3478, %v3514
        %v3516 = vsel %vm3299, %v3482, %v3515
        %v3517 = vsel %vm3301, %v3486, %v3516
        %v3518 = vsel %vm3303, %v3490, %v3517
        %v3519 = vsel %vm3305, %v3494, %v3518
        %v3520 = vsel %vm3307, %v3498, %v3519
        %v3521 = vsel %vm3295, %v3475, %v3471
        %v3522 = vsel %vm3297, %v3479, %v3521
        %v3523 = vsel %vm3299, %v3483, %v3522
        %v3524 = vsel %vm3301, %v3487, %v3523
        %v3525 = vsel %vm3303, %v3491, %v3524
        %v3526 = vsel %vm3305, %v3495, %v3525
        %v3527 = vsel %vm3307, %v3499, %v3526
        %v3528 = vpack.c.b16 %v3506, %v3506
        %v3529 = vpack.c.b16 %v3513, %v3513
        %v3530 = vpack.c.b16 %v3520, %v3520
        %v3531 = vpack.c.b16 %v3527, %v3527
        %v3600 = vunpack.c.l.b16 %v3372
        %v3601 = vunpack.c.l.b16 %v3373
        %v3602 = vunpack.c.l.b16 %v3374
        %v3603 = vunpack.c.l.b16 %v3375
        %v3604 = vunpack.c.l.b16 %v3376
        %v3605 = vunpack.c.l.b16 %v3377
        %v3606 = vunpack.c.l.b16 %v3378
        %v3607 = vunpack.c.l.b16 %v3379
        %v3608 = vunpack.c.l.b16 %v3380
        %v3609 = vunpack.c.l.b16 %v3381
        %v3610 = vunpack.c.l.b16 %v3382
        %v3611 = vunpack.c.l.b16 %v3383
        %v3612 = vunpack.c.l.b16 %v3384
        %v3613 = vunpack.c.l.b16 %v3385
        %v3614 = vunpack.c.l.b16 %v3386
        %v3615 = vunpack.c.l.b16 %v3387
        %v3616 = vunpack.c.l.b16 %v3388
        %v3617 = vunpack.c.l.b16 %v3389
        %v3618 = vunpack.c.l.b16 %v3390
        %v3619 = vunpack.c.l.b16 %v3391
        %v3620 = vunpack.c.l.b16 %v3392
        %v3621 = vunpack.c.l.b16 %v3393
        %v3622 = vunpack.c.l.b16 %v3394
        %v3623 = vunpack.c.l.b16 %v3395
        %v3624 = vunpack.c.l.b16 %v3396
        %v3625 = vunpack.c.l.b16 %v3397
        %v3626 = vunpack.c.l.b16 %v3398
        %v3627 = vunpack.c.l.b16 %v3399
        %v3628 = vunpack.c.l.b16 %v3400
        %v3629 = vunpack.c.l.b16 %v3401
        %v3630 = vunpack.c.l.b16 %v3402
        %v3631 = vunpack.c.l.b16 %v3403
        %v3632 = vunpack.c.l.b16 %v3404
        %v3633 = vunpack.c.l.b16 %v3405
        %v3634 = vunpack.c.l.b16 %v3406
        %v3635 = vunpack.c.l.b16 %v3407
        %v3636 = vunpack.c.l.b16 %v3408
        %v3637 = vunpack.c.l.b16 %v3409
        %v3638 = vunpack.c.l.b16 %v3410
        %v3639 = vunpack.c.l.b16 %v3411
        %v3640 = vunpack.c.l.b16 %v3412
        %v3641 = vunpack.c.l.b16 %v3413
        %v3642 = vunpack.c.l.b16 %v3414
        %v3643 = vunpack.c.l.b16 %v3415
        %v3644 = vunpack.c.l.b16 %v3416
        %v3645 = vunpack.c.l.b16 %v3417
        %v3646 = vunpack.c.l.b16 %v3418
        %v3647 = vunpack.c.l.b16 %v3419
        %v3648 = vunpack.c.l.b16 %v3420
        %v3649 = vunpack.c.l.b16 %v3421
        %v3650 = vunpack.c.l.b16 %v3422
        %v3651 = vunpack.c.l.b16 %v3423
        %v3652 = vunpack.c.l.b16 %v3424
        %v3653 = vunpack.c.l.b16 %v3425
        %v3654 = vunpack.c.l.b16 %v3426
        %v3655 = vunpack.c.l.b16 %v3427
        %v3656 = vunpack.c.l.b16 %v3428
        %v3657 = vunpack.c.l.b16 %v3429
        %v3658 = vunpack.c.l.b16 %v3430
        %v3659 = vunpack.c.l.b16 %v3431
        %v3660 = vunpack.c.l.b16 %v3432
        %v3661 = vunpack.c.l.b16 %v3433
        %v3662 = vunpack.c.l.b16 %v3434
        %v3663 = vunpack.c.l.b16 %v3435
        %v3664 = vpack.c.b16 %v3601, %v3600
        %v3665 = vpack.c.b16 %v3603, %v3602
        %v3666 = vpack.c.b16 %v3605, %v3604
        %v3667 = vpack.c.b16 %v3607, %v3606
        %v3668 = vpack.c.b16 %v3609, %v3608
        %v3669 = vpack.c.b16 %v3611, %v3610
        %v3670 = vpack.c.b16 %v3613, %v3612
        %v3671 = vpack.c.b16 %v3615, %v3614
        %v3672 = vpack.c.b16 %v3617, %v3616
        %v3673 = vpack.c.b16 %v3619, %v3618
        %v3674 = vpack.c.b16 %v3621, %v3620
        %v3675 = vpack.c.b16 %v3623, %v3622
        %v3676 = vpack.c.b16 %v3625, %v3624
        %v3677 = vpack.c.b16 %v3627, %v3626
        %v3678 = vpack.c.b16 %v3629, %v3628
        %v3679 = vpack.c.b16 %v3631, %v3630
        %v3680 = vpack.c.b16 %v3633, %v3632
        %v3681 = vpack.c.b16 %v3635, %v3634
        %v3682 = vpack.c.b16 %v3637, %v3636
        %v3683 = vpack.c.b16 %v3639, %v3638
        %v3684 = vpack.c.b16 %v3641, %v3640
        %v3685 = vpack.c.b16 %v3643, %v3642
        %v3686 = vpack.c.b16 %v3645, %v3644
        %v3687 = vpack.c.b16 %v3647, %v3646
        %v3688 = vpack.c.b16 %v3649, %v3648
        %v3689 = vpack.c.b16 %v3651, %v3650
        %v3690 = vpack.c.b16 %v3653, %v3652
        %v3691 = vpack.c.b16 %v3655, %v3654
        %v3692 = vpack.c.b16 %v3657, %v3656
        %v3693 = vpack.c.b16 %v3659, %v3658
        %v3694 = vpack.c.b16 %v3661, %v3660
        %v3695 = vpack.c.b16 %v3663, %v3662
        %3728 = vmatpush.bf16.msra.mxu0 %v3671
        %3729 = vmatpush.bf16.msra.mxu0 %v3670
        %3730 = vmatpush.bf16.msra.mxu0 %v3669
        %3731 = vmatpush.bf16.msra.mxu0 %v3668
        %3732 = vmatpush.bf16.msra.mxu0 %v3667
        %3733 = vmatpush.bf16.msra.mxu0 %v3666
        %3734 = vmatpush.bf16.msra.mxu0 %v3665
        %3735 = vmatpush.bf16.msra.mxu0 %v3664
        %3736 = vmatmul.bf16.gmra.mxu0 %v3528
        %v3737 = vpop.f32.mrf.mxu0
        %v3738 = vadd.f32 0.0, %v3737
        %v3739 = vpop.f32.mrf.mxu0
        %3740 = vdwg.mxu0
        %3741 = vmatpush.bf16.msra.mxu0 %v3679
        %3742 = vmatpush.bf16.msra.mxu0 %v3678
        %3743 = vmatpush.bf16.msra.mxu0 %v3677
        %3744 = vmatpush.bf16.msra.mxu0 %v3676
        %3745 = vmatpush.bf16.msra.mxu0 %v3675
        %3746 = vmatpush.bf16.msra.mxu0 %v3674
        %3747 = vmatpush.bf16.msra.mxu0 %v3673
        %3748 = vmatpush.bf16.msra.mxu0 %v3672
        %3749 = vmatmul.bf16.gmra.mxu0 %v3529
        %v3750 = vpop.f32.mrf.mxu0
        %v3751 = vadd.f32 %v3738, %v3750
        %v3752 = vpop.f32.mrf.mxu0
        %3753 = vdwg.mxu0
        %3754 = vmatpush.bf16.msra.mxu0 %v3687
        %3755 = vmatpush.bf16.msra.mxu0 %v3686
        %3756 = vmatpush.bf16.msra.mxu0 %v3685
        %3757 = vmatpush.bf16.msra.mxu0 %v3684
        %3758 = vmatpush.bf16.msra.mxu0 %v3683
        %3759 = vmatpush.bf16.msra.mxu0 %v3682
        %3760 = vmatpush.bf16.msra.mxu0 %v3681
        %3761 = vmatpush.bf16.msra.mxu0 %v3680
        %3762 = vmatmul.bf16.gmra.mxu0 %v3530
        %v3763 = vpop.f32.mrf.mxu0
        %v3764 = vadd.f32 %v3751, %v3763
        %v3765 = vpop.f32.mrf.mxu0
        %3766 = vdwg.mxu0
        %3767 = vmatpush.bf16.msra.mxu0 %v3695
        %3768 = vmatpush.bf16.msra.mxu0 %v3694
        %3769 = vmatpush.bf16.msra.mxu0 %v3693
        %3770 = vmatpush.bf16.msra.mxu0 %v3692
        %3771 = vmatpush.bf16.msra.mxu0 %v3691
        %3772 = vmatpush.bf16.msra.mxu0 %v3690
        %3773 = vmatpush.bf16.msra.mxu0 %v3689
        %3774 = vmatpush.bf16.msra.mxu0 %v3688
        %3775 = vmatmul.bf16.gmra.mxu0 %v3531
        %v3776 = vpop.f32.mrf.mxu0
        %v3777 = vadd.f32 %v3764, %v3776
        %v3778 = vpop.f32.mrf.mxu0
        %3779 = vdwg.mxu0
        %v3780 = vrcp.pop %v3339
        %v3781 = vmul.f32 %v3339, %v3780
        %v3782 = vsub.f32 1.0, %v3781
        %v3783 = vmul.f32 %v3780, %v3782
        %v3784 = vadd.f32 %v3780, %v3783
        %vm3785 = vweird.f32 %v3339
        %vm3786 = vweird.f32 %v3780
        %vm3787 = vmor %vm3785, %vm3786
        %v3788 = vsel %vm3787, %v3780, %v3784
        %v3789 = vand.u32 2147483647, %v3339
        %vm3790 = vcmp.eq.f32.partialorder %v3789, 8.507059e+37
        %v3791 = vand.u32 %v3339, 2147483648
        %v3792 = vor.u32 1.1754944e-38, %v3791
        %v3793 = vsel %vm3790, %v3792, %v3788
        %v3794 = vmul.f32 %v3777, %v3793
        %v3795 = vld [vmem:[#allocation5] sm:$0xff]
        %v3796 = vld [vmem:[#allocation5 + $0x8] sm:$0xff]
        %v3797 = vld [vmem:[#allocation5 + $0x10] sm:$0xff]
        %v3798 = vld [vmem:[#allocation5 + $0x18] sm:$0xff]
        %v3799 = vld [vmem:[#allocation5 + $0x20] sm:$0xff]
        %v3800 = vld [vmem:[#allocation5 + $0x28] sm:$0xff]
        %v3801 = vld [vmem:[#allocation5 + $0x30] sm:$0xff]
        %v3802 = vld [vmem:[#allocation5 + $0x38] sm:$0xff]
        %v3803 = vld [vmem:[#allocation5 + $0x40] sm:$0xff]
        %v3804 = vld [vmem:[#allocation5 + $0x48] sm:$0xff]
        %v3805 = vld [vmem:[#allocation5 + $0x50] sm:$0xff]
        %v3806 = vld [vmem:[#allocation5 + $0x58] sm:$0xff]
        %v3807 = vld [vmem:[#allocation5 + $0x60] sm:$0xff]
        %v3808 = vld [vmem:[#allocation5 + $0x68] sm:$0xff]
        %v3809 = vld [vmem:[#allocation5 + $0x70] sm:$0xff]
        %v3810 = vld [vmem:[#allocation5 + $0x78] sm:$0xff]
        %v3811 = vld [vmem:[%s4] sm:$0x1]
        %v3813 = vperm.slane %v3811, 0
        %v3815 = vand.u32 %v3810, 4294901760
        %3816 = vmatpush.msra.mxu0 %v3815
        %v3817 = vand.u32 %v3809, 4294901760
        %3818 = vmatpush.msra.mxu0 %v3817
        %v3819 = vand.u32 %v3808, 4294901760
        %3820 = vmatpush.msra.mxu0 %v3819
        %v3821 = vand.u32 %v3807, 4294901760
        %3822 = vmatpush.msra.mxu0 %v3821
        %v3823 = vand.u32 %v3806, 4294901760
        %3824 = vmatpush.msra.mxu0 %v3823
        %v3825 = vand.u32 %v3805, 4294901760
        %3826 = vmatpush.msra.mxu0 %v3825
        %v3827 = vand.u32 %v3804, 4294901760
        %3828 = vmatpush.msra.mxu0 %v3827
        %v3829 = vand.u32 %v3803, 4294901760
        %3830 = vmatpush.msra.mxu0 %v3829
        %v3831 = vand.u32 %v3802, 4294901760
        %3832 = vmatpush.msra.mxu0 %v3831
        %v3833 = vand.u32 %v3801, 4294901760
        %3834 = vmatpush.msra.mxu0 %v3833
        %v3835 = vand.u32 %v3800, 4294901760
        %3836 = vmatpush.msra.mxu0 %v3835
        %v3837 = vand.u32 %v3799, 4294901760
        %3838 = vmatpush.msra.mxu0 %v3837
        %v3839 = vand.u32 %v3798, 4294901760
        %3840 = vmatpush.msra.mxu0 %v3839
        %v3841 = vand.u32 %v3797, 4294901760
        %3842 = vmatpush.msra.mxu0 %v3841
        %v3843 = vand.u32 %v3796, 4294901760
        %3844 = vmatpush.msra.mxu0 %v3843
        %v3845 = vand.u32 %v3795, 4294901760
        %3846 = vmatpush.msra.mxu0 %v3845
        %v3847 = vand.u32 %v3794, 4294901760
        %v3848 = vsub.f32 %v3794, %v3847
        %v3849 = vand.u32 %v3848, 4294901760
        %v3850 = vsub.f32 %v3848, %v3849
        %v3851 = vand.u32 %v3850, 4294901760
        %3852 = vmatmul.f32.gmra.mxu0 %v3851
        %v3853 = vpop.f32.mrf.mxu0
        %v3854 = vadd.f32 %v3813, %v3853
        %3855 = vdwg.mxu0
        %v3856 = vand.u32 %v3810, 4294901760
        %v3857 = vsub.f32 %v3810, %v3856
        %v3858 = vand.u32 %v3857, 4294901760
        %v3859 = vsub.f32 %v3857, %v3858
        %v3860 = vand.u32 %v3859, 4294901760
        %3861 = vmatpush.msra.mxu0 %v3860
        %v3862 = vand.u32 %v3809, 4294901760
        %v3863 = vsub.f32 %v3809, %v3862
        %v3864 = vand.u32 %v3863, 4294901760
        %v3865 = vsub.f32 %v3863, %v3864
        %v3866 = vand.u32 %v3865, 4294901760
        %3867 = vmatpush.msra.mxu0 %v3866
        %v3868 = vand.u32 %v3808, 4294901760
        %v3869 = vsub.f32 %v3808, %v3868
        %v3870 = vand.u32 %v3869, 4294901760
        %v3871 = vsub.f32 %v3869, %v3870
        %v3872 = vand.u32 %v3871, 4294901760
        %3873 = vmatpush.msra.mxu0 %v3872
        %v3874 = vand.u32 %v3807, 4294901760
        %v3875 = vsub.f32 %v3807, %v3874
        %v3876 = vand.u32 %v3875, 4294901760
        %v3877 = vsub.f32 %v3875, %v3876
        %v3878 = vand.u32 %v3877, 4294901760
        %3879 = vmatpush.msra.mxu0 %v3878
        %v3880 = vand.u32 %v3806, 4294901760
        %v3881 = vsub.f32 %v3806, %v3880
        %v3882 = vand.u32 %v3881, 4294901760
        %v3883 = vsub.f32 %v3881, %v3882
        %v3884 = vand.u32 %v3883, 4294901760
        %3885 = vmatpush.msra.mxu0 %v3884
        %v3886 = vand.u32 %v3805, 4294901760
        %v3887 = vsub.f32 %v3805, %v3886
        %v3888 = vand.u32 %v3887, 4294901760
        %v3889 = vsub.f32 %v3887, %v3888
        %v3890 = vand.u32 %v3889, 4294901760
        %3891 = vmatpush.msra.mxu0 %v3890
        %v3892 = vand.u32 %v3804, 4294901760
        %v3893 = vsub.f32 %v3804, %v3892
        %v3894 = vand.u32 %v3893, 4294901760
        %v3895 = vsub.f32 %v3893, %v3894
        %v3896 = vand.u32 %v3895, 4294901760
        %3897 = vmatpush.msra.mxu0 %v3896
        %v3898 = vand.u32 %v3803, 4294901760
        %v3899 = vsub.f32 %v3803, %v3898
        %v3900 = vand.u32 %v3899, 4294901760
        %v3901 = vsub.f32 %v3899, %v3900
        %v3902 = vand.u32 %v3901, 4294901760
        %3903 = vmatpush.msra.mxu0 %v3902
        %v3904 = vand.u32 %v3802, 4294901760
        %v3905 = vsub.f32 %v3802, %v3904
        %v3906 = vand.u32 %v3905, 4294901760
        %v3907 = vsub.f32 %v3905, %v3906
        %v3908 = vand.u32 %v3907, 4294901760
        %3909 = vmatpush.msra.mxu0 %v3908
        %v3910 = vand.u32 %v3801, 4294901760
        %v3911 = vsub.f32 %v3801, %v3910
        %v3912 = vand.u32 %v3911, 4294901760
        %v3913 = vsub.f32 %v3911, %v3912
        %v3914 = vand.u32 %v3913, 4294901760
        %3915 = vmatpush.msra.mxu0 %v3914
        %v3916 = vand.u32 %v3800, 4294901760
        %v3917 = vsub.f32 %v3800, %v3916
        %v3918 = vand.u32 %v3917, 4294901760
        %v3919 = vsub.f32 %v3917, %v3918
        %v3920 = vand.u32 %v3919, 4294901760
        %3921 = vmatpush.msra.mxu0 %v3920
        %v3922 = vand.u32 %v3799, 4294901760
        %v3923 = vsub.f32 %v3799, %v3922
        %v3924 = vand.u32 %v3923, 4294901760
        %v3925 = vsub.f32 %v3923, %v3924
        %v3926 = vand.u32 %v3925, 4294901760
        %3927 = vmatpush.msra.mxu0 %v3926
        %v3928 = vand.u32 %v3798, 4294901760
        %v3929 = vsub.f32 %v3798, %v3928
        %v3930 = vand.u32 %v3929, 4294901760
        %v3931 = vsub.f32 %v3929, %v3930
        %v3932 = vand.u32 %v3931, 4294901760
        %3933 = vmatpush.msra.mxu0 %v3932
        %v3934 = vand.u32 %v3797, 4294901760
        %v3935 = vsub.f32 %v3797, %v3934
        %v3936 = vand.u32 %v3935, 4294901760
        %v3937 = vsub.f32 %v3935, %v3936
        %v3938 = vand.u32 %v3937, 4294901760
        %3939 = vmatpush.msra.mxu0 %v3938
        %v3940 = vand.u32 %v3796, 4294901760
        %v3941 = vsub.f32 %v3796, %v3940
        %v3942 = vand.u32 %v3941, 4294901760
        %v3943 = vsub.f32 %v3941, %v3942
        %v3944 = vand.u32 %v3943, 4294901760
        %3945 = vmatpush.msra.mxu0 %v3944
        %v3946 = vand.u32 %v3795, 4294901760
        %v3947 = vsub.f32 %v3795, %v3946
        %v3948 = vand.u32 %v3947, 4294901760
        %v3949 = vsub.f32 %v3947, %v3948
        %v3950 = vand.u32 %v3949, 4294901760
        %3951 = vmatpush.msra.mxu0 %v3950
        %v3952 = vand.u32 %v3794, 4294901760
        %3953 = vmatmul.f32.gmra.mxu0 %v3952
        %v3954 = vpop.f32.mrf.mxu0
        %v3955 = vadd.f32 %v3854, %v3954
        %3956 = vdwg.mxu0
        %v3957 = vand.u32 %v3810, 4294901760
        %v3958 = vsub.f32 %v3810, %v3957
        %3959 = vmatpush.msra.mxu0 %v3958
        %v3960 = vand.u32 %v3809, 4294901760
        %v3961 = vsub.f32 %v3809, %v3960
        %3962 = vmatpush.msra.mxu0 %v3961
        %v3963 = vand.u32 %v3808, 4294901760
        %v3964 = vsub.f32 %v3808, %v3963
        %3965 = vmatpush.msra.mxu0 %v3964
        %v3966 = vand.u32 %v3807, 4294901760
        %v3967 = vsub.f32 %v3807, %v3966
        %3968 = vmatpush.msra.mxu0 %v3967
        %v3969 = vand.u32 %v3806, 4294901760
        %v3970 = vsub.f32 %v3806, %v3969
        %3971 = vmatpush.msra.mxu0 %v3970
        %v3972 = vand.u32 %v3805, 4294901760
        %v3973 = vsub.f32 %v3805, %v3972
        %3974 = vmatpush.msra.mxu0 %v3973
        %v3975 = vand.u32 %v3804, 4294901760
        %v3976 = vsub.f32 %v3804, %v3975
        %3977 = vmatpush.msra.mxu0 %v3976
        %v3978 = vand.u32 %v3803, 4294901760
        %v3979 = vsub.f32 %v3803, %v3978
        %3980 = vmatpush.msra.mxu0 %v3979
        %v3981 = vand.u32 %v3802, 4294901760
        %v3982 = vsub.f32 %v3802, %v3981
        %3983 = vmatpush.msra.mxu0 %v3982
        %v3984 = vand.u32 %v3801, 4294901760
        %v3985 = vsub.f32 %v3801, %v3984
        %3986 = vmatpush.msra.mxu0 %v3985
        %v3987 = vand.u32 %v3800, 4294901760
        %v3988 = vsub.f32 %v3800, %v3987
        %3989 = vmatpush.msra.mxu0 %v3988
        %v3990 = vand.u32 %v3799, 4294901760
        %v3991 = vsub.f32 %v3799, %v3990
        %3992 = vmatpush.msra.mxu0 %v3991
        %v3993 = vand.u32 %v3798, 4294901760
        %v3994 = vsub.f32 %v3798, %v3993
        %3995 = vmatpush.msra.mxu0 %v3994
        %v3996 = vand.u32 %v3797, 4294901760
        %v3997 = vsub.f32 %v3797, %v3996
        %3998 = vmatpush.msra.mxu0 %v3997
        %v3999 = vand.u32 %v3796, 4294901760
        %v4000 = vsub.f32 %v3796, %v3999
        %4001 = vmatpush.msra.mxu0 %v4000
        %v4002 = vand.u32 %v3795, 4294901760
        %v4003 = vsub.f32 %v3795, %v4002
        %4004 = vmatpush.msra.mxu0 %v4003
        %v4005 = vand.u32 %v3794, 4294901760
        %v4006 = vsub.f32 %v3794, %v4005
        %4007 = vmatmul.f32.gmra.mxu0 %v4006
        %v4008 = vpop.f32.mrf.mxu0
        %v4009 = vadd.f32 %v3955, %v4008
        %4010 = vdwg.mxu0
        %v4011 = vand.u32 %v3810, 4294901760
        %4012 = vmatpush.msra.mxu0 %v4011
        %v4013 = vand.u32 %v3809, 4294901760
        %4014 = vmatpush.msra.mxu0 %v4013
        %v4015 = vand.u32 %v3808, 4294901760
        %4016 = vmatpush.msra.mxu0 %v4015
        %v4017 = vand.u32 %v3807, 4294901760
        %4018 = vmatpush.msra.mxu0 %v4017
        %v4019 = vand.u32 %v3806, 4294901760
        %4020 = vmatpush.msra.mxu0 %v4019
        %v4021 = vand.u32 %v3805, 4294901760
        %4022 = vmatpush.msra.mxu0 %v4021
        %v4023 = vand.u32 %v3804, 4294901760
        %4024 = vmatpush.msra.mxu0 %v4023
        %v4025 = vand.u32 %v3803, 4294901760
        %4026 = vmatpush.msra.mxu0 %v4025
        %v4027 = vand.u32 %v3802, 4294901760
        %4028 = vmatpush.msra.mxu0 %v4027
        %v4029 = vand.u32 %v3801, 4294901760
        %4030 = vmatpush.msra.mxu0 %v4029
        %v4031 = vand.u32 %v3800, 4294901760
        %4032 = vmatpush.msra.mxu0 %v4031
        %v4033 = vand.u32 %v3799, 4294901760
        %4034 = vmatpush.msra.mxu0 %v4033
        %v4035 = vand.u32 %v3798, 4294901760
        %4036 = vmatpush.msra.mxu0 %v4035
        %v4037 = vand.u32 %v3797, 4294901760
        %4038 = vmatpush.msra.mxu0 %v4037
        %v4039 = vand.u32 %v3796, 4294901760
        %4040 = vmatpush.msra.mxu0 %v4039
        %v4041 = vand.u32 %v3795, 4294901760
        %4042 = vmatpush.msra.mxu0 %v4041
        %v4043 = vand.u32 %v3794, 4294901760
        %v4044 = vsub.f32 %v3794, %v4043
        %v4045 = vand.u32 %v4044, 4294901760
        %4046 = vmatmul.f32.gmra.mxu0 %v4045
        %v4047 = vpop.f32.mrf.mxu0
        %v4048 = vadd.f32 %v4009, %v4047
        %4049 = vdwg.mxu0
        %v4050 = vand.u32 %v3810, 4294901760
        %v4051 = vsub.f32 %v3810, %v4050
        %v4052 = vand.u32 %v4051, 4294901760
        %4053 = vmatpush.msra.mxu0 %v4052
        %v4054 = vand.u32 %v3809, 4294901760
        %v4055 = vsub.f32 %v3809, %v4054
        %v4056 = vand.u32 %v4055, 4294901760
        %4057 = vmatpush.msra.mxu0 %v4056
        %v4058 = vand.u32 %v3808, 4294901760
        %v4059 = vsub.f32 %v3808, %v4058
        %v4060 = vand.u32 %v4059, 4294901760
        %4061 = vmatpush.msra.mxu0 %v4060
        %v4062 = vand.u32 %v3807, 4294901760
        %v4063 = vsub.f32 %v3807, %v4062
        %v4064 = vand.u32 %v4063, 4294901760
        %4065 = vmatpush.msra.mxu0 %v4064
        %v4066 = vand.u32 %v3806, 4294901760
        %v4067 = vsub.f32 %v3806, %v4066
        %v4068 = vand.u32 %v4067, 4294901760
        %4069 = vmatpush.msra.mxu0 %v4068
        %v4070 = vand.u32 %v3805, 4294901760
        %v4071 = vsub.f32 %v3805, %v4070
        %v4072 = vand.u32 %v4071, 4294901760
        %4073 = vmatpush.msra.mxu0 %v4072
        %v4074 = vand.u32 %v3804, 4294901760
        %v4075 = vsub.f32 %v3804, %v4074
        %v4076 = vand.u32 %v4075, 4294901760
        %4077 = vmatpush.msra.mxu0 %v4076
        %v4078 = vand.u32 %v3803, 4294901760
        %v4079 = vsub.f32 %v3803, %v4078
        %v4080 = vand.u32 %v4079, 4294901760
        %4081 = vmatpush.msra.mxu0 %v4080
        %v4082 = vand.u32 %v3802, 4294901760
        %v4083 = vsub.f32 %v3802, %v4082
        %v4084 = vand.u32 %v4083, 4294901760
        %4085 = vmatpush.msra.mxu0 %v4084
        %v4086 = vand.u32 %v3801, 4294901760
        %v4087 = vsub.f32 %v3801, %v4086
        %v4088 = vand.u32 %v4087, 4294901760
        %4089 = vmatpush.msra.mxu0 %v4088
        %v4090 = vand.u32 %v3800, 4294901760
        %v4091 = vsub.f32 %v3800, %v4090
        %v4092 = vand.u32 %v4091, 4294901760
        %4093 = vmatpush.msra.mxu0 %v4092
        %v4094 = vand.u32 %v3799, 4294901760
        %v4095 = vsub.f32 %v3799, %v4094
        %v4096 = vand.u32 %v4095, 4294901760
        %4097 = vmatpush.msra.mxu0 %v4096
        %v4098 = vand.u32 %v3798, 4294901760
        %v4099 = vsub.f32 %v3798, %v4098
        %v4100 = vand.u32 %v4099, 4294901760
        %4101 = vmatpush.msra.mxu0 %v4100
        %v4102 = vand.u32 %v3797, 4294901760
        %v4103 = vsub.f32 %v3797, %v4102
        %v4104 = vand.u32 %v4103, 4294901760
        %4105 = vmatpush.msra.mxu0 %v4104
        %v4106 = vand.u32 %v3796, 4294901760
        %v4107 = vsub.f32 %v3796, %v4106
        %v4108 = vand.u32 %v4107, 4294901760
        %4109 = vmatpush.msra.mxu0 %v4108
        %v4110 = vand.u32 %v3795, 4294901760
        %v4111 = vsub.f32 %v3795, %v4110
        %v4112 = vand.u32 %v4111, 4294901760
        %4113 = vmatpush.msra.mxu0 %v4112
        %v4114 = vand.u32 %v3794, 4294901760
        %4115 = vmatmul.f32.gmra.mxu0 %v4114
        %v4116 = vpop.f32.mrf.mxu0
        %v4117 = vadd.f32 %v4048, %v4116
        %4118 = vdwg.mxu0
        %v4119 = vand.u32 %v3810, 4294901760
        %4120 = vmatpush.msra.mxu0 %v4119
        %v4121 = vand.u32 %v3809, 4294901760
        %4122 = vmatpush.msra.mxu0 %v4121
        %v4123 = vand.u32 %v3808, 4294901760
        %4124 = vmatpush.msra.mxu0 %v4123
        %v4125 = vand.u32 %v3807, 4294901760
        %4126 = vmatpush.msra.mxu0 %v4125
        %v4127 = vand.u32 %v3806, 4294901760
        %4128 = vmatpush.msra.mxu0 %v4127
        %v4129 = vand.u32 %v3805, 4294901760
        %4130 = vmatpush.msra.mxu0 %v4129
        %v4131 = vand.u32 %v3804, 4294901760
        %4132 = vmatpush.msra.mxu0 %v4131
        %v4133 = vand.u32 %v3803, 4294901760
        %4134 = vmatpush.msra.mxu0 %v4133
        %v4135 = vand.u32 %v3802, 4294901760
        %4136 = vmatpush.msra.mxu0 %v4135
        %v4137 = vand.u32 %v3801, 4294901760
        %4138 = vmatpush.msra.mxu0 %v4137
        %v4139 = vand.u32 %v3800, 4294901760
        %4140 = vmatpush.msra.mxu0 %v4139
        %v4141 = vand.u32 %v3799, 4294901760
        %4142 = vmatpush.msra.mxu0 %v4141
        %v4143 = vand.u32 %v3798, 4294901760
        %4144 = vmatpush.msra.mxu0 %v4143
        %v4145 = vand.u32 %v3797, 4294901760
        %4146 = vmatpush.msra.mxu0 %v4145
        %v4147 = vand.u32 %v3796, 4294901760
        %4148 = vmatpush.msra.mxu0 %v4147
        %v4149 = vand.u32 %v3795, 4294901760
        %4150 = vmatpush.msra.mxu0 %v4149
        %v4151 = vand.u32 %v3794, 4294901760
        %4152 = vmatmul.f32.gmra.mxu0 %v4151
        %v4153 = vpop.f32.mrf.mxu0
        %v4154 = vadd.f32 %v4117, %v4153
        %4155 = vdwg.mxu0
        %v4156 = vxor.u32 %v4154, 2147483648
        %v4157 = vmul.f32 %v4156, 1.442695
        %v4158 = vpow.pop %v4157
        %v4159 = vadd.f32 %v4158, 1.0
        %v4160 = vrcp.pop %v4159
        %v4161 = vmul.f32 %v4159, %v4160
        %v4162 = vsub.f32 1.0, %v4161
        %v4163 = vmul.f32 %v4160, %v4162
        %v4164 = vadd.f32 %v4160, %v4163
        %vm4165 = vweird.f32 %v4159
        %vm4166 = vweird.f32 %v4160
        %vm4167 = vmor %vm4165, %vm4166
        %v4168 = vsel %vm4167, %v4160, %v4164
        %v4169 = vand.u32 2147483647, %v4159
        %vm4170 = vcmp.eq.f32.partialorder %v4169, 8.507059e+37
        %v4171 = vand.u32 %v4159, 2147483648
        %v4172 = vor.u32 1.1754944e-38, %v4171
        %v4173 = vsel %vm4170, %v4172, %v4168
        %v4174 = vmul.f32 1.0, %v4173
        %v4175 = vld [vmem:[%s270] sm:$0xff]
        %v4176 = vadd.f32 %v4174, 1e-10
        %v4177 = vlog2.pop %v4176
        %v4178 = vmul.f32 %v4177, 0.6931472
        %v4179 = vmul.f32 %v4178, %v4175
        %v4180 = vsub.f32 1.0, %v4174
        %v4181 = vadd.f32 %v4180, 1e-10
        %v4182 = vlog2.pop %v4181
        %v4183 = vmul.f32 %v4182, 0.6931472
        %v4184 = vsub.f32 1.0, %v4175
        %v4185 = vmul.f32 %v4183, %v4184
        %v4186 = vadd.f32 %v4179, %v4185
        %vm4187 = vcmp.lt.s32.totalorder %v275, 2
        %v4188 = vsel %vm4187, %v4174, 0.0
        %vm4189 = vcmp.eq.s32.totalorder %v275, 2
        %4191 = vset.pattern.permute.xlu0 0
        %4192 = vperm.xlu0 %4191, %v4186
        %v4193 = vpop.permute.xlu0 %4192
        %v4195 = vsel %vm4189, %v4193, %v4188
        %4196 = vst [vmem:[%s262] sm:$0xff] %v4195
        %s4197 = sand.u32 %s144, 1
        %s4198 = scalar_lea.sflag [#allocation4], %s4197
        %s4199 = sand.u32 %s144, 1
        %s4200 = smul.addr %s4199, 8
        %s4201 = scalar_lea.vmem [#allocation7], %s4200
        // Predicated region
        $region49: #{tpu_custom_call.1} parent=39 // pred_check
          %p4202 = pneg %p154
        $region50: #{tpu_custom_call.1} parent=39 // pred_check_branch
          %4204 = sbr.rel (%p4202) target = $region52
        $region51: #{tpu_custom_call.1} parent=39 // pred_region
          %4206 = vsyncadd %s4198, 0
          %s4207 = smul.addr %s21, 8
          %s4208 = scalar_lea.hbm %s5, %s4207
          %s4210 = sshll.u32 %s4201, 4
          %s4211 = int_to_ptr.vmem [resolvable:$true] %s4210
          %s4212 = sshll.u32 %s4208, 4
          %s4213 = int_to_ptr.hbm [resolvable:$true] %s4212
          %4215 = dma.vmem_to_hbm [thread:$0]  %s4211, 128, %s4213, %s4198
        $region52: #{tpu_custom_call.1} parent=39 // pred_fallthru
          _
      $region40: #{tpu_custom_call.1} parent=5 // pred_fallthru
        _
      %p4216 = scmp.le.s32.totalorder 2, %s16
      // Predicated region
      $region53: #{tpu_custom_call.1} parent=5 // pred_check
        %p4217 = pneg %p4216
      $region54: #{tpu_custom_call.1} parent=5 // pred_check_branch
        %4219 = sbr.rel (%p4217) target = $region56
      $region55: #{tpu_custom_call.1} parent=5 // pred_region
        %s4220 = ssub.s32 %s16, 2
        // Predicated region
        $region57: #{tpu_custom_call.1} parent=55 // pred_check
          %p4221 = pneg %p160
        $region58: #{tpu_custom_call.1} parent=55 // pred_check_branch
          %4223 = sbr.rel (%p4221) target = $region60
        $region59: #{tpu_custom_call.1} parent=55 // pred_region
          %s4224 = sand.u32 %s145, 1
          %s4225 = scalar_lea.sflag [#allocation4], %s4224
          %s4226 = sand.u32 %s145, 1
          %s4227 = smul.addr %s4226, 8
          %s4228 = scalar_lea.vmem [#allocation7], %s4227
          %4230 = dma.done %s4225, 128
        $region60: #{tpu_custom_call.1} parent=55 // pred_fallthru
          _
      $region56: #{tpu_custom_call.1} parent=5 // pred_fallthru
        _
    $region6: #{tpu_custom_call.1} parent=1 // loop_footer
      %s20 = sadd.s32 1, %s16
    $region7: #{tpu_custom_call.1} parent=1 // loop_footer_branch
      %15 = sbr.rel target = $region3
    $region8: #{tpu_custom_call.1} parent=1 // loop_exit
      _
    %4231 = vsyncpa [#allocation3], 1
    %s4232 = scalar_lea.sflag [#allocation3], 1
    %4233 = vsyncpa %s4232, 1
    %4234 = vsyncpa [#allocation6], 1
    %4235 = vsyncpa [#allocation4], 1
    %s4236 = scalar_lea.sflag [#allocation4], 1
    %4237 = vsyncpa %s4236, 1

</llo_original>
